<compile_context>
chip_gen: v5e
topology: v5e:2x2
jax: 0.10.0
libtpu: 0.0.40
codegen_flags: <defaults>
</compile_context>

<pallas_src>
import functools

import numpy as np
import jax
import jax.numpy as jnp
from jax.experimental import pallas as pl
from jax.experimental.pallas import tpu as pltpu

iter4Net = 5
# `etas` is an external global list in the PyTorch source; synthetic values here.
etas = [1.1, 0.9, 1.2, 0.8, 1.0]

_FUSE_MIN_W = 8  # fused shifted-window conv path needs W % 8 == 0 (f32 sublane tiling)


def _parallel():
    return pltpu.CompilerParams(dimension_semantics=("parallel",))


# ----------------------------- Pallas kernels ------------------------------

def _conv3x3_fused_kernel(xp_ref, w_ref, s_ref, b_ref, o_ref, *, H, W, Cin):
    """Fused 3x3 conv + folded BN + ReLU: 9 shifted-window bf16 matmuls, f32 accum."""
    Cout = w_ref.shape[-1]
    xp = xp_ref[0].astype(jnp.float32)                  # (H+2, W+2, Cin) VMEM staging
    acc = jnp.zeros((H * W, Cout), jnp.float32)
    for dy in range(3):
        for dx in range(3):
            win = xp[dy:dy + H, dx:dx + W, :].reshape(H * W, Cin)
            acc = acc + jnp.dot(win.astype(jnp.bfloat16), w_ref[dy * 3 + dx],
                                preferred_element_type=jnp.float32)
    acc = jnp.maximum(acc * s_ref[...] + b_ref[...], 0.0)
    o_ref[0] = acc.astype(o_ref.dtype)


def _conv3x3_head_kernel(xp_ref, w_ref, s_ref, b_ref, wl_ref, cur_ref, sb_ref, o_ref,
                         *, H, W, Cin):
    """conv3x3+BN+ReLU fused with conv_last(1x1, C->1) and `cur + stepsize*dx`."""
    Cout = w_ref.shape[-1]
    xp = xp_ref[0].astype(jnp.float32)
    acc = jnp.zeros((H * W, Cout), jnp.float32)
    for dy in range(3):
        for dx in range(3):
            win = xp[dy:dy + H, dx:dx + W, :].reshape(H * W, Cin)
            acc = acc + jnp.dot(win.astype(jnp.bfloat16), w_ref[dy * 3 + dx],
                                preferred_element_type=jnp.float32)
    acc = jnp.maximum(acc * s_ref[...] + b_ref[...], 0.0)      # (H*W, Cout) f32
    a3 = acc.reshape(H, W, Cout)
    dx_hw = jnp.sum(a3 * wl_ref[...], axis=-1)                 # conv1x1 to 1 channel
    o_ref[0] = cur_ref[0] + sb_ref[1] * (dx_hw + sb_ref[0])    # residual update


def _mm_affine_kernel(x_ref, w_ref, s_ref, b_ref, o_ref, *, relu):
    """(1, M, K) @ (K, C) * scale + shift [+ReLU] -- im2col fallback for tiny maps."""
    acc = jnp.dot(x_ref[0], w_ref[...], preferred_element_type=jnp.float32)
    acc = acc * s_ref[...] + b_ref[...]
    if relu:
        acc = jnp.maximum(acc, 0.0)
    o_ref[0] = acc.astype(o_ref.dtype)


def _maxpool_kernel(x_ref, o_ref, *, H, w):
    """Input block (1, H, w, 2, C); 2x2 max-pool computed fully in VMEM."""
    v = x_ref[0].astype(jnp.float32)               # (H, w, 2, C)
    m = jnp.max(v, axis=2)                         # reduce the W-pair (sublane axis)
    m = m.reshape(H // 2, 2, w, m.shape[-1])       # leading-dim split
    o_ref[0] = jnp.max(m, axis=1).astype(o_ref.dtype)


def _upconv_kernel(x_ref, w_ref, b_ref, o_ref, *, H, W, interleave):
    """ConvTranspose2d(k=2, s=2) as two (per output-row-tap ky) matmuls."""
    x = x_ref[0]                                   # (H*W, Cin) bf16
    for ky in range(2):
        acc = jnp.dot(x, w_ref[ky], preferred_element_type=jnp.float32) + b_ref[...]
        if interleave:
            # write the (H, 2, W, 2*Cout) interleaved layout directly
            o_ref[0, :, ky, :, :] = acc.reshape(H, W, acc.shape[-1]).astype(o_ref.dtype)
        else:
            o_ref[0, ky] = acc.astype(o_ref.dtype)


# ------------------------------ layer wrappers ------------------------------

def _im2col_3x3(x):
    """(N, H, W, C) -> (N, H*W, 9*C), pad=1, tap order (dy, dx, ci).  Tiny maps only."""
    N, H, W, C = x.shape
    xp = jnp.pad(x, ((0, 0), (1, 1), (1, 1), (0, 0)))
    cols = [xp[:, dy:dy + H, dx:dx + W, :] for dy in range(3) for dx in range(3)]
    return jnp.concatenate(cols, axis=-1).reshape(N, H * W, 9 * C)


def conv3x3_bn_relu(x, p):
    """x: (N, H, W, Cin) bf16; p: dict(w=(9,Cin,Cout) bf16, scale/shift=(1,Cout) f32)."""
    N, H, W, Cin = x.shape
    Cout = p["w"].shape[-1]
    if W >= _FUSE_MIN_W and W % 8 == 0:
        xp = jnp.pad(x, ((0, 0), (1, 1), (1, 1), (0, 0)))
        out = pl.pallas_call(
            functools.partial(_conv3x3_fused_kernel, H=H, W=W, Cin=Cin),
            out_shape=jax.ShapeDtypeStruct((N, H * W, Cout), jnp.bfloat16),
            grid=(N,),
            in_specs=[
                pl.BlockSpec((1, H + 2, W + 2, Cin), lambda n: (n, 0, 0, 0)),
                pl.BlockSpec((9, Cin, Cout), lambda n: (0, 0, 0)),
                pl.BlockSpec((1, Cout), lambda n: (0, 0)),
                pl.BlockSpec((1, Cout), lambda n: (0, 0)),
            ],
            out_specs=pl.BlockSpec((1, H * W, Cout), lambda n: (n, 0, 0)),
            compiler_params=_parallel(),
        )(xp, p["w"], p["scale"], p["shift"])
    else:
        # tiny spatial maps (<= 4x4): patch tensor is a few KB, one fused matmul.
        patches = _im2col_3x3(x)
        wf = p["w"].reshape(9 * Cin, Cout)
        out = pl.pallas_call(
            functools.partial(_mm_affine_kernel, relu=True),
            out_shape=jax.ShapeDtypeStruct((N, H * W, Cout), jnp.bfloat16),
            grid=(N,),
            in_specs=[
                pl.BlockSpec((1, H * W, 9 * Cin), lambda n: (n, 0, 0)),
                pl.BlockSpec((9 * Cin, Cout), lambda n: (0, 0)),
                pl.BlockSpec((1, Cout), lambda n: (0, 0)),
                pl.BlockSpec((1, Cout), lambda n: (0, 0)),
            ],
            out_specs=pl.BlockSpec((1, H * W, Cout), lambda n: (n, 0, 0)),
            compiler_params=_parallel(),
        )(patches, wf, p["scale"], p["shift"])
    return out.reshape(N, H, W, Cout)


def conv3x3_bn_relu_head(x, p, wl, sb, cur_hw):
    """Last conv of the net fused with conv_last(1x1) + residual update.

    x: (N,H,W,Cin) bf16; wl: (1, Cout) f32 conv_last weight; sb: (2,) f32
    [conv_last bias, stepsize] passed through SMEM; cur_hw: (N,H,W) f32.
    Returns (N, H, W) f32 = cur + stepsize * dx.
    """
    N, H, W, Cin = x.shape
    Cout = p["w"].shape[-1]
    assert W % 8 == 0
    xp = jnp.pad(x, ((0, 0), (1, 1), (1, 1), (0, 0)))
    return pl.pallas_call(
        functools.partial(_conv3x3_head_kernel, H=H, W=W, Cin=Cin),
        out_shape=jax.ShapeDtypeStruct((N, H, W), jnp.float32),
        grid=(N,),
        in_specs=[
            pl.BlockSpec((1, H + 2, W + 2, Cin), lambda n: (n, 0, 0, 0)),
            pl.BlockSpec((9, Cin, Cout), lambda n: (0, 0, 0)),
            pl.BlockSpec((1, Cout), lambda n: (0, 0)),
            pl.BlockSpec((1, Cout), lambda n: (0, 0)),
            pl.BlockSpec((1, Cout), lambda n: (0, 0)),
            pl.BlockSpec((1, H, W), lambda n: (n, 0, 0)),
            pl.BlockSpec(memory_space=pltpu.MemorySpace.SMEM),
        ],
        out_specs=pl.BlockSpec((1, H, W), lambda n: (n, 0, 0)),
        compiler_params=_parallel(),
    )(xp, p["w"], p["scale"], p["shift"], wl, cur_hw, sb)


def double_conv_apply(p, x):
    return conv3x3_bn_relu(conv3x3_bn_relu(x, p["c1"]), p["c2"])


def maxpool2x2(x):
    """x: (N, H, W, C) NHWC, H and W even -> (N, H//2, W//2, C)."""
    N, H, W, C = x.shape
    h, w = H // 2, W // 2
    xr = x.reshape(N, H, w, 2, C)          # free reshape (splits W)
    return pl.pallas_call(
        functools.partial(_maxpool_kernel, H=H, w=w),
        out_shape=jax.ShapeDtypeStruct((N, h, w, C), x.dtype),
        grid=(N,),
        in_specs=[pl.BlockSpec((1, H, w, 2, C), lambda n: (n, 0, 0, 0, 0))],
        out_specs=pl.BlockSpec((1, h, w, C), lambda n: (n, 0, 0, 0)),
        compiler_params=_parallel(),
    )(xr)


def conv_transpose2x2(x, p):
    """ConvTranspose2d(k=2, s=2).  p: dict(w=(2, Cin, 2*Cout) bf16, b=(1, 2*Cout) f32)."""
    N, H, W, Cin = x.shape
    Cout2 = p["w"].shape[-1]
    Cout = Cout2 // 2
    x2 = x.reshape(N, H * W, Cin)
    interleave = W >= 8 and W % 8 == 0
    if interleave:
        out_shape = jax.ShapeDtypeStruct((N, H, 2, W, Cout2), jnp.bfloat16)
        out_spec = pl.BlockSpec((1, H, 2, W, Cout2), lambda n: (n, 0, 0, 0, 0))
    else:
        out_shape = jax.ShapeDtypeStruct((N, 2, H * W, Cout2), jnp.bfloat16)
        out_spec = pl.BlockSpec((1, 2, H * W, Cout2), lambda n: (n, 0, 0, 0))
    out = pl.pallas_call(
        functools.partial(_upconv_kernel, H=H, W=W, interleave=interleave),
        out_shape=out_shape,
        grid=(N,),
        in_specs=[
            pl.BlockSpec((1, H * W, Cin), lambda n: (n, 0, 0)),
            pl.BlockSpec((2, Cin, Cout2), lambda n: (0, 0, 0)),
            pl.BlockSpec((1, Cout2), lambda n: (0, 0)),
        ],
        out_specs=out_spec,
        compiler_params=_parallel(),
    )(x2, p["w"], p["b"])
    if interleave:
        # (N, H, 2, W, 2, Cout) row-major == (N, 2H, 2W, Cout): free reshape only.
        return out.reshape(N, 2 * H, 2 * W, Cout)
    # tiny maps: scatter the (ky, kx) taps with an XLA transpose (negligible here).
    out = out.reshape(N, 2, H, W, 2, Cout).transpose(0, 2, 1, 3, 4, 5)
    return out.reshape(N, 2 * H, 2 * W, Cout)


# ------------------------------- parameters --------------------------------

def _init_conv_bn(key, cin, cout):
    kw, kb, kg, ke = jax.random.split(key, 4)
    w = jax.random.normal(kw, (3, 3, cin, cout), jnp.float32) / np.sqrt(9 * cin)
    b = 0.1 * jax.random.normal(kb, (cout,), jnp.float32)
    gamma = 1.0 + 0.1 * jax.random.normal(kg, (cout,), jnp.float32)
    beta = 0.1 * jax.random.normal(ke, (cout,), jnp.float32)
    # fold BN (running_mean=0, running_var=1, eps=1e-5) and conv bias (eval mode)
    scale = gamma / jnp.sqrt(1.0 + 1e-5)
    shift = b * scale + beta
    return dict(w=w.reshape(9, cin, cout).astype(jnp.bfloat16),
                scale=scale.reshape(1, cout).astype(jnp.float32),
                shift=shift.reshape(1, cout).astype(jnp.float32))


def _init_double_conv(key, cin, cout):
    k1, k2 = jax.random.split(key)
    return dict(c1=_init_conv_bn(k1, cin, cout), c2=_init_conv_bn(k2, cout, cout))


def _init_up(key, cin, cout):
    kw, kb = jax.random.split(key)
    w = jax.random.normal(kw, (cin, 2, 2, cout), jnp.float32) / np.sqrt(4 * cin)
    b = 0.1 * jax.random.normal(kb, (cout,), jnp.float32)
    # kernel-ready layout: w2[ky, ci, kx*Cout + co] = w[ci, ky, kx, co]
    w2 = jnp.transpose(w, (1, 0, 2, 3)).reshape(2, cin, 2 * cout).astype(jnp.bfloat16)
    b2 = jnp.tile(b, 2).reshape(1, 2 * cout).astype(jnp.float32)
    return dict(w=w2, b=b2)


def init_iteration_params(key):
    ks = jax.random.split(key, 18)
    # dconv_down2/3/4 exist in __init__ but are never used in forward -> omitted.
    return {
        "dconv_down1":      _init_double_conv(ks[0], 3, 32),
        "convMulti2":       _init_double_conv(ks[1], 3, 32),
        "convMulti3":       _init_double_conv(ks[2], 3, 32),
        "convMulti4":       _init_double_conv(ks[3], 3, 32),
        "dconv_down2Multi": _init_double_conv(ks[4], 32 + 32, 64),
        "dconv_down3Multi": _init_double_conv(ks[5], 64 + 32, 128),
        "dconv_down4Multi": _init_double_conv(ks[6], 128 + 32, 256),
        "dconv_down5":      _init_double_conv(ks[7], 256, 512),
        "dconv_up4":        _init_double_conv(ks[8], 512, 256),
        "dconv_up3":        _init_double_conv(ks[9], 256, 128),
        "dconv_up2":        _init_double_conv(ks[10], 128, 64),
        "dconv_up1":        _init_double_conv(ks[11], 64, 32),
        "xUp4": _init_up(ks[12], 512, 256),
        "xUp3": _init_up(ks[13], 256, 128),
        "xUp2": _init_up(ks[14], 128, 64),
        "xUp1": _init_up(ks[15], 64, 32),
        "conv_last_w": jax.random.normal(ks[16], (1, 32), jnp.float32) / np.sqrt(32.0),
        "conv_last_b": 0.1 * jax.random.normal(ks[17], (), jnp.float32),
        # PyTorch init is zeros; small nonzero so the U-Net output is visible.
        "stepsize": jnp.float32(0.05),
        "gradsize": jnp.float32(1.0),  # unused in forward (kept for parity)
    }


# --------------------------------- forward ----------------------------------

def _cat3_nhwc(a, b, c):
    """Three NCHW (N,1,H,W) maps -> one NHWC (N,H,W,3) bf16 tensor (one transpose)."""
    x = jnp.concatenate([a, b, c], axis=1)
    return jnp.transpose(x, (0, 2, 3, 1)).astype(jnp.bfloat16)


def iteration_forward(params, op, op_adj, fbp, cur, curs, grads, fbps, y, it):
    """Mirrors Iteration.forward.  Image tensors are NCHW float32; `it` is static."""
    normal = op(cur) - y
    grad = op_adj(normal)
    fbpy = fbp(normal)

    N, _, H, W = cur.shape
    dx_in = _cat3_nhwc(cur, etas[it] * grad, fbpy)
    cur_hw = cur.reshape(N, H, W).astype(jnp.float32)
    sb = jnp.stack([params["conv_last_b"], params["stepsize"]]).astype(jnp.float32)

    if it < iter4Net - 1:
        # residual block: dconv_down1 then fused conv_last + residual update
        h1 = conv3x3_bn_relu(dx_in, params["dconv_down1"]["c1"])
        out_hw = conv3x3_bn_relu_head(h1, params["dconv_down1"]["c2"],
                                      params["conv_last_w"], sb, cur_hw)
    else:
        # multi-scale grad U-Net
        conv1 = double_conv_apply(params["dconv_down1"], dx_in)
        x = maxpool2x2(conv1)

        old = _cat3_nhwc(curs[it - 1], etas[it - 1] * grads[it - 1], fbps[it - 1])
        dxM = double_conv_apply(params["convMulti2"], old)
        conv2 = double_conv_apply(params["dconv_down2Multi"],
                                  jnp.concatenate([x, dxM], axis=-1))
        x = maxpool2x2(conv2)

        old = _cat3_nhwc(curs[it - 2], etas[it - 2] * grads[it - 2], fbps[it - 2])
        dxM = double_conv_apply(params["convMulti3"], old)
        conv3 = double_conv_apply(params["dconv_down3Multi"],
                                  jnp.concatenate([x, dxM], axis=-1))
        x = maxpool2x2(conv3)

        old = _cat3_nhwc(curs[it - 3], etas[it - 3] * grads[it - 3], fbps[it - 3])
        dxM = double_conv_apply(params["convMulti4"], old)
        conv4 = double_conv_apply(params["dconv_down4Multi"],
                                  jnp.concatenate([x, dxM], axis=-1))
        x = maxpool2x2(conv4)

        x = double_conv_apply(params["dconv_down5"], x)

        x = conv_transpose2x2(x, params["xUp4"])
        x = double_conv_apply(params["dconv_up4"], jnp.concatenate([x, conv4], axis=-1))

        x = conv_transpose2x2(x, params["xUp3"])
        x = double_conv_apply(params["dconv_up3"], jnp.concatenate([x, conv3], axis=-1))

        x = conv_transpose2x2(x, params["xUp2"])
        x = double_conv_apply(params["dconv_up2"], jnp.concatenate([x, conv2], axis=-1))

        x = conv_transpose2x2(x, params["xUp1"])
        xcat = jnp.concatenate([x, conv1], axis=-1)
        h1 = conv3x3_bn_relu(xcat, params["dconv_up1"]["c1"])
        out_hw = conv3x3_bn_relu_head(h1, params["dconv_up1"]["c2"],
                                      params["conv_last_w"], sb, cur_hw)

    return out_hw.reshape(N, 1, H, W)


# ----------------------------------- main ------------------------------------

if __name__ == "__main__":
    key = jax.random.PRNGKey(0)
    kp, kd = jax.random.split(key)
    params = init_iteration_params(kp)

    N, H, W = 2, 16, 16
    ks = jax.random.split(kd, 8)
    cur = jax.random.normal(ks[0], (N, 1, H, W), jnp.float32)
    y = jax.random.normal(ks[1], (N, 1, H, W), jnp.float32)

    # external operators passed to Iteration.__init__ (synthetic stand-ins)
    op = lambda t: t
    op_adj = lambda t: t
    fbp = lambda t: 0.5 * t

    # previous-iterate history; the Multi branches require progressively coarser
    # maps so that cat([maxpooled x, convMulti(old)]) is shape-consistent:
    # curs[it-1] at H/2, curs[it-2] at H/4, curs[it-3] at H/8.
    it = iter4Net - 1
    curs = [None] * iter4Net
    grads = [None] * iter4Net
    fbps_hist = [None] * iter4Net
    for n, (idx, (h, w)) in enumerate(zip((it - 1, it - 2, it - 3),
                                          ((H // 2, W // 2), (H // 4, W // 4),
                                           (H // 8, W // 8)))):
        k1, k2, k3 = jax.random.split(ks[2 + n], 3)
        curs[idx] = jax.random.normal(k1, (N, 1, h, w), jnp.float32)
        grads[idx] = jax.random.normal(k2, (N, 1, h, w), jnp.float32)
        fbps_hist[idx] = jax.random.normal(k3, (N, 1, h, w), jnp.float32)

    fwd = jax.jit(iteration_forward, static_argnums=(1, 2, 3, 9))

    # residual-block branch (it < iter4Net - 1)
    out_res = fwd(params, op, op_adj, fbp, cur, curs, grads, fbps_hist, y, 0)
    # multi-scale grad U-Net branch (it == iter4Net - 1)
    out_unet = fwd(params, op, op_adj, fbp, cur, curs, grads, fbps_hist, y, it)

    jax.block_until_ready((out_res, out_unet))
    assert out_res.shape == (N, 1, H, W) and out_unet.shape == (N, 1, H, W)
    assert np.all(np.isfinite(np.asarray(out_res)))
    assert np.all(np.isfinite(np.asarray(out_unet)))
    print("KERNEL_OK")
</pallas_src>

<mosaic_0001>
module attributes {stable_mosaic.version = 11 : i64} {
  func.func @_conv3x3_fused_kernel(%arg0: i32, %arg1: memref<1x18x18x3xbf16, #tpu.memory_space<vmem>>, %arg2: memref<9x3x32xbf16, #tpu.memory_space<vmem>>, %arg3: memref<1x32xf32, #tpu.memory_space<vmem>>, %arg4: memref<1x32xf32, #tpu.memory_space<vmem>>, %arg5: memref<1x256x32xbf16, #tpu.memory_space<vmem>>) attributes {dimension_semantics = [#tpu.dimension_semantics<parallel>], iteration_bounds = array<i64: 2>, scalar_prefetch = 0 : i64, scratch_operands = 0 : i64, tpu.core_type = #tpu.core_type<tc>, window_params = [{transform_indices = @transform_0, window_bounds = array<i64: 1, 18, 18, 3>}, {pipeline_mode = #tpu.pipeline_mode<synchronous>, transform_indices = @transform_1, window_bounds = array<i64: 9, 3, 32>}, {pipeline_mode = #tpu.pipeline_mode<synchronous>, transform_indices = @transform_2, window_bounds = array<i64: 1, 32>}, {pipeline_mode = #tpu.pipeline_mode<synchronous>, transform_indices = @transform_3, window_bounds = array<i64: 1, 32>}, {transform_indices = @transform_4, window_bounds = array<i64: 1, 256, 32>}]} {
    %c0 = arith.constant 0 : index
    %c0_0 = arith.constant 0 : index
    %c0_1 = arith.constant 0 : index
    %c0_2 = arith.constant 0 : index
    %0 = vector.load %arg1[%c0, %c0_0, %c0_1, %c0_2] : memref<1x18x18x3xbf16, #tpu.memory_space<vmem>>, vector<1x18x18x3xbf16>
    %1 = vector.shape_cast %0 : vector<1x18x18x3xbf16> to vector<18x18x3xbf16>
    %2 = arith.extf %1 : vector<18x18x3xbf16> to vector<18x18x3xf32>
    %cst = arith.constant 0.000000e+00 : f32
    %3 = vector.broadcast %cst : f32 to vector<256x32xf32>
    %4 = vector.extract_strided_slice %2 {offsets = [0, 0, 0], sizes = [16, 16, 3], strides = [1, 1, 1]} : vector<18x18x3xf32> to vector<16x16x3xf32>
    %5 = vector.shape_cast %4 : vector<16x16x3xf32> to vector<256x3xf32>
    %6 = arith.truncf %5 : vector<256x3xf32> to vector<256x3xbf16>
    %c0_3 = arith.constant 0 : index
    %c0_4 = arith.constant 0 : index
    %c0_5 = arith.constant 0 : index
    %7 = vector.load %arg2[%c0_3, %c0_4, %c0_5] : memref<9x3x32xbf16, #tpu.memory_space<vmem>>, vector<1x3x32xbf16>
    %8 = vector.shape_cast %7 : vector<1x3x32xbf16> to vector<3x32xbf16>
    %cst_6 = arith.constant dense<0.000000e+00> : vector<256x32xf32>
    %9 = tpu.matmul %6, %8, %cst_6 {dimension_numbers = #tpu.dot_dimension_numbers<[1], [0], [0], [1], [0, 0, 1, 1], [], []>} : vector<256x3xbf16>, vector<3x32xbf16>, vector<256x32xf32> -> vector<256x32xf32>
    %10 = arith.addf %3, %9 : vector<256x32xf32>
    %11 = vector.extract_strided_slice %2 {offsets = [0, 1, 0], sizes = [16, 16, 3], strides = [1, 1, 1]} : vector<18x18x3xf32> to vector<16x16x3xf32>
    %12 = vector.shape_cast %11 : vector<16x16x3xf32> to vector<256x3xf32>
    %13 = arith.truncf %12 : vector<256x3xf32> to vector<256x3xbf16>
    %c1 = arith.constant 1 : index
    %c0_7 = arith.constant 0 : index
    %c0_8 = arith.constant 0 : index
    %14 = vector.load %arg2[%c1, %c0_7, %c0_8] : memref<9x3x32xbf16, #tpu.memory_space<vmem>>, vector<1x3x32xbf16>
    %15 = vector.shape_cast %14 : vector<1x3x32xbf16> to vector<3x32xbf16>
    %cst_9 = arith.constant dense<0.000000e+00> : vector<256x32xf32>
    %16 = tpu.matmul %13, %15, %cst_9 {dimension_numbers = #tpu.dot_dimension_numbers<[1], [0], [0], [1], [0, 0, 1, 1], [], []>} : vector<256x3xbf16>, vector<3x32xbf16>, vector<256x32xf32> -> vector<256x32xf32>
    %17 = arith.addf %10, %16 : vector<256x32xf32>
    %18 = vector.extract_strided_slice %2 {offsets = [0, 2, 0], sizes = [16, 16, 3], strides = [1, 1, 1]} : vector<18x18x3xf32> to vector<16x16x3xf32>
    %19 = vector.shape_cast %18 : vector<16x16x3xf32> to vector<256x3xf32>
    %20 = arith.truncf %19 : vector<256x3xf32> to vector<256x3xbf16>
    %c2 = arith.constant 2 : index
    %c0_10 = arith.constant 0 : index
    %c0_11 = arith.constant 0 : index
    %21 = vector.load %arg2[%c2, %c0_10, %c0_11] : memref<9x3x32xbf16, #tpu.memory_space<vmem>>, vector<1x3x32xbf16>
    %22 = vector.shape_cast %21 : vector<1x3x32xbf16> to vector<3x32xbf16>
    %cst_12 = arith.constant dense<0.000000e+00> : vector<256x32xf32>
    %23 = tpu.matmul %20, %22, %cst_12 {dimension_numbers = #tpu.dot_dimension_numbers<[1], [0], [0], [1], [0, 0, 1, 1], [], []>} : vector<256x3xbf16>, vector<3x32xbf16>, vector<256x32xf32> -> vector<256x32xf32>
    %24 = arith.addf %17, %23 : vector<256x32xf32>
    %25 = vector.extract_strided_slice %2 {offsets = [1, 0, 0], sizes = [16, 16, 3], strides = [1, 1, 1]} : vector<18x18x3xf32> to vector<16x16x3xf32>
    %26 = vector.shape_cast %25 : vector<16x16x3xf32> to vector<256x3xf32>
    %27 = arith.truncf %26 : vector<256x3xf32> to vector<256x3xbf16>
    %c3 = arith.constant 3 : index
    %c0_13 = arith.constant 0 : index
    %c0_14 = arith.constant 0 : index
    %28 = vector.load %arg2[%c3, %c0_13, %c0_14] : memref<9x3x32xbf16, #tpu.memory_space<vmem>>, vector<1x3x32xbf16>
    %29 = vector.shape_cast %28 : vector<1x3x32xbf16> to vector<3x32xbf16>
    %cst_15 = arith.constant dense<0.000000e+00> : vector<256x32xf32>
    %30 = tpu.matmul %27, %29, %cst_15 {dimension_numbers = #tpu.dot_dimension_numbers<[1], [0], [0], [1], [0, 0, 1, 1], [], []>} : vector<256x3xbf16>, vector<3x32xbf16>, vector<256x32xf32> -> vector<256x32xf32>
    %31 = arith.addf %24, %30 : vector<256x32xf32>
    %32 = vector.extract_strided_slice %2 {offsets = [1, 1, 0], sizes = [16, 16, 3], strides = [1, 1, 1]} : vector<18x18x3xf32> to vector<16x16x3xf32>
    %33 = vector.shape_cast %32 : vector<16x16x3xf32> to vector<256x3xf32>
    %34 = arith.truncf %33 : vector<256x3xf32> to vector<256x3xbf16>
    %c4 = arith.constant 4 : index
    %c0_16 = arith.constant 0 : index
    %c0_17 = arith.constant 0 : index
    %35 = vector.load %arg2[%c4, %c0_16, %c0_17] : memref<9x3x32xbf16, #tpu.memory_space<vmem>>, vector<1x3x32xbf16>
    %36 = vector.shape_cast %35 : vector<1x3x32xbf16> to vector<3x32xbf16>
    %cst_18 = arith.constant dense<0.000000e+00> : vector<256x32xf32>
    %37 = tpu.matmul %34, %36, %cst_18 {dimension_numbers = #tpu.dot_dimension_numbers<[1], [0], [0], [1], [0, 0, 1, 1], [], []>} : vector<256x3xbf16>, vector<3x32xbf16>, vector<256x32xf32> -> vector<256x32xf32>
    %38 = arith.addf %31, %37 : vector<256x32xf32>
    %39 = vector.extract_strided_slice %2 {offsets = [1, 2, 0], sizes = [16, 16, 3], strides = [1, 1, 1]} : vector<18x18x3xf32> to vector<16x16x3xf32>
    %40 = vector.shape_cast %39 : vector<16x16x3xf32> to vector<256x3xf32>
    %41 = arith.truncf %40 : vector<256x3xf32> to vector<256x3xbf16>
    %c5 = arith.constant 5 : index
    %c0_19 = arith.constant 0 : index
    %c0_20 = arith.constant 0 : index
    %42 = vector.load %arg2[%c5, %c0_19, %c0_20] : memref<9x3x32xbf16, #tpu.memory_space<vmem>>, vector<1x3x32xbf16>
    %43 = vector.shape_cast %42 : vector<1x3x32xbf16> to vector<3x32xbf16>
    %cst_21 = arith.constant dense<0.000000e+00> : vector<256x32xf32>
    %44 = tpu.matmul %41, %43, %cst_21 {dimension_numbers = #tpu.dot_dimension_numbers<[1], [0], [0], [1], [0, 0, 1, 1], [], []>} : vector<256x3xbf16>, vector<3x32xbf16>, vector<256x32xf32> -> vector<256x32xf32>
    %45 = arith.addf %38, %44 : vector<256x32xf32>
    %46 = vector.extract_strided_slice %2 {offsets = [2, 0, 0], sizes = [16, 16, 3], strides = [1, 1, 1]} : vector<18x18x3xf32> to vector<16x16x3xf32>
    %47 = vector.shape_cast %46 : vector<16x16x3xf32> to vector<256x3xf32>
    %48 = arith.truncf %47 : vector<256x3xf32> to vector<256x3xbf16>
    %c6 = arith.constant 6 : index
    %c0_22 = arith.constant 0 : index
    %c0_23 = arith.constant 0 : index
    %49 = vector.load %arg2[%c6, %c0_22, %c0_23] : memref<9x3x32xbf16, #tpu.memory_space<vmem>>, vector<1x3x32xbf16>
    %50 = vector.shape_cast %49 : vector<1x3x32xbf16> to vector<3x32xbf16>
    %cst_24 = arith.constant dense<0.000000e+00> : vector<256x32xf32>
    %51 = tpu.matmul %48, %50, %cst_24 {dimension_numbers = #tpu.dot_dimension_numbers<[1], [0], [0], [1], [0, 0, 1, 1], [], []>} : vector<256x3xbf16>, vector<3x32xbf16>, vector<256x32xf32> -> vector<256x32xf32>
    %52 = arith.addf %45, %51 : vector<256x32xf32>
    %53 = vector.extract_strided_slice %2 {offsets = [2, 1, 0], sizes = [16, 16, 3], strides = [1, 1, 1]} : vector<18x18x3xf32> to vector<16x16x3xf32>
    %54 = vector.shape_cast %53 : vector<16x16x3xf32> to vector<256x3xf32>
    %55 = arith.truncf %54 : vector<256x3xf32> to vector<256x3xbf16>
    %c7 = arith.constant 7 : index
    %c0_25 = arith.constant 0 : index
    %c0_26 = arith.constant 0 : index
    %56 = vector.load %arg2[%c7, %c0_25, %c0_26] : memref<9x3x32xbf16, #tpu.memory_space<vmem>>, vector<1x3x32xbf16>
    %57 = vector.shape_cast %56 : vector<1x3x32xbf16> to vector<3x32xbf16>
    %cst_27 = arith.constant dense<0.000000e+00> : vector<256x32xf32>
    %58 = tpu.matmul %55, %57, %cst_27 {dimension_numbers = #tpu.dot_dimension_numbers<[1], [0], [0], [1], [0, 0, 1, 1], [], []>} : vector<256x3xbf16>, vector<3x32xbf16>, vector<256x32xf32> -> vector<256x32xf32>
    %59 = arith.addf %52, %58 : vector<256x32xf32>
    %60 = vector.extract_strided_slice %2 {offsets = [2, 2, 0], sizes = [16, 16, 3], strides = [1, 1, 1]} : vector<18x18x3xf32> to vector<16x16x3xf32>
    %61 = vector.shape_cast %60 : vector<16x16x3xf32> to vector<256x3xf32>
    %62 = arith.truncf %61 : vector<256x3xf32> to vector<256x3xbf16>
    %c8 = arith.constant 8 : index
    %c0_28 = arith.constant 0 : index
    %c0_29 = arith.constant 0 : index
    %63 = vector.load %arg2[%c8, %c0_28, %c0_29] : memref<9x3x32xbf16, #tpu.memory_space<vmem>>, vector<1x3x32xbf16>
    %64 = vector.shape_cast %63 : vector<1x3x32xbf16> to vector<3x32xbf16>
    %cst_30 = arith.constant dense<0.000000e+00> : vector<256x32xf32>
    %65 = tpu.matmul %62, %64, %cst_30 {dimension_numbers = #tpu.dot_dimension_numbers<[1], [0], [0], [1], [0, 0, 1, 1], [], []>} : vector<256x3xbf16>, vector<3x32xbf16>, vector<256x32xf32> -> vector<256x32xf32>
    %66 = arith.addf %59, %65 : vector<256x32xf32>
    %c0_31 = arith.constant 0 : index
    %c0_32 = arith.constant 0 : index
    %67 = vector.load %arg3[%c0_31, %c0_32] : memref<1x32xf32, #tpu.memory_space<vmem>>, vector<1x32xf32>
    %68 = vector.broadcast %67 : vector<1x32xf32> to vector<256x32xf32>
    %69 = arith.mulf %66, %68 : vector<256x32xf32>
    %c0_33 = arith.constant 0 : index
    %c0_34 = arith.constant 0 : index
    %70 = vector.load %arg4[%c0_33, %c0_34] : memref<1x32xf32, #tpu.memory_space<vmem>>, vector<1x32xf32>
    %71 = vector.broadcast %70 : vector<1x32xf32> to vector<256x32xf32>
    %72 = arith.addf %69, %71 : vector<256x32xf32>
    %cst_35 = arith.constant 0.000000e+00 : f32
    %73 = vector.broadcast %cst_35 : f32 to vector<256x32xf32>
    %74 = arith.maximumf %72, %73 : vector<256x32xf32>
    %75 = arith.truncf %74 : vector<256x32xf32> to vector<256x32xbf16>
    %c0_36 = arith.constant 0 : index
    %c0_37 = arith.constant 0 : index
    %c0_38 = arith.constant 0 : index
    %76 = vector.load %arg5[%c0_36, %c0_37, %c0_38] : memref<1x256x32xbf16, #tpu.memory_space<vmem>>, vector<1x256x32xbf16>
    %77 = vector.shape_cast %76 : vector<1x256x32xbf16> to vector<256x32xbf16>
    %78 = vector.shape_cast %75 : vector<256x32xbf16> to vector<1x256x32xbf16>
    tpu.vector_store %arg5[%c0_36, %c0_37, %c0_38], %78 {strides = array<i32>} : memref<1x256x32xbf16, #tpu.memory_space<vmem>>, vector<1x256x32xbf16>,
    return
  }
  func.func @transform_0(%arg0: i32) -> (i32, i32, i32, i32) {
    %c0_i32 = arith.constant 0 : i32
    %c0_i32_0 = arith.constant 0 : i32
    %c0_i32_1 = arith.constant 0 : i32
    %c0_i32_2 = arith.constant 0 : i32
    return %arg0, %c0_i32, %c0_i32_0, %c0_i32_1 : i32, i32, i32, i32
  }
  func.func @transform_1(%arg0: i32) -> (i32, i32, i32) {
    %c0_i32 = arith.constant 0 : i32
    %c0_i32_0 = arith.constant 0 : i32
    %c0_i32_1 = arith.constant 0 : i32
    %c0_i32_2 = arith.constant 0 : i32
    return %c0_i32, %c0_i32_0, %c0_i32_1 : i32, i32, i32
  }
  func.func @transform_2(%arg0: i32) -> (i32, i32) {
    %c0_i32 = arith.constant 0 : i32
    %c0_i32_0 = arith.constant 0 : i32
    %c0_i32_1 = arith.constant 0 : i32
    return %c0_i32, %c0_i32_0 : i32, i32
  }
  func.func @transform_3(%arg0: i32) -> (i32, i32) {
    %c0_i32 = arith.constant 0 : i32
    %c0_i32_0 = arith.constant 0 : i32
    %c0_i32_1 = arith.constant 0 : i32
    return %c0_i32, %c0_i32_0 : i32, i32
  }
  func.func @transform_4(%arg0: i32) -> (i32, i32, i32) {
    %c0_i32 = arith.constant 0 : i32
    %c0_i32_0 = arith.constant 0 : i32
    %c0_i32_1 = arith.constant 0 : i32
    return %arg0, %c0_i32, %c0_i32_0 : i32, i32, i32
  }
}

module attributes {stable_mosaic.version = 11 : i64} {
  func.func @_conv3x3_head_kernel(%arg0: i32, %arg1: memref<1x18x18x32xbf16, #tpu.memory_space<vmem>>, %arg2: memref<9x32x32xbf16, #tpu.memory_space<vmem>>, %arg3: memref<1x32xf32, #tpu.memory_space<vmem>>, %arg4: memref<1x32xf32, #tpu.memory_space<vmem>>, %arg5: memref<1x32xf32, #tpu.memory_space<vmem>>, %arg6: memref<1x16x16xf32, #tpu.memory_space<vmem>>, %arg7: memref<2xf32, #tpu.memory_space<smem>>, %arg8: memref<1x16x16xf32, #tpu.memory_space<vmem>>) attributes {dimension_semantics = [#tpu.dimension_semantics<parallel>], iteration_bounds = array<i64: 2>, scalar_prefetch = 0 : i64, scratch_operands = 0 : i64, tpu.core_type = #tpu.core_type<tc>, window_params = [{transform_indices = @transform_0, window_bounds = array<i64: 1, 18, 18, 32>}, {pipeline_mode = #tpu.pipeline_mode<synchronous>, transform_indices = @transform_1, window_bounds = array<i64: 9, 32, 32>}, {pipeline_mode = #tpu.pipeline_mode<synchronous>, transform_indices = @transform_2, window_bounds = array<i64: 1, 32>}, {pipeline_mode = #tpu.pipeline_mode<synchronous>, transform_indices = @transform_3, window_bounds = array<i64: 1, 32>}, {pipeline_mode = #tpu.pipeline_mode<synchronous>, transform_indices = @transform_4, window_bounds = array<i64: 1, 32>}, {transform_indices = @transform_5, window_bounds = array<i64: 1, 16, 16>}, {transform_indices = @transform_6, window_bounds = array<i64: 2>}, {transform_indices = @transform_7, window_bounds = array<i64: 1, 16, 16>}]} {
    %c0 = arith.constant 0 : index
    %c0_0 = arith.constant 0 : index
    %c0_1 = arith.constant 0 : index
    %c0_2 = arith.constant 0 : index
    %0 = vector.load %arg1[%c0, %c0_0, %c0_1, %c0_2] : memref<1x18x18x32xbf16, #tpu.memory_space<vmem>>, vector<1x18x18x32xbf16>
    %1 = vector.shape_cast %0 : vector<1x18x18x32xbf16> to vector<18x18x32xbf16>
    %2 = arith.extf %1 : vector<18x18x32xbf16> to vector<18x18x32xf32>
    %cst = arith.constant 0.000000e+00 : f32
    %3 = vector.broadcast %cst : f32 to vector<256x32xf32>
    %4 = vector.extract_strided_slice %2 {offsets = [0, 0, 0], sizes = [16, 16, 32], strides = [1, 1, 1]} : vector<18x18x32xf32> to vector<16x16x32xf32>
    %5 = vector.shape_cast %4 : vector<16x16x32xf32> to vector<256x32xf32>
    %6 = arith.truncf %5 : vector<256x32xf32> to vector<256x32xbf16>
    %c0_3 = arith.constant 0 : index
    %c0_4 = arith.constant 0 : index
    %c0_5 = arith.constant 0 : index
    %7 = vector.load %arg2[%c0_3, %c0_4, %c0_5] : memref<9x32x32xbf16, #tpu.memory_space<vmem>>, vector<1x32x32xbf16>
    %8 = vector.shape_cast %7 : vector<1x32x32xbf16> to vector<32x32xbf16>
    %cst_6 = arith.constant dense<0.000000e+00> : vector<256x32xf32>
    %9 = tpu.matmul %6, %8, %cst_6 {dimension_numbers = #tpu.dot_dimension_numbers<[1], [0], [0], [1], [0, 0, 1, 1], [], []>} : vector<256x32xbf16>, vector<32x32xbf16>, vector<256x32xf32> -> vector<256x32xf32>
    %10 = arith.addf %3, %9 : vector<256x32xf32>
    %11 = vector.extract_strided_slice %2 {offsets = [0, 1, 0], sizes = [16, 16, 32], strides = [1, 1, 1]} : vector<18x18x32xf32> to vector<16x16x32xf32>
    %12 = vector.shape_cast %11 : vector<16x16x32xf32> to vector<256x32xf32>
    %13 = arith.truncf %12 : vector<256x32xf32> to vector<256x32xbf16>
    %c1 = arith.constant 1 : index
    %c0_7 = arith.constant 0 : index
    %c0_8 = arith.constant 0 : index
    %14 = vector.load %arg2[%c1, %c0_7, %c0_8] : memref<9x32x32xbf16, #tpu.memory_space<vmem>>, vector<1x32x32xbf16>
    %15 = vector.shape_cast %14 : vector<1x32x32xbf16> to vector<32x32xbf16>
    %cst_9 = arith.constant dense<0.000000e+00> : vector<256x32xf32>
    %16 = tpu.matmul %13, %15, %cst_9 {dimension_numbers = #tpu.dot_dimension_numbers<[1], [0], [0], [1], [0, 0, 1, 1], [], []>} : vector<256x32xbf16>, vector<32x32xbf16>, vector<256x32xf32> -> vector<256x32xf32>
    %17 = arith.addf %10, %16 : vector<256x32xf32>
    %18 = vector.extract_strided_slice %2 {offsets = [0, 2, 0], sizes = [16, 16, 32], strides = [1, 1, 1]} : vector<18x18x32xf32> to vector<16x16x32xf32>
    %19 = vector.shape_cast %18 : vector<16x16x32xf32> to vector<256x32xf32>
    %20 = arith.truncf %19 : vector<256x32xf32> to vector<256x32xbf16>
    %c2 = arith.constant 2 : index
    %c0_10 = arith.constant 0 : index
    %c0_11 = arith.constant 0 : index
    %21 = vector.load %arg2[%c2, %c0_10, %c0_11] : memref<9x32x32xbf16, #tpu.memory_space<vmem>>, vector<1x32x32xbf16>
    %22 = vector.shape_cast %21 : vector<1x32x32xbf16> to vector<32x32xbf16>
    %cst_12 = arith.constant dense<0.000000e+00> : vector<256x32xf32>
    %23 = tpu.matmul %20, %22, %cst_12 {dimension_numbers = #tpu.dot_dimension_numbers<[1], [0], [0], [1], [0, 0, 1, 1], [], []>} : vector<256x32xbf16>, vector<32x32xbf16>, vector<256x32xf32> -> vector<256x32xf32>
    %24 = arith.addf %17, %23 : vector<256x32xf32>
    %25 = vector.extract_strided_slice %2 {offsets = [1, 0, 0], sizes = [16, 16, 32], strides = [1, 1, 1]} : vector<18x18x32xf32> to vector<16x16x32xf32>
    %26 = vector.shape_cast %25 : vector<16x16x32xf32> to vector<256x32xf32>
    %27 = arith.truncf %26 : vector<256x32xf32> to vector<256x32xbf16>
    %c3 = arith.constant 3 : index
    %c0_13 = arith.constant 0 : index
    %c0_14 = arith.constant 0 : index
    %28 = vector.load %arg2[%c3, %c0_13, %c0_14] : memref<9x32x32xbf16, #tpu.memory_space<vmem>>, vector<1x32x32xbf16>
    %29 = vector.shape_cast %28 : vector<1x32x32xbf16> to vector<32x32xbf16>
    %cst_15 = arith.constant dense<0.000000e+00> : vector<256x32xf32>
    %30 = tpu.matmul %27, %29, %cst_15 {dimension_numbers = #tpu.dot_dimension_numbers<[1], [0], [0], [1], [0, 0, 1, 1], [], []>} : vector<256x32xbf16>, vector<32x32xbf16>, vector<256x32xf32> -> vector<256x32xf32>
    %31 = arith.addf %24, %30 : vector<256x32xf32>
    %32 = vector.extract_strided_slice %2 {offsets = [1, 1, 0], sizes = [16, 16, 32], strides = [1, 1, 1]} : vector<18x18x32xf32> to vector<16x16x32xf32>
    %33 = vector.shape_cast %32 : vector<16x16x32xf32> to vector<256x32xf32>
    %34 = arith.truncf %33 : vector<256x32xf32> to vector<256x32xbf16>
    %c4 = arith.constant 4 : index
    %c0_16 = arith.constant 0 : index
    %c0_17 = arith.constant 0 : index
    %35 = vector.load %arg2[%c4, %c0_16, %c0_17] : memref<9x32x32xbf16, #tpu.memory_space<vmem>>, vector<1x32x32xbf16>
    %36 = vector.shape_cast %35 : vector<1x32x32xbf16> to vector<32x32xbf16>
    %cst_18 = arith.constant dense<0.000000e+00> : vector<256x32xf32>
    %37 = tpu.matmul %34, %36, %cst_18 {dimension_numbers = #tpu.dot_dimension_numbers<[1], [0], [0], [1], [0, 0, 1, 1], [], []>} : vector<256x32xbf16>, vector<32x32xbf16>, vector<256x32xf32> -> vector<256x32xf32>
    %38 = arith.addf %31, %37 : vector<256x32xf32>
    %39 = vector.extract_strided_slice %2 {offsets = [1, 2, 0], sizes = [16, 16, 32], strides = [1, 1, 1]} : vector<18x18x32xf32> to vector<16x16x32xf32>
    %40 = vector.shape_cast %39 : vector<16x16x32xf32> to vector<256x32xf32>
    %41 = arith.truncf %40 : vector<256x32xf32> to vector<256x32xbf16>
    %c5 = arith.constant 5 : index
    %c0_19 = arith.constant 0 : index
    %c0_20 = arith.constant 0 : index
    %42 = vector.load %arg2[%c5, %c0_19, %c0_20] : memref<9x32x32xbf16, #tpu.memory_space<vmem>>, vector<1x32x32xbf16>
    %43 = vector.shape_cast %42 : vector<1x32x32xbf16> to vector<32x32xbf16>
    %cst_21 = arith.constant dense<0.000000e+00> : vector<256x32xf32>
    %44 = tpu.matmul %41, %43, %cst_21 {dimension_numbers = #tpu.dot_dimension_numbers<[1], [0], [0], [1], [0, 0, 1, 1], [], []>} : vector<256x32xbf16>, vector<32x32xbf16>, vector<256x32xf32> -> vector<256x32xf32>
    %45 = arith.addf %38, %44 : vector<256x32xf32>
    %46 = vector.extract_strided_slice %2 {offsets = [2, 0, 0], sizes = [16, 16, 32], strides = [1, 1, 1]} : vector<18x18x32xf32> to vector<16x16x32xf32>
    %47 = vector.shape_cast %46 : vector<16x16x32xf32> to vector<256x32xf32>
    %48 = arith.truncf %47 : vector<256x32xf32> to vector<256x32xbf16>
    %c6 = arith.constant 6 : index
    %c0_22 = arith.constant 0 : index
    %c0_23 = arith.constant 0 : index
    %49 = vector.load %arg2[%c6, %c0_22, %c0_23] : memref<9x32x32xbf16, #tpu.memory_space<vmem>>, vector<1x32x32xbf16>
    %50 = vector.shape_cast %49 : vector<1x32x32xbf16> to vector<32x32xbf16>
    %cst_24 = arith.constant dense<0.000000e+00> : vector<256x32xf32>
    %51 = tpu.matmul %48, %50, %cst_24 {dimension_numbers = #tpu.dot_dimension_numbers<[1], [0], [0], [1], [0, 0, 1, 1], [], []>} : vector<256x32xbf16>, vector<32x32xbf16>, vector<256x32xf32> -> vector<256x32xf32>
    %52 = arith.addf %45, %51 : vector<256x32xf32>
    %53 = vector.extract_strided_slice %2 {offsets = [2, 1, 0], sizes = [16, 16, 32], strides = [1, 1, 1]} : vector<18x18x32xf32> to vector<16x16x32xf32>
    %54 = vector.shape_cast %53 : vector<16x16x32xf32> to vector<256x32xf32>
    %55 = arith.truncf %54 : vector<256x32xf32> to vector<256x32xbf16>
    %c7 = arith.constant 7 : index
    %c0_25 = arith.constant 0 : index
    %c0_26 = arith.constant 0 : index
    %56 = vector.load %arg2[%c7, %c0_25, %c0_26] : memref<9x32x32xbf16, #tpu.memory_space<vmem>>, vector<1x32x32xbf16>
    %57 = vector.shape_cast %56 : vector<1x32x32xbf16> to vector<32x32xbf16>
    %cst_27 = arith.constant dense<0.000000e+00> : vector<256x32xf32>
    %58 = tpu.matmul %55, %57, %cst_27 {dimension_numbers = #tpu.dot_dimension_numbers<[1], [0], [0], [1], [0, 0, 1, 1], [], []>} : vector<256x32xbf16>, vector<32x32xbf16>, vector<256x32xf32> -> vector<256x32xf32>
    %59 = arith.addf %52, %58 : vector<256x32xf32>
    %60 = vector.extract_strided_slice %2 {offsets = [2, 2, 0], sizes = [16, 16, 32], strides = [1, 1, 1]} : vector<18x18x32xf32> to vector<16x16x32xf32>
    %61 = vector.shape_cast %60 : vector<16x16x32xf32> to vector<256x32xf32>
    %62 = arith.truncf %61 : vector<256x32xf32> to vector<256x32xbf16>
    %c8 = arith.constant 8 : index
    %c0_28 = arith.constant 0 : index
    %c0_29 = arith.constant 0 : index
    %63 = vector.load %arg2[%c8, %c0_28, %c0_29] : memref<9x32x32xbf16, #tpu.memory_space<vmem>>, vector<1x32x32xbf16>
    %64 = vector.shape_cast %63 : vector<1x32x32xbf16> to vector<32x32xbf16>
    %cst_30 = arith.constant dense<0.000000e+00> : vector<256x32xf32>
    %65 = tpu.matmul %62, %64, %cst_30 {dimension_numbers = #tpu.dot_dimension_numbers<[1], [0], [0], [1], [0, 0, 1, 1], [], []>} : vector<256x32xbf16>, vector<32x32xbf16>, vector<256x32xf32> -> vector<256x32xf32>
    %66 = arith.addf %59, %65 : vector<256x32xf32>
    %c0_31 = arith.constant 0 : index
    %c0_32 = arith.constant 0 : index
    %67 = vector.load %arg3[%c0_31, %c0_32] : memref<1x32xf32, #tpu.memory_space<vmem>>, vector<1x32xf32>
    %68 = vector.broadcast %67 : vector<1x32xf32> to vector<256x32xf32>
    %69 = arith.mulf %66, %68 : vector<256x32xf32>
    %c0_33 = arith.constant 0 : index
    %c0_34 = arith.constant 0 : index
    %70 = vector.load %arg4[%c0_33, %c0_34] : memref<1x32xf32, #tpu.memory_space<vmem>>, vector<1x32xf32>
    %71 = vector.broadcast %70 : vector<1x32xf32> to vector<256x32xf32>
    %72 = arith.addf %69, %71 : vector<256x32xf32>
    %cst_35 = arith.constant 0.000000e+00 : f32
    %73 = vector.broadcast %cst_35 : f32 to vector<256x32xf32>
    %74 = arith.maximumf %72, %73 : vector<256x32xf32>
    %75 = vector.shape_cast %74 : vector<256x32xf32> to vector<16x16x32xf32>
    %c0_36 = arith.constant 0 : index
    %c0_37 = arith.constant 0 : index
    %76 = vector.load %arg5[%c0_36, %c0_37] : memref<1x32xf32, #tpu.memory_space<vmem>>, vector<1x32xf32>
    %77 = vector.shape_cast %76 : vector<1x32xf32> to vector<1x1x32xf32>
    %78 = vector.broadcast %77 : vector<1x1x32xf32> to vector<16x16x32xf32>
    %79 = arith.mulf %75, %78 : vector<16x16x32xf32>
    %cst_38 = arith.constant dense<0.000000e+00> : vector<16x16xf32>
    %80 = vector.multi_reduction <add>, %79, %cst_38 [2] : vector<16x16x32xf32> to vector<16x16xf32>
    %c0_39 = arith.constant 0 : index
    %c0_40 = arith.constant 0 : index
    %c0_41 = arith.constant 0 : index
    %81 = vector.load %arg6[%c0_39, %c0_40, %c0_41] : memref<1x16x16xf32, #tpu.memory_space<vmem>>, vector<1x16x16xf32>
    %82 = vector.shape_cast %81 : vector<1x16x16xf32> to vector<16x16xf32>
    %c1_42 = arith.constant 1 : index
    %83 = memref.load %arg7[%c1_42] : memref<2xf32, #tpu.memory_space<smem>>
    %c0_43 = arith.constant 0 : index
    %84 = memref.load %arg7[%c0_43] : memref<2xf32, #tpu.memory_space<smem>>
    %85 = vector.broadcast %84 : f32 to vector<16x16xf32>
    %86 = arith.addf %80, %85 : vector<16x16xf32>
    %87 = vector.broadcast %83 : f32 to vector<16x16xf32>
    %88 = arith.mulf %87, %86 : vector<16x16xf32>
    %89 = arith.addf %82, %88 : vector<16x16xf32>
    %c0_44 = arith.constant 0 : index
    %c0_45 = arith.constant 0 : index
    %c0_46 = arith.constant 0 : index
    %90 = vector.load %arg8[%c0_44, %c0_45, %c0_46] : memref<1x16x16xf32, #tpu.memory_space<vmem>>, vector<1x16x16xf32>
    %91 = vector.shape_cast %90 : vector<1x16x16xf32> to vector<16x16xf32>
    %92 = vector.shape_cast %89 : vector<16x16xf32> to vector<1x16x16xf32>
    tpu.vector_store %arg8[%c0_44, %c0_45, %c0_46], %92 {strides = array<i32>} : memref<1x16x16xf32, #tpu.memory_space<vmem>>, vector<1x16x16xf32>,
    return
  }
  func.func @transform_0(%arg0: i32) -> (i32, i32, i32, i32) {
    %c0_i32 = arith.constant 0 : i32
    %c0_i32_0 = arith.constant 0 : i32
    %c0_i32_1 = arith.constant 0 : i32
    %c0_i32_2 = arith.constant 0 : i32
    return %arg0, %c0_i32, %c0_i32_0, %c0_i32_1 : i32, i32, i32, i32
  }
  func.func @transform_1(%arg0: i32) -> (i32, i32, i32) {
    %c0_i32 = arith.constant 0 : i32
    %c0_i32_0 = arith.constant 0 : i32
    %c0_i32_1 = arith.constant 0 : i32
    %c0_i32_2 = arith.constant 0 : i32
    return %c0_i32, %c0_i32_0, %c0_i32_1 : i32, i32, i32
  }
  func.func @transform_2(%arg0: i32) -> (i32, i32) {
    %c0_i32 = arith.constant 0 : i32
    %c0_i32_0 = arith.constant 0 : i32
    %c0_i32_1 = arith.constant 0 : i32
    return %c0_i32, %c0_i32_0 : i32, i32
  }
  func.func @transform_3(%arg0: i32) -> (i32, i32) {
    %c0_i32 = arith.constant 0 : i32
    %c0_i32_0 = arith.constant 0 : i32
    %c0_i32_1 = arith.constant 0 : i32
    return %c0_i32, %c0_i32_0 : i32, i32
  }
  func.func @transform_4(%arg0: i32) -> (i32, i32) {
    %c0_i32 = arith.constant 0 : i32
    %c0_i32_0 = arith.constant 0 : i32
    %c0_i32_1 = arith.constant 0 : i32
    return %c0_i32, %c0_i32_0 : i32, i32
  }
  func.func @transform_5(%arg0: i32) -> (i32, i32, i32) {
    %c0_i32 = arith.constant 0 : i32
    %c0_i32_0 = arith.constant 0 : i32
    %c0_i32_1 = arith.constant 0 : i32
    return %arg0, %c0_i32, %c0_i32_0 : i32, i32, i32
  }
  func.func @transform_6(%arg0: i32) -> i32 {
    %c0_i32 = arith.constant 0 : i32
    %c0_i32_0 = arith.constant 0 : i32
    return %c0_i32 : i32
  }
  func.func @transform_7(%arg0: i32) -> (i32, i32, i32) {
    %c0_i32 = arith.constant 0 : i32
    %c0_i32_0 = arith.constant 0 : i32
    %c0_i32_1 = arith.constant 0 : i32
    return %arg0, %c0_i32, %c0_i32_0 : i32, i32, i32
  }
}

</mosaic_0001>

<llo_original>
// kernel: iteration_forward.2
$region0: #{iteration_forward.2}
  #allocation0 [shape = 'u32[]', space=smem, size = 0x4, offset = 0x4, fixed_abs, tag = 'smem constant byte address 0x4 - core index']
  #allocation1 [shape = 'u32[72,128]{1,0:T(1,128)}', space=vmem, size = 0x9000, scoped, tag = 'internal scratch']
  %s0 = inlined_call_operand.vmem [shape: bf16[2,18,18,3], index: 0, kind: input, shape index: {}]
  %s1 = inlined_call_operand.vmem [shape: bf16[9,3,32], index: 1, kind: input, shape index: {}]
  %s2 = inlined_call_operand.vmem [shape: f32[1,32], index: 2, kind: input, shape index: {}]
  %s3 = inlined_call_operand.vmem [shape: f32[1,32], index: 3, kind: input, shape index: {}]
  %s4 = inlined_call_operand.vmem [shape: bf16[2,256,32], index: 4, kind: output, shape index: {}]
  %s5 = sld [smem:[#allocation0]]
  $region49: #{iteration_forward.2} parent=0
    _
  %s7 = ssub.s32 1, %s5
  %s8 = scalar_select 0, %s7, %s5
  loop: start=0, step=1, limit=4
  $region2: #{iteration_forward.2} parent=0 // loop_pre_header
    _
  $region3: #{iteration_forward.2} parent=0 // loop_header
    %s10 = sphi 0, %s14
    %p11 = scmp.ge.s32.totalorder %s10, 4
    %s20 = sphi 0, %s22
    %s23 = sphi 0, %s20
    %s24 = sphi 0, %s23
    %s40 = sphi 0, %s24
    %s44 = sphi 0, %s44
    %s46 = sphi 0, %s44
    %s47 = sphi 0, %s46
    %s61 = sphi 0, %s47
    %s65 = sphi 0, %s65
    %s67 = sphi 0, %s65
    %s68 = sphi 0, %s67
    %s82 = sphi 0, %s68
    %s86 = sphi 0, %s86
    %s88 = sphi 0, %s86
    %s89 = sphi 0, %s88
    %s103 = sphi 0, %s89
    %s109 = sphi 0, %s111
    %s112 = sphi 0, %s109
    %s113 = sphi 0, %s112
    %s129 = sphi 0, %s113
  $region4: #{iteration_forward.2} parent=0 // loop_header_branch
    %13 = sbr.rel (%p11) target = $region8
  $region5: #{iteration_forward.2} parent=0 // loop_body
    %s15 = ssub.s32 %s10, 1
    %s16 = ssub.s32 %s10, 2
    %s17 = sadd.s32 %s10, 1
    %s18 = ssub.s32 %s10, %s17
    %p19 = scmp.eq.s32.totalorder %s18, 0
    %s21 = sadd.s32 %s20, 1
    %s22 = scalar_select %p19, %s20, %s21
    %p25 = pneg %p19
    %p26 = scmp.eq.s32.totalorder %s10, 1
    %p27 = por %p25, %p26
    %p28 = scmp.ne.s32.totalorder %s20, %s23
    %p29 = scmp.eq.s32.totalorder %s10, 0
    %p30 = por %p28, %p29
    %p31 = scmp.ne.s32.totalorder %s20, %s23
    %p32 = scmp.eq.s32.totalorder %s15, 1
    %p33 = por %p31, %p32
    %p34 = scmp.ne.s32.totalorder %s23, %s24
    %p35 = scmp.eq.s32.totalorder %s15, 0
    %p36 = por %p34, %p35
    %p37 = scmp.ne.s32.totalorder %s23, %s24
    %p38 = scmp.eq.s32.totalorder %s16, 1
    %p39 = por %p37, %p38
    %p41 = scmp.ne.s32.totalorder %s24, %s40
    %p42 = scmp.eq.s32.totalorder %s16, 0
    %p43 = por %p41, %p42
    %s45 = sadd.s32 %s44, 1
    %p48 = scmp.eq.s32.totalorder %s10, 1
    %p49 = scmp.ne.s32.totalorder %s44, %s46
    %p50 = scmp.eq.s32.totalorder %s10, 0
    %p51 = por %p49, %p50
    %p52 = scmp.ne.s32.totalorder %s44, %s46
    %p53 = scmp.eq.s32.totalorder %s15, 1
    %p54 = por %p52, %p53
    %p55 = scmp.ne.s32.totalorder %s46, %s47
    %p56 = scmp.eq.s32.totalorder %s15, 0
    %p57 = por %p55, %p56
    %p58 = scmp.ne.s32.totalorder %s46, %s47
    %p59 = scmp.eq.s32.totalorder %s16, 1
    %p60 = por %p58, %p59
    %p62 = scmp.ne.s32.totalorder %s47, %s61
    %p63 = scmp.eq.s32.totalorder %s16, 0
    %p64 = por %p62, %p63
    %s66 = sadd.s32 %s65, 1
    %p69 = scmp.eq.s32.totalorder %s10, 1
    %p70 = scmp.ne.s32.totalorder %s65, %s67
    %p71 = scmp.eq.s32.totalorder %s10, 0
    %p72 = por %p70, %p71
    %p73 = scmp.ne.s32.totalorder %s65, %s67
    %p74 = scmp.eq.s32.totalorder %s15, 1
    %p75 = por %p73, %p74
    %p76 = scmp.ne.s32.totalorder %s67, %s68
    %p77 = scmp.eq.s32.totalorder %s15, 0
    %p78 = por %p76, %p77
    %p79 = scmp.ne.s32.totalorder %s67, %s68
    %p80 = scmp.eq.s32.totalorder %s16, 1
    %p81 = por %p79, %p80
    %p83 = scmp.ne.s32.totalorder %s68, %s82
    %p84 = scmp.eq.s32.totalorder %s16, 0
    %p85 = por %p83, %p84
    %s87 = sadd.s32 %s86, 1
    %p90 = scmp.eq.s32.totalorder %s10, 1
    %p91 = scmp.ne.s32.totalorder %s86, %s88
    %p92 = scmp.eq.s32.totalorder %s10, 0
    %p93 = por %p91, %p92
    %p94 = scmp.ne.s32.totalorder %s86, %s88
    %p95 = scmp.eq.s32.totalorder %s15, 1
    %p96 = por %p94, %p95
    %p97 = scmp.ne.s32.totalorder %s88, %s89
    %p98 = scmp.eq.s32.totalorder %s15, 0
    %p99 = por %p97, %p98
    %p100 = scmp.ne.s32.totalorder %s88, %s89
    %p101 = scmp.eq.s32.totalorder %s16, 1
    %p102 = por %p100, %p101
    %p104 = scmp.ne.s32.totalorder %s89, %s103
    %p105 = scmp.eq.s32.totalorder %s16, 0
    %p106 = por %p104, %p105
    %s107 = ssub.s32 %s10, %s17
    %p108 = scmp.eq.s32.totalorder %s107, 0
    %s110 = sadd.s32 %s109, 1
    %s111 = scalar_select %p108, %s109, %s110
    %p114 = pneg %p108
    %p115 = scmp.eq.s32.totalorder %s10, 1
    %p116 = por %p114, %p115
    %p117 = scmp.ne.s32.totalorder %s109, %s112
    %p118 = scmp.eq.s32.totalorder %s10, 0
    %p119 = por %p117, %p118
    %p120 = scmp.ne.s32.totalorder %s109, %s112
    %p121 = scmp.eq.s32.totalorder %s15, 1
    %p122 = por %p120, %p121
    %p123 = scmp.ne.s32.totalorder %s112, %s113
    %p124 = scmp.eq.s32.totalorder %s15, 0
    %p125 = por %p123, %p124
    %p126 = scmp.ne.s32.totalorder %s112, %s113
    %p127 = scmp.eq.s32.totalorder %s16, 1
    %p128 = por %p126, %p127
    %p130 = scmp.ne.s32.totalorder %s113, %s129
    %p131 = scmp.eq.s32.totalorder %s16, 0
    %p132 = por %p130, %p131
    %p133 = scmp.le.s32.totalorder 1, %s10
    %p134 = scmp.lt.s32.totalorder %s10, 3
    %p135 = pnand %p133, %p134
    %p136 = pneg %p135
    // Predicated region
    $region9: #{iteration_forward.2} parent=5 // pred_check
      _
    $region10: #{iteration_forward.2} parent=5 // pred_check_branch
      %138 = sbr.rel (%p135) target = $region12
    $region11: #{iteration_forward.2} parent=5 // pred_region
      %s139 = ssub.s32 %s10, 1
      // Predicated region
      $region13: #{iteration_forward.2} parent=11 // pred_check
        %p140 = pneg %p57
      $region14: #{iteration_forward.2} parent=11 // pred_check_branch
        %142 = sbr.rel (%p140) target = $region16
      $region15: #{iteration_forward.2} parent=11 // pred_region
        _
      $region16: #{iteration_forward.2} parent=11 // pred_fallthru
        _
      // Predicated region
      $region17: #{iteration_forward.2} parent=11 // pred_check
        %p143 = pneg %p78
      $region18: #{iteration_forward.2} parent=11 // pred_check_branch
        %145 = sbr.rel (%p143) target = $region20
      $region19: #{iteration_forward.2} parent=11 // pred_region
        _
      $region20: #{iteration_forward.2} parent=11 // pred_fallthru
        _
      // Predicated region
      $region21: #{iteration_forward.2} parent=11 // pred_check
        %p146 = pneg %p99
      $region22: #{iteration_forward.2} parent=11 // pred_check_branch
        %148 = sbr.rel (%p146) target = $region24
      $region23: #{iteration_forward.2} parent=11 // pred_region
        _
      $region24: #{iteration_forward.2} parent=11 // pred_fallthru
        _
    $region12: #{iteration_forward.2} parent=5 // pred_fallthru
      _
    %p149 = scmp.lt.s32.totalorder %s10, 2
    // Predicated region
    $region25: #{iteration_forward.2} parent=5 // pred_check
      %p150 = pneg %p149
    $region26: #{iteration_forward.2} parent=5 // pred_check_branch
      %152 = sbr.rel (%p150) target = $region28
    $region27: #{iteration_forward.2} parent=5 // pred_region
      // Predicated region
      $region29: #{iteration_forward.2} parent=27 // pred_check
        %p153 = pneg %p30
      $region30: #{iteration_forward.2} parent=27 // pred_check_branch
        %155 = sbr.rel (%p153) target = $region32
      $region31: #{iteration_forward.2} parent=27 // pred_region
        %p156 = scmp.lt.s32.totalorder %s10, 1
        %s157 = scalar_select %p156, %s10, 1
        %s158 = smul.addr %s157, 54
        %s159 = smul.addr %s158, 4
        %s160 = scalar_lea.vmem %s0, %s159
      $region32: #{iteration_forward.2} parent=27 // pred_fallthru
        _
    $region28: #{iteration_forward.2} parent=5 // pred_fallthru
      _
    %p161 = scmp.le.s32.totalorder 1, %s10
    %p162 = scmp.lt.s32.totalorder %s10, 3
    %p163 = pnand %p161, %p162
    %p164 = pneg %p163
    // Predicated region
    $region33: #{iteration_forward.2} parent=5 // pred_check
      _
    $region34: #{iteration_forward.2} parent=5 // pred_check_branch
      %166 = sbr.rel (%p163) target = $region36
    $region35: #{iteration_forward.2} parent=5 // pred_region
      %s167 = ssub.s32 %s10, 1
      %p168 = scmp.lt.s32.totalorder %s15, 1
      %s169 = scalar_select %p168, %s15, 1
      %s170 = smul.addr %s169, 54
      %s171 = smul.addr %s170, 4
      %s172 = scalar_lea.vmem %s0, %s171
      %p173 = pneg %p36
      %p174 = pneg %p33
      %p175 = pneg %p57
      %p176 = pneg %p54
      %p177 = pneg %p78
      %p178 = pneg %p75
      %p179 = pneg %p99
      %p180 = pneg %p96
      %p181 = pneg %p125
      %p182 = pneg %p122
      %p183 = scmp.lt.s32.totalorder %s15, 1
      %s184 = scalar_select %p183, %s15, 1
      %s185 = smul.addr %s184, 32
      %s186 = smul.addr %s185, 4
      %s187 = scalar_lea.vmem %s4, %s186
      %p188 = scmp.lt.s32.totalorder %s15, 1
      %s189 = scalar_select %p188, %s15, 1
      %s190 = smul.addr %s189, 54
      %s191 = smul.addr %s190, 4
      %s192 = scalar_lea.vmem %s0, %s191
      %p193 = scmp.lt.s32.totalorder %s15, 1
      %s194 = scalar_select %p193, %s15, 1
      %s195 = smul.addr %s194, 32
      %s196 = smul.addr %s195, 4
      %s197 = scalar_lea.vmem %s4, %s196
      %v199 = vld [vmem:[%s192] sm:$0xf]
      %v200 = vld [vmem:[%s192 + $0x4] sm:$0xf]
      %v201 = vld [vmem:[%s192 + $0x8] sm:$0x1]
      %v202 = vld [vmem:[%s192 + $0xc] sm:$0xf]
      %v203 = vld [vmem:[%s192 + $0x10] sm:$0xf]
      %v204 = vld [vmem:[%s192 + $0x14] sm:$0x1]
      %v205 = vld [vmem:[%s192 + $0x18] sm:$0xf]
      %v206 = vld [vmem:[%s192 + $0x1c] sm:$0xf]
      %v207 = vld [vmem:[%s192 + $0x20] sm:$0x1]
      %v208 = vld [vmem:[%s192 + $0x24] sm:$0xf]
      %v209 = vld [vmem:[%s192 + $0x28] sm:$0xf]
      %v210 = vld [vmem:[%s192 + $0x2c] sm:$0x1]
      %v211 = vld [vmem:[%s192 + $0x30] sm:$0xf]
      %v212 = vld [vmem:[%s192 + $0x34] sm:$0xf]
      %v213 = vld [vmem:[%s192 + $0x38] sm:$0x1]
      %v214 = vld [vmem:[%s192 + $0x3c] sm:$0xf]
      %v215 = vld [vmem:[%s192 + $0x40] sm:$0xf]
      %v216 = vld [vmem:[%s192 + $0x44] sm:$0x1]
      %v217 = vld [vmem:[%s192 + $0x48] sm:$0xf]
      %v218 = vld [vmem:[%s192 + $0x4c] sm:$0xf]
      %v219 = vld [vmem:[%s192 + $0x50] sm:$0x1]
      %v220 = vld [vmem:[%s192 + $0x54] sm:$0xf]
      %v221 = vld [vmem:[%s192 + $0x58] sm:$0xf]
      %v222 = vld [vmem:[%s192 + $0x5c] sm:$0x1]
      %v223 = vld [vmem:[%s192 + $0x60] sm:$0xf]
      %v224 = vld [vmem:[%s192 + $0x64] sm:$0xf]
      %v225 = vld [vmem:[%s192 + $0x68] sm:$0x1]
      %v226 = vld [vmem:[%s192 + $0x6c] sm:$0xf]
      %v227 = vld [vmem:[%s192 + $0x70] sm:$0xf]
      %v228 = vld [vmem:[%s192 + $0x74] sm:$0x1]
      %v229 = vld [vmem:[%s192 + $0x78] sm:$0xf]
      %v230 = vld [vmem:[%s192 + $0x7c] sm:$0xf]
      %v231 = vld [vmem:[%s192 + $0x80] sm:$0x1]
      %v232 = vld [vmem:[%s192 + $0x84] sm:$0xf]
      %v233 = vld [vmem:[%s192 + $0x88] sm:$0xf]
      %v234 = vld [vmem:[%s192 + $0x8c] sm:$0x1]
      %v235 = vld [vmem:[%s192 + $0x90] sm:$0xf]
      %v236 = vld [vmem:[%s192 + $0x94] sm:$0xf]
      %v237 = vld [vmem:[%s192 + $0x98] sm:$0x1]
      %v238 = vld [vmem:[%s192 + $0x9c] sm:$0xf]
      %v239 = vld [vmem:[%s192 + $0xa0] sm:$0xf]
      %v240 = vld [vmem:[%s192 + $0xa4] sm:$0x1]
      %v241 = vld [vmem:[%s192 + $0xa8] sm:$0xf]
      %v242 = vld [vmem:[%s192 + $0xac] sm:$0xf]
      %v243 = vld [vmem:[%s192 + $0xb0] sm:$0x1]
      %v244 = vld [vmem:[%s192 + $0xb4] sm:$0xf]
      %v245 = vld [vmem:[%s192 + $0xb8] sm:$0xf]
      %v246 = vld [vmem:[%s192 + $0xbc] sm:$0x1]
      %v247 = vld [vmem:[%s192 + $0xc0] sm:$0xf]
      %v248 = vld [vmem:[%s192 + $0xc4] sm:$0xf]
      %v249 = vld [vmem:[%s192 + $0xc8] sm:$0x1]
      %v250 = vld [vmem:[%s192 + $0xcc] sm:$0xf]
      %v251 = vld [vmem:[%s192 + $0xd0] sm:$0xf]
      %v252 = vld [vmem:[%s192 + $0xd4] sm:$0x1]
      %v253 = vunpack.c.l.bf16 %v199
      %v254 = vunpack.c.l.bf16 %v200
      %v255 = vunpack.c.l.bf16 %v201
      %v256 = vunpack.c.l.bf16 %v202
      %v257 = vunpack.c.l.bf16 %v203
      %v258 = vunpack.c.l.bf16 %v204
      %v259 = vunpack.c.l.bf16 %v205
      %v260 = vunpack.c.l.bf16 %v206
      %v261 = vunpack.c.l.bf16 %v207
      %v262 = vunpack.c.l.bf16 %v208
      %v263 = vunpack.c.l.bf16 %v209
      %v264 = vunpack.c.l.bf16 %v210
      %v265 = vunpack.c.l.bf16 %v211
      %v266 = vunpack.c.l.bf16 %v212
      %v267 = vunpack.c.l.bf16 %v213
      %v268 = vunpack.c.l.bf16 %v214
      %v269 = vunpack.c.l.bf16 %v215
      %v270 = vunpack.c.l.bf16 %v216
      %v271 = vunpack.c.l.bf16 %v217
      %v272 = vunpack.c.l.bf16 %v218
      %v273 = vunpack.c.l.bf16 %v219
      %v274 = vunpack.c.l.bf16 %v220
      %v275 = vunpack.c.l.bf16 %v221
      %v276 = vunpack.c.l.bf16 %v222
      %v277 = vunpack.c.l.bf16 %v223
      %v278 = vunpack.c.l.bf16 %v224
      %v279 = vunpack.c.l.bf16 %v225
      %v280 = vunpack.c.l.bf16 %v226
      %v281 = vunpack.c.l.bf16 %v227
      %v282 = vunpack.c.l.bf16 %v228
      %v283 = vunpack.c.l.bf16 %v229
      %v284 = vunpack.c.l.bf16 %v230
      %v285 = vunpack.c.l.bf16 %v231
      %v286 = vunpack.c.l.bf16 %v232
      %v287 = vunpack.c.l.bf16 %v233
      %v288 = vunpack.c.l.bf16 %v234
      %v289 = vunpack.c.l.bf16 %v235
      %v290 = vunpack.c.l.bf16 %v236
      %v291 = vunpack.c.l.bf16 %v237
      %v292 = vunpack.c.l.bf16 %v238
      %v293 = vunpack.c.l.bf16 %v239
      %v294 = vunpack.c.l.bf16 %v240
      %v295 = vunpack.c.l.bf16 %v241
      %v296 = vunpack.c.l.bf16 %v242
      %v297 = vunpack.c.l.bf16 %v243
      %v298 = vunpack.c.l.bf16 %v244
      %v299 = vunpack.c.l.bf16 %v245
      %v300 = vunpack.c.l.bf16 %v246
      %v301 = vunpack.c.l.bf16 %v247
      %v302 = vunpack.c.l.bf16 %v248
      %v303 = vunpack.c.l.bf16 %v249
      %v304 = vunpack.c.l.bf16 %v250
      %v305 = vunpack.c.l.bf16 %v251
      %v306 = vunpack.c.l.bf16 %v252
      %v307 = vpack.c.bf16 %v254, %v253
      %v308 = vpack.c.bf16 %v257, %v256
      %v309 = vpack.c.bf16 %v260, %v259
      %v310 = vpack.c.bf16 %v263, %v262
      %v311 = vpack.c.bf16 %v266, %v265
      %v312 = vpack.c.bf16 %v269, %v268
      %v313 = vpack.c.bf16 %v272, %v271
      %v314 = vpack.c.bf16 %v275, %v274
      %v315 = vpack.c.bf16 %v278, %v277
      %v316 = vpack.c.bf16 %v281, %v280
      %v317 = vpack.c.bf16 %v284, %v283
      %v318 = vpack.c.bf16 %v287, %v286
      %v319 = vpack.c.bf16 %v290, %v289
      %v320 = vpack.c.bf16 %v293, %v292
      %v321 = vpack.c.bf16 %v296, %v295
      %v322 = vpack.c.bf16 %v299, %v298
      %v323 = vld [vmem:[%s1] sm:$0x3]
      %vm372 = vcmask 1046528
      %v373 = vrot.slane %v253, 1
      %v374 = vrot.slane %v254, 1
      %v375 = vsel %vm372, %v373, %v374
      %v376 = vrot.slane %v255, 1
      %v377 = vsel %vm372, %v374, %v376
      %v378 = vrot.slane %v256, 1
      %v379 = vrot.slane %v257, 1
      %v380 = vsel %vm372, %v378, %v379
      %v381 = vrot.slane %v258, 1
      %v382 = vsel %vm372, %v379, %v381
      %v383 = vrot.slane %v259, 1
      %v384 = vrot.slane %v260, 1
      %v385 = vsel %vm372, %v383, %v384
      %v386 = vrot.slane %v261, 1
      %v387 = vsel %vm372, %v384, %v386
      %v388 = vrot.slane %v262, 1
      %v389 = vrot.slane %v263, 1
      %v390 = vsel %vm372, %v388, %v389
      %v391 = vrot.slane %v264, 1
      %v392 = vsel %vm372, %v389, %v391
      %v393 = vrot.slane %v265, 1
      %v394 = vrot.slane %v266, 1
      %v395 = vsel %vm372, %v393, %v394
      %v396 = vrot.slane %v267, 1
      %v397 = vsel %vm372, %v394, %v396
      %v398 = vrot.slane %v268, 1
      %v399 = vrot.slane %v269, 1
      %v400 = vsel %vm372, %v398, %v399
      %v401 = vrot.slane %v270, 1
      %v402 = vsel %vm372, %v399, %v401
      %v403 = vrot.slane %v271, 1
      %v404 = vrot.slane %v272, 1
      %v405 = vsel %vm372, %v403, %v404
      %v406 = vrot.slane %v273, 1
      %v407 = vsel %vm372, %v404, %v406
      %v408 = vrot.slane %v274, 1
      %v409 = vrot.slane %v275, 1
      %v410 = vsel %vm372, %v408, %v409
      %v411 = vrot.slane %v276, 1
      %v412 = vsel %vm372, %v409, %v411
      %v413 = vrot.slane %v277, 1
      %v414 = vrot.slane %v278, 1
      %v415 = vsel %vm372, %v413, %v414
      %v416 = vrot.slane %v279, 1
      %v417 = vsel %vm372, %v414, %v416
      %v418 = vrot.slane %v280, 1
      %v419 = vrot.slane %v281, 1
      %v420 = vsel %vm372, %v418, %v419
      %v421 = vrot.slane %v282, 1
      %v422 = vsel %vm372, %v419, %v421
      %v423 = vrot.slane %v283, 1
      %v424 = vrot.slane %v284, 1
      %v425 = vsel %vm372, %v423, %v424
      %v426 = vrot.slane %v285, 1
      %v427 = vsel %vm372, %v424, %v426
      %v428 = vrot.slane %v286, 1
      %v429 = vrot.slane %v287, 1
      %v430 = vsel %vm372, %v428, %v429
      %v431 = vrot.slane %v288, 1
      %v432 = vsel %vm372, %v429, %v431
      %v433 = vrot.slane %v289, 1
      %v434 = vrot.slane %v290, 1
      %v435 = vsel %vm372, %v433, %v434
      %v436 = vrot.slane %v291, 1
      %v437 = vsel %vm372, %v434, %v436
      %v438 = vrot.slane %v292, 1
      %v439 = vrot.slane %v293, 1
      %v440 = vsel %vm372, %v438, %v439
      %v441 = vrot.slane %v294, 1
      %v442 = vsel %vm372, %v439, %v441
      %v443 = vrot.slane %v295, 1
      %v444 = vrot.slane %v296, 1
      %v445 = vsel %vm372, %v443, %v444
      %v446 = vrot.slane %v297, 1
      %v447 = vsel %vm372, %v444, %v446
      %v448 = vrot.slane %v298, 1
      %v449 = vrot.slane %v299, 1
      %v450 = vsel %vm372, %v448, %v449
      %v451 = vrot.slane %v300, 1
      %v452 = vsel %vm372, %v449, %v451
      %v485 = vpack.c.bf16 %v377, %v375
      %v486 = vpack.c.bf16 %v382, %v380
      %v487 = vpack.c.bf16 %v387, %v385
      %v488 = vpack.c.bf16 %v392, %v390
      %v489 = vpack.c.bf16 %v397, %v395
      %v490 = vpack.c.bf16 %v402, %v400
      %v491 = vpack.c.bf16 %v407, %v405
      %v492 = vpack.c.bf16 %v412, %v410
      %v493 = vpack.c.bf16 %v417, %v415
      %v494 = vpack.c.bf16 %v422, %v420
      %v495 = vpack.c.bf16 %v427, %v425
      %v496 = vpack.c.bf16 %v432, %v430
      %v497 = vpack.c.bf16 %v437, %v435
      %v498 = vpack.c.bf16 %v442, %v440
      %v499 = vpack.c.bf16 %v447, %v445
      %v500 = vpack.c.bf16 %v452, %v450
      %s501 = scalar_lea.vmem %s1, 2
      %v502 = vld [vmem:[%s501] sm:$0x3]
      %vm503 = vcmask 23552
      %v505 = vsel %vm503, %v485, 0
      %v508 = vsel %vm503, %v486, 0
      %v511 = vsel %vm503, %v487, 0
      %v514 = vsel %vm503, %v488, 0
      %v517 = vsel %vm503, %v489, 0
      %v520 = vsel %vm503, %v490, 0
      %v523 = vsel %vm503, %v491, 0
      %v526 = vsel %vm503, %v492, 0
      %v529 = vsel %vm503, %v493, 0
      %v532 = vsel %vm503, %v494, 0
      %v535 = vsel %vm503, %v495, 0
      %v538 = vsel %vm503, %v496, 0
      %v541 = vsel %vm503, %v497, 0
      %v544 = vsel %vm503, %v498, 0
      %v547 = vsel %vm503, %v499, 0
      %v550 = vsel %vm503, %v500, 0
      %vm552 = vcmask 1040384
      %vm553 = vcmask 1041408
      %v554 = vsel %vm552, 4294967295, 65535
      %v555 = vsel %vm553, %v554, 0
      %v557 = vand.u32 %v502, %v555
      %559 = vmatpush.bf16.msra.mxu0 0
      %560 = vmatpush.bf16.msra.mxu0 0
      %561 = vmatpush.bf16.msra.mxu0 0
      %562 = vmatpush.bf16.msra.mxu0 0
      %563 = vmatpush.bf16.msra.mxu0 0
      %564 = vmatpush.bf16.msra.mxu0 0
      %565 = vmatpush.bf16.msra.mxu0 0
      %566 = vmatpush.bf16.msra.mxu0 %v557
      %567 = vmatmul.bf16.gmra.mxu0 %v505
      %v568 = vpop.f32.mrf.mxu0
      %v569 = vadd.f32 0.0, %v568
      %v570 = vpop.f32.mrf.mxu0
      %v571 = vadd.f32 0.0, %v570
      %572 = vmatmul.bf16.gmra.mxu0 %v508
      %v573 = vpop.f32.mrf.mxu0
      %v574 = vadd.f32 0.0, %v573
      %v575 = vpop.f32.mrf.mxu0
      %v576 = vadd.f32 0.0, %v575
      %577 = vmatmul.bf16.gmra.mxu0 %v511
      %v578 = vpop.f32.mrf.mxu0
      %v579 = vadd.f32 0.0, %v578
      %v580 = vpop.f32.mrf.mxu0
      %v581 = vadd.f32 0.0, %v580
      %582 = vmatmul.bf16.gmra.mxu0 %v514
      %v583 = vpop.f32.mrf.mxu0
      %v584 = vadd.f32 0.0, %v583
      %v585 = vpop.f32.mrf.mxu0
      %v586 = vadd.f32 0.0, %v585
      %587 = vmatmul.bf16.gmra.mxu0 %v517
      %v588 = vpop.f32.mrf.mxu0
      %v589 = vadd.f32 0.0, %v588
      %v590 = vpop.f32.mrf.mxu0
      %v591 = vadd.f32 0.0, %v590
      %592 = vmatmul.bf16.gmra.mxu0 %v520
      %v593 = vpop.f32.mrf.mxu0
      %v594 = vadd.f32 0.0, %v593
      %v595 = vpop.f32.mrf.mxu0
      %v596 = vadd.f32 0.0, %v595
      %597 = vmatmul.bf16.gmra.mxu0 %v523
      %v598 = vpop.f32.mrf.mxu0
      %v599 = vadd.f32 0.0, %v598
      %v600 = vpop.f32.mrf.mxu0
      %v601 = vadd.f32 0.0, %v600
      %602 = vmatmul.bf16.gmra.mxu0 %v526
      %v603 = vpop.f32.mrf.mxu0
      %v604 = vadd.f32 0.0, %v603
      %v605 = vpop.f32.mrf.mxu0
      %v606 = vadd.f32 0.0, %v605
      %607 = vmatmul.bf16.gmra.mxu0 %v529
      %v608 = vpop.f32.mrf.mxu0
      %v609 = vadd.f32 0.0, %v608
      %v610 = vpop.f32.mrf.mxu0
      %v611 = vadd.f32 0.0, %v610
      %612 = vmatmul.bf16.gmra.mxu0 %v532
      %v613 = vpop.f32.mrf.mxu0
      %v614 = vadd.f32 0.0, %v613
      %v615 = vpop.f32.mrf.mxu0
      %v616 = vadd.f32 0.0, %v615
      %617 = vmatmul.bf16.gmra.mxu0 %v535
      %v618 = vpop.f32.mrf.mxu0
      %v619 = vadd.f32 0.0, %v618
      %v620 = vpop.f32.mrf.mxu0
      %v621 = vadd.f32 0.0, %v620
      %622 = vmatmul.bf16.gmra.mxu0 %v538
      %v623 = vpop.f32.mrf.mxu0
      %v624 = vadd.f32 0.0, %v623
      %v625 = vpop.f32.mrf.mxu0
      %v626 = vadd.f32 0.0, %v625
      %627 = vmatmul.bf16.gmra.mxu0 %v541
      %v628 = vpop.f32.mrf.mxu0
      %v629 = vadd.f32 0.0, %v628
      %v630 = vpop.f32.mrf.mxu0
      %v631 = vadd.f32 0.0, %v630
      %632 = vmatmul.bf16.gmra.mxu0 %v544
      %v633 = vpop.f32.mrf.mxu0
      %v634 = vadd.f32 0.0, %v633
      %v635 = vpop.f32.mrf.mxu0
      %v636 = vadd.f32 0.0, %v635
      %637 = vmatmul.bf16.gmra.mxu0 %v547
      %v638 = vpop.f32.mrf.mxu0
      %v639 = vadd.f32 0.0, %v638
      %v640 = vpop.f32.mrf.mxu0
      %v641 = vadd.f32 0.0, %v640
      %642 = vmatmul.bf16.gmra.mxu0 %v550
      %v643 = vpop.f32.mrf.mxu0
      %v644 = vadd.f32 0.0, %v643
      %v645 = vpop.f32.mrf.mxu0
      %v646 = vadd.f32 0.0, %v645
      %647 = vdwg.mxu0
      %v649 = vsel %vm503, %v307, 0
      %v652 = vsel %vm503, %v308, 0
      %v655 = vsel %vm503, %v309, 0
      %v658 = vsel %vm503, %v310, 0
      %v661 = vsel %vm503, %v311, 0
      %v664 = vsel %vm503, %v312, 0
      %v667 = vsel %vm503, %v313, 0
      %v670 = vsel %vm503, %v314, 0
      %v673 = vsel %vm503, %v315, 0
      %v676 = vsel %vm503, %v316, 0
      %v679 = vsel %vm503, %v317, 0
      %v682 = vsel %vm503, %v318, 0
      %v685 = vsel %vm503, %v319, 0
      %v688 = vsel %vm503, %v320, 0
      %v691 = vsel %vm503, %v321, 0
      %v694 = vsel %vm503, %v322, 0
      %v697 = vand.u32 %v323, %v555
      %699 = vmatpush.bf16.msra.mxu0 0
      %700 = vmatpush.bf16.msra.mxu0 0
      %701 = vmatpush.bf16.msra.mxu0 0
      %702 = vmatpush.bf16.msra.mxu0 0
      %703 = vmatpush.bf16.msra.mxu0 0
      %704 = vmatpush.bf16.msra.mxu0 0
      %705 = vmatpush.bf16.msra.mxu0 0
      %706 = vmatpush.bf16.msra.mxu0 %v697
      %707 = vmatmul.bf16.gmra.mxu0 %v649
      %v708 = vpop.f32.mrf.mxu0
      %v709 = vadd.f32 %v569, %v708
      %v710 = vpop.f32.mrf.mxu0
      %v711 = vadd.f32 %v571, %v710
      %712 = vmatmul.bf16.gmra.mxu0 %v652
      %v713 = vpop.f32.mrf.mxu0
      %v714 = vadd.f32 %v574, %v713
      %v715 = vpop.f32.mrf.mxu0
      %v716 = vadd.f32 %v576, %v715
      %717 = vmatmul.bf16.gmra.mxu0 %v655
      %v718 = vpop.f32.mrf.mxu0
      %v719 = vadd.f32 %v579, %v718
      %v720 = vpop.f32.mrf.mxu0
      %v721 = vadd.f32 %v581, %v720
      %722 = vmatmul.bf16.gmra.mxu0 %v658
      %v723 = vpop.f32.mrf.mxu0
      %v724 = vadd.f32 %v584, %v723
      %v725 = vpop.f32.mrf.mxu0
      %v726 = vadd.f32 %v586, %v725
      %727 = vmatmul.bf16.gmra.mxu0 %v661
      %v728 = vpop.f32.mrf.mxu0
      %v729 = vadd.f32 %v589, %v728
      %v730 = vpop.f32.mrf.mxu0
      %v731 = vadd.f32 %v591, %v730
      %732 = vmatmul.bf16.gmra.mxu0 %v664
      %v733 = vpop.f32.mrf.mxu0
      %v734 = vadd.f32 %v594, %v733
      %v735 = vpop.f32.mrf.mxu0
      %v736 = vadd.f32 %v596, %v735
      %737 = vmatmul.bf16.gmra.mxu0 %v667
      %v738 = vpop.f32.mrf.mxu0
      %v739 = vadd.f32 %v599, %v738
      %v740 = vpop.f32.mrf.mxu0
      %v741 = vadd.f32 %v601, %v740
      %742 = vmatmul.bf16.gmra.mxu0 %v670
      %v743 = vpop.f32.mrf.mxu0
      %v744 = vadd.f32 %v604, %v743
      %v745 = vpop.f32.mrf.mxu0
      %v746 = vadd.f32 %v606, %v745
      %747 = vmatmul.bf16.gmra.mxu0 %v673
      %v748 = vpop.f32.mrf.mxu0
      %v749 = vadd.f32 %v609, %v748
      %v750 = vpop.f32.mrf.mxu0
      %v751 = vadd.f32 %v611, %v750
      %752 = vmatmul.bf16.gmra.mxu0 %v676
      %v753 = vpop.f32.mrf.mxu0
      %v754 = vadd.f32 %v614, %v753
      %v755 = vpop.f32.mrf.mxu0
      %v756 = vadd.f32 %v616, %v755
      %757 = vmatmul.bf16.gmra.mxu0 %v679
      %v758 = vpop.f32.mrf.mxu0
      %v759 = vadd.f32 %v619, %v758
      %v760 = vpop.f32.mrf.mxu0
      %v761 = vadd.f32 %v621, %v760
      %762 = vmatmul.bf16.gmra.mxu0 %v682
      %v763 = vpop.f32.mrf.mxu0
      %v764 = vadd.f32 %v624, %v763
      %v765 = vpop.f32.mrf.mxu0
      %v766 = vadd.f32 %v626, %v765
      %767 = vmatmul.bf16.gmra.mxu0 %v685
      %v768 = vpop.f32.mrf.mxu0
      %v769 = vadd.f32 %v629, %v768
      %v770 = vpop.f32.mrf.mxu0
      %v771 = vadd.f32 %v631, %v770
      %772 = vmatmul.bf16.gmra.mxu0 %v688
      %v773 = vpop.f32.mrf.mxu0
      %v774 = vadd.f32 %v634, %v773
      %v775 = vpop.f32.mrf.mxu0
      %v776 = vadd.f32 %v636, %v775
      %777 = vmatmul.bf16.gmra.mxu0 %v691
      %v778 = vpop.f32.mrf.mxu0
      %v779 = vadd.f32 %v639, %v778
      %v780 = vpop.f32.mrf.mxu0
      %v781 = vadd.f32 %v641, %v780
      %782 = vmatmul.bf16.gmra.mxu0 %v694
      %v783 = vpop.f32.mrf.mxu0
      %v784 = vadd.f32 %v644, %v783
      %v785 = vpop.f32.mrf.mxu0
      %v786 = vadd.f32 %v646, %v785
      %787 = vdwg.mxu0
      %vm788 = vcmask 1045504
      %v789 = vrot.slane %v253, 2
      %v790 = vrot.slane %v254, 2
      %v791 = vsel %vm788, %v789, %v790
      %v792 = vrot.slane %v255, 2
      %v793 = vsel %vm788, %v790, %v792
      %v794 = vrot.slane %v256, 2
      %v795 = vrot.slane %v257, 2
      %v796 = vsel %vm788, %v794, %v795
      %v797 = vrot.slane %v258, 2
      %v798 = vsel %vm788, %v795, %v797
      %v799 = vrot.slane %v259, 2
      %v800 = vrot.slane %v260, 2
      %v801 = vsel %vm788, %v799, %v800
      %v802 = vrot.slane %v261, 2
      %v803 = vsel %vm788, %v800, %v802
      %v804 = vrot.slane %v262, 2
      %v805 = vrot.slane %v263, 2
      %v806 = vsel %vm788, %v804, %v805
      %v807 = vrot.slane %v264, 2
      %v808 = vsel %vm788, %v805, %v807
      %v809 = vrot.slane %v265, 2
      %v810 = vrot.slane %v266, 2
      %v811 = vsel %vm788, %v809, %v810
      %v812 = vrot.slane %v267, 2
      %v813 = vsel %vm788, %v810, %v812
      %v814 = vrot.slane %v268, 2
      %v815 = vrot.slane %v269, 2
      %v816 = vsel %vm788, %v814, %v815
      %v817 = vrot.slane %v270, 2
      %v818 = vsel %vm788, %v815, %v817
      %v819 = vrot.slane %v271, 2
      %v820 = vrot.slane %v272, 2
      %v821 = vsel %vm788, %v819, %v820
      %v822 = vrot.slane %v273, 2
      %v823 = vsel %vm788, %v820, %v822
      %v824 = vrot.slane %v274, 2
      %v825 = vrot.slane %v275, 2
      %v826 = vsel %vm788, %v824, %v825
      %v827 = vrot.slane %v276, 2
      %v828 = vsel %vm788, %v825, %v827
      %v829 = vrot.slane %v277, 2
      %v830 = vrot.slane %v278, 2
      %v831 = vsel %vm788, %v829, %v830
      %v832 = vrot.slane %v279, 2
      %v833 = vsel %vm788, %v830, %v832
      %v834 = vrot.slane %v280, 2
      %v835 = vrot.slane %v281, 2
      %v836 = vsel %vm788, %v834, %v835
      %v837 = vrot.slane %v282, 2
      %v838 = vsel %vm788, %v835, %v837
      %v839 = vrot.slane %v283, 2
      %v840 = vrot.slane %v284, 2
      %v841 = vsel %vm788, %v839, %v840
      %v842 = vrot.slane %v285, 2
      %v843 = vsel %vm788, %v840, %v842
      %v844 = vrot.slane %v286, 2
      %v845 = vrot.slane %v287, 2
      %v846 = vsel %vm788, %v844, %v845
      %v847 = vrot.slane %v288, 2
      %v848 = vsel %vm788, %v845, %v847
      %v849 = vrot.slane %v289, 2
      %v850 = vrot.slane %v290, 2
      %v851 = vsel %vm788, %v849, %v850
      %v852 = vrot.slane %v291, 2
      %v853 = vsel %vm788, %v850, %v852
      %v854 = vrot.slane %v292, 2
      %v855 = vrot.slane %v293, 2
      %v856 = vsel %vm788, %v854, %v855
      %v857 = vrot.slane %v294, 2
      %v858 = vsel %vm788, %v855, %v857
      %v859 = vrot.slane %v295, 2
      %v860 = vrot.slane %v296, 2
      %v861 = vsel %vm788, %v859, %v860
      %v862 = vrot.slane %v297, 2
      %v863 = vsel %vm788, %v860, %v862
      %v864 = vrot.slane %v298, 2
      %v865 = vrot.slane %v299, 2
      %v866 = vsel %vm788, %v864, %v865
      %v867 = vrot.slane %v300, 2
      %v868 = vsel %vm788, %v865, %v867
      %v901 = vpack.c.bf16 %v793, %v791
      %v902 = vpack.c.bf16 %v798, %v796
      %v903 = vpack.c.bf16 %v803, %v801
      %v904 = vpack.c.bf16 %v808, %v806
      %v905 = vpack.c.bf16 %v813, %v811
      %v906 = vpack.c.bf16 %v818, %v816
      %v907 = vpack.c.bf16 %v823, %v821
      %v908 = vpack.c.bf16 %v828, %v826
      %v909 = vpack.c.bf16 %v833, %v831
      %v910 = vpack.c.bf16 %v838, %v836
      %v911 = vpack.c.bf16 %v843, %v841
      %v912 = vpack.c.bf16 %v848, %v846
      %v913 = vpack.c.bf16 %v853, %v851
      %v914 = vpack.c.bf16 %v858, %v856
      %v915 = vpack.c.bf16 %v863, %v861
      %v916 = vpack.c.bf16 %v868, %v866
      %s917 = scalar_lea.vmem %s1, 4
      %v918 = vld [vmem:[%s917] sm:$0x3]
      %v920 = vsel %vm503, %v901, 0
      %v923 = vsel %vm503, %v902, 0
      %v926 = vsel %vm503, %v903, 0
      %v929 = vsel %vm503, %v904, 0
      %v932 = vsel %vm503, %v905, 0
      %v935 = vsel %vm503, %v906, 0
      %v938 = vsel %vm503, %v907, 0
      %v941 = vsel %vm503, %v908, 0
      %v944 = vsel %vm503, %v909, 0
      %v947 = vsel %vm503, %v910, 0
      %v950 = vsel %vm503, %v911, 0
      %v953 = vsel %vm503, %v912, 0
      %v956 = vsel %vm503, %v913, 0
      %v959 = vsel %vm503, %v914, 0
      %v962 = vsel %vm503, %v915, 0
      %v965 = vsel %vm503, %v916, 0
      %v968 = vand.u32 %v918, %v555
      %970 = vmatpush.bf16.msra.mxu0 0
      %971 = vmatpush.bf16.msra.mxu0 0
      %972 = vmatpush.bf16.msra.mxu0 0
      %973 = vmatpush.bf16.msra.mxu0 0
      %974 = vmatpush.bf16.msra.mxu0 0
      %975 = vmatpush.bf16.msra.mxu0 0
      %976 = vmatpush.bf16.msra.mxu0 0
      %977 = vmatpush.bf16.msra.mxu0 %v968
      %978 = vmatmul.bf16.gmra.mxu0 %v920
      %v979 = vpop.f32.mrf.mxu0
      %v980 = vadd.f32 0.0, %v979
      %v981 = vpop.f32.mrf.mxu0
      %v982 = vadd.f32 0.0, %v981
      %983 = vmatmul.bf16.gmra.mxu0 %v923
      %v984 = vpop.f32.mrf.mxu0
      %v985 = vadd.f32 0.0, %v984
      %v986 = vpop.f32.mrf.mxu0
      %v987 = vadd.f32 0.0, %v986
      %988 = vmatmul.bf16.gmra.mxu0 %v926
      %v989 = vpop.f32.mrf.mxu0
      %v990 = vadd.f32 0.0, %v989
      %v991 = vpop.f32.mrf.mxu0
      %v992 = vadd.f32 0.0, %v991
      %993 = vmatmul.bf16.gmra.mxu0 %v929
      %v994 = vpop.f32.mrf.mxu0
      %v995 = vadd.f32 0.0, %v994
      %v996 = vpop.f32.mrf.mxu0
      %v997 = vadd.f32 0.0, %v996
      %998 = vmatmul.bf16.gmra.mxu0 %v932
      %v999 = vpop.f32.mrf.mxu0
      %v1000 = vadd.f32 0.0, %v999
      %v1001 = vpop.f32.mrf.mxu0
      %v1002 = vadd.f32 0.0, %v1001
      %1003 = vmatmul.bf16.gmra.mxu0 %v935
      %v1004 = vpop.f32.mrf.mxu0
      %v1005 = vadd.f32 0.0, %v1004
      %v1006 = vpop.f32.mrf.mxu0
      %v1007 = vadd.f32 0.0, %v1006
      %1008 = vmatmul.bf16.gmra.mxu0 %v938
      %v1009 = vpop.f32.mrf.mxu0
      %v1010 = vadd.f32 0.0, %v1009
      %v1011 = vpop.f32.mrf.mxu0
      %v1012 = vadd.f32 0.0, %v1011
      %1013 = vmatmul.bf16.gmra.mxu0 %v941
      %v1014 = vpop.f32.mrf.mxu0
      %v1015 = vadd.f32 0.0, %v1014
      %v1016 = vpop.f32.mrf.mxu0
      %v1017 = vadd.f32 0.0, %v1016
      %1018 = vmatmul.bf16.gmra.mxu0 %v944
      %v1019 = vpop.f32.mrf.mxu0
      %v1020 = vadd.f32 0.0, %v1019
      %v1021 = vpop.f32.mrf.mxu0
      %v1022 = vadd.f32 0.0, %v1021
      %1023 = vmatmul.bf16.gmra.mxu0 %v947
      %v1024 = vpop.f32.mrf.mxu0
      %v1025 = vadd.f32 0.0, %v1024
      %v1026 = vpop.f32.mrf.mxu0
      %v1027 = vadd.f32 0.0, %v1026
      %1028 = vmatmul.bf16.gmra.mxu0 %v950
      %v1029 = vpop.f32.mrf.mxu0
      %v1030 = vadd.f32 0.0, %v1029
      %v1031 = vpop.f32.mrf.mxu0
      %v1032 = vadd.f32 0.0, %v1031
      %1033 = vmatmul.bf16.gmra.mxu0 %v953
      %v1034 = vpop.f32.mrf.mxu0
      %v1035 = vadd.f32 0.0, %v1034
      %v1036 = vpop.f32.mrf.mxu0
      %v1037 = vadd.f32 0.0, %v1036
      %1038 = vmatmul.bf16.gmra.mxu0 %v956
      %v1039 = vpop.f32.mrf.mxu0
      %v1040 = vadd.f32 0.0, %v1039
      %v1041 = vpop.f32.mrf.mxu0
      %v1042 = vadd.f32 0.0, %v1041
      %1043 = vmatmul.bf16.gmra.mxu0 %v959
      %v1044 = vpop.f32.mrf.mxu0
      %v1045 = vadd.f32 0.0, %v1044
      %v1046 = vpop.f32.mrf.mxu0
      %v1047 = vadd.f32 0.0, %v1046
      %1048 = vmatmul.bf16.gmra.mxu0 %v962
      %v1049 = vpop.f32.mrf.mxu0
      %v1050 = vadd.f32 0.0, %v1049
      %v1051 = vpop.f32.mrf.mxu0
      %v1052 = vadd.f32 0.0, %v1051
      %1053 = vmatmul.bf16.gmra.mxu0 %v965
      %v1054 = vpop.f32.mrf.mxu0
      %v1055 = vadd.f32 0.0, %v1054
      %v1056 = vpop.f32.mrf.mxu0
      %v1057 = vadd.f32 0.0, %v1056
      %1058 = vdwg.mxu0
      %v1059 = vadd.f32 %v709, %v980
      %v1060 = vadd.f32 %v711, %v982
      %v1061 = vadd.f32 %v714, %v985
      %v1062 = vadd.f32 %v716, %v987
      %v1063 = vadd.f32 %v719, %v990
      %v1064 = vadd.f32 %v721, %v992
      %v1065 = vadd.f32 %v724, %v995
      %v1066 = vadd.f32 %v726, %v997
      %v1067 = vadd.f32 %v729, %v1000
      %v1068 = vadd.f32 %v731, %v1002
      %v1069 = vadd.f32 %v734, %v1005
      %v1070 = vadd.f32 %v736, %v1007
      %v1071 = vadd.f32 %v739, %v1010
      %v1072 = vadd.f32 %v741, %v1012
      %v1073 = vadd.f32 %v744, %v1015
      %v1074 = vadd.f32 %v746, %v1017
      %v1075 = vadd.f32 %v749, %v1020
      %v1076 = vadd.f32 %v751, %v1022
      %v1077 = vadd.f32 %v754, %v1025
      %v1078 = vadd.f32 %v756, %v1027
      %v1079 = vadd.f32 %v759, %v1030
      %v1080 = vadd.f32 %v761, %v1032
      %v1081 = vadd.f32 %v764, %v1035
      %v1082 = vadd.f32 %v766, %v1037
      %v1083 = vadd.f32 %v769, %v1040
      %v1084 = vadd.f32 %v771, %v1042
      %v1085 = vadd.f32 %v774, %v1045
      %v1086 = vadd.f32 %v776, %v1047
      %v1087 = vadd.f32 %v779, %v1050
      %v1088 = vadd.f32 %v781, %v1052
      %v1089 = vadd.f32 %v784, %v1055
      %v1090 = vadd.f32 %v786, %v1057
      %v1091 = vpack.c.bf16 %v302, %v301
      %s1092 = scalar_lea.vmem %s1, 6
      %v1093 = vld [vmem:[%s1092] sm:$0x3]
      %v1095 = vsel %vm503, %v1091, 0
      %v1098 = vand.u32 %v1093, %v555
      %1100 = vmatpush.bf16.msra.mxu0 0
      %1101 = vmatpush.bf16.msra.mxu0 0
      %1102 = vmatpush.bf16.msra.mxu0 0
      %1103 = vmatpush.bf16.msra.mxu0 0
      %1104 = vmatpush.bf16.msra.mxu0 0
      %1105 = vmatpush.bf16.msra.mxu0 0
      %1106 = vmatpush.bf16.msra.mxu0 0
      %1107 = vmatpush.bf16.msra.mxu0 %v1098
      %1108 = vmatmul.bf16.gmra.mxu0 %v652
      %v1109 = vpop.f32.mrf.mxu0
      %v1110 = vadd.f32 0.0, %v1109
      %v1111 = vpop.f32.mrf.mxu0
      %v1112 = vadd.f32 0.0, %v1111
      %1113 = vmatmul.bf16.gmra.mxu0 %v655
      %v1114 = vpop.f32.mrf.mxu0
      %v1115 = vadd.f32 0.0, %v1114
      %v1116 = vpop.f32.mrf.mxu0
      %v1117 = vadd.f32 0.0, %v1116
      %1118 = vmatmul.bf16.gmra.mxu0 %v658
      %v1119 = vpop.f32.mrf.mxu0
      %v1120 = vadd.f32 0.0, %v1119
      %v1121 = vpop.f32.mrf.mxu0
      %v1122 = vadd.f32 0.0, %v1121
      %1123 = vmatmul.bf16.gmra.mxu0 %v661
      %v1124 = vpop.f32.mrf.mxu0
      %v1125 = vadd.f32 0.0, %v1124
      %v1126 = vpop.f32.mrf.mxu0
      %v1127 = vadd.f32 0.0, %v1126
      %1128 = vmatmul.bf16.gmra.mxu0 %v664
      %v1129 = vpop.f32.mrf.mxu0
      %v1130 = vadd.f32 0.0, %v1129
      %v1131 = vpop.f32.mrf.mxu0
      %v1132 = vadd.f32 0.0, %v1131
      %1133 = vmatmul.bf16.gmra.mxu0 %v667
      %v1134 = vpop.f32.mrf.mxu0
      %v1135 = vadd.f32 0.0, %v1134
      %v1136 = vpop.f32.mrf.mxu0
      %v1137 = vadd.f32 0.0, %v1136
      %1138 = vmatmul.bf16.gmra.mxu0 %v670
      %v1139 = vpop.f32.mrf.mxu0
      %v1140 = vadd.f32 0.0, %v1139
      %v1141 = vpop.f32.mrf.mxu0
      %v1142 = vadd.f32 0.0, %v1141
      %1143 = vmatmul.bf16.gmra.mxu0 %v673
      %v1144 = vpop.f32.mrf.mxu0
      %v1145 = vadd.f32 0.0, %v1144
      %v1146 = vpop.f32.mrf.mxu0
      %v1147 = vadd.f32 0.0, %v1146
      %1148 = vmatmul.bf16.gmra.mxu0 %v676
      %v1149 = vpop.f32.mrf.mxu0
      %v1150 = vadd.f32 0.0, %v1149
      %v1151 = vpop.f32.mrf.mxu0
      %v1152 = vadd.f32 0.0, %v1151
      %1153 = vmatmul.bf16.gmra.mxu0 %v679
      %v1154 = vpop.f32.mrf.mxu0
      %v1155 = vadd.f32 0.0, %v1154
      %v1156 = vpop.f32.mrf.mxu0
      %v1157 = vadd.f32 0.0, %v1156
      %1158 = vmatmul.bf16.gmra.mxu0 %v682
      %v1159 = vpop.f32.mrf.mxu0
      %v1160 = vadd.f32 0.0, %v1159
      %v1161 = vpop.f32.mrf.mxu0
      %v1162 = vadd.f32 0.0, %v1161
      %1163 = vmatmul.bf16.gmra.mxu0 %v685
      %v1164 = vpop.f32.mrf.mxu0
      %v1165 = vadd.f32 0.0, %v1164
      %v1166 = vpop.f32.mrf.mxu0
      %v1167 = vadd.f32 0.0, %v1166
      %1168 = vmatmul.bf16.gmra.mxu0 %v688
      %v1169 = vpop.f32.mrf.mxu0
      %v1170 = vadd.f32 0.0, %v1169
      %v1171 = vpop.f32.mrf.mxu0
      %v1172 = vadd.f32 0.0, %v1171
      %1173 = vmatmul.bf16.gmra.mxu0 %v691
      %v1174 = vpop.f32.mrf.mxu0
      %v1175 = vadd.f32 0.0, %v1174
      %v1176 = vpop.f32.mrf.mxu0
      %v1177 = vadd.f32 0.0, %v1176
      %1178 = vmatmul.bf16.gmra.mxu0 %v694
      %v1179 = vpop.f32.mrf.mxu0
      %v1180 = vadd.f32 0.0, %v1179
      %v1181 = vpop.f32.mrf.mxu0
      %v1182 = vadd.f32 0.0, %v1181
      %1183 = vmatmul.bf16.gmra.mxu0 %v1095
      %v1184 = vpop.f32.mrf.mxu0
      %v1185 = vadd.f32 0.0, %v1184
      %v1186 = vpop.f32.mrf.mxu0
      %v1187 = vadd.f32 0.0, %v1186
      %1188 = vdwg.mxu0
      %v1189 = vadd.f32 %v1059, %v1110
      %v1190 = vadd.f32 %v1060, %v1112
      %v1191 = vadd.f32 %v1061, %v1115
      %v1192 = vadd.f32 %v1062, %v1117
      %v1193 = vadd.f32 %v1063, %v1120
      %v1194 = vadd.f32 %v1064, %v1122
      %v1195 = vadd.f32 %v1065, %v1125
      %v1196 = vadd.f32 %v1066, %v1127
      %v1197 = vadd.f32 %v1067, %v1130
      %v1198 = vadd.f32 %v1068, %v1132
      %v1199 = vadd.f32 %v1069, %v1135
      %v1200 = vadd.f32 %v1070, %v1137
      %v1201 = vadd.f32 %v1071, %v1140
      %v1202 = vadd.f32 %v1072, %v1142
      %v1203 = vadd.f32 %v1073, %v1145
      %v1204 = vadd.f32 %v1074, %v1147
      %v1205 = vadd.f32 %v1075, %v1150
      %v1206 = vadd.f32 %v1076, %v1152
      %v1207 = vadd.f32 %v1077, %v1155
      %v1208 = vadd.f32 %v1078, %v1157
      %v1209 = vadd.f32 %v1079, %v1160
      %v1210 = vadd.f32 %v1080, %v1162
      %v1211 = vadd.f32 %v1081, %v1165
      %v1212 = vadd.f32 %v1082, %v1167
      %v1213 = vadd.f32 %v1083, %v1170
      %v1214 = vadd.f32 %v1084, %v1172
      %v1215 = vadd.f32 %v1085, %v1175
      %v1216 = vadd.f32 %v1086, %v1177
      %v1217 = vadd.f32 %v1087, %v1180
      %v1218 = vadd.f32 %v1088, %v1182
      %v1219 = vadd.f32 %v1089, %v1185
      %v1220 = vadd.f32 %v1090, %v1187
      %v1224 = vrot.slane %v301, 1
      %v1225 = vrot.slane %v302, 1
      %v1226 = vsel %vm372, %v1224, %v1225
      %v1227 = vrot.slane %v303, 1
      %v1228 = vsel %vm372, %v1225, %v1227
      %v1231 = vpack.c.bf16 %v1228, %v1226
      %s1232 = scalar_lea.vmem %s1, 8
      %v1233 = vld [vmem:[%s1232] sm:$0x3]
      %v1235 = vsel %vm503, %v1231, 0
      %v1238 = vand.u32 %v1233, %v555
      %1240 = vmatpush.bf16.msra.mxu0 0
      %1241 = vmatpush.bf16.msra.mxu0 0
      %1242 = vmatpush.bf16.msra.mxu0 0
      %1243 = vmatpush.bf16.msra.mxu0 0
      %1244 = vmatpush.bf16.msra.mxu0 0
      %1245 = vmatpush.bf16.msra.mxu0 0
      %1246 = vmatpush.bf16.msra.mxu0 0
      %1247 = vmatpush.bf16.msra.mxu0 %v1238
      %1248 = vmatmul.bf16.gmra.mxu0 %v508
      %v1249 = vpop.f32.mrf.mxu0
      %v1250 = vadd.f32 0.0, %v1249
      %v1251 = vpop.f32.mrf.mxu0
      %v1252 = vadd.f32 0.0, %v1251
      %1253 = vmatmul.bf16.gmra.mxu0 %v511
      %v1254 = vpop.f32.mrf.mxu0
      %v1255 = vadd.f32 0.0, %v1254
      %v1256 = vpop.f32.mrf.mxu0
      %v1257 = vadd.f32 0.0, %v1256
      %1258 = vmatmul.bf16.gmra.mxu0 %v514
      %v1259 = vpop.f32.mrf.mxu0
      %v1260 = vadd.f32 0.0, %v1259
      %v1261 = vpop.f32.mrf.mxu0
      %v1262 = vadd.f32 0.0, %v1261
      %1263 = vmatmul.bf16.gmra.mxu0 %v517
      %v1264 = vpop.f32.mrf.mxu0
      %v1265 = vadd.f32 0.0, %v1264
      %v1266 = vpop.f32.mrf.mxu0
      %v1267 = vadd.f32 0.0, %v1266
      %1268 = vmatmul.bf16.gmra.mxu0 %v520
      %v1269 = vpop.f32.mrf.mxu0
      %v1270 = vadd.f32 0.0, %v1269
      %v1271 = vpop.f32.mrf.mxu0
      %v1272 = vadd.f32 0.0, %v1271
      %1273 = vmatmul.bf16.gmra.mxu0 %v523
      %v1274 = vpop.f32.mrf.mxu0
      %v1275 = vadd.f32 0.0, %v1274
      %v1276 = vpop.f32.mrf.mxu0
      %v1277 = vadd.f32 0.0, %v1276
      %1278 = vmatmul.bf16.gmra.mxu0 %v526
      %v1279 = vpop.f32.mrf.mxu0
      %v1280 = vadd.f32 0.0, %v1279
      %v1281 = vpop.f32.mrf.mxu0
      %v1282 = vadd.f32 0.0, %v1281
      %1283 = vmatmul.bf16.gmra.mxu0 %v529
      %v1284 = vpop.f32.mrf.mxu0
      %v1285 = vadd.f32 0.0, %v1284
      %v1286 = vpop.f32.mrf.mxu0
      %v1287 = vadd.f32 0.0, %v1286
      %1288 = vmatmul.bf16.gmra.mxu0 %v532
      %v1289 = vpop.f32.mrf.mxu0
      %v1290 = vadd.f32 0.0, %v1289
      %v1291 = vpop.f32.mrf.mxu0
      %v1292 = vadd.f32 0.0, %v1291
      %1293 = vmatmul.bf16.gmra.mxu0 %v535
      %v1294 = vpop.f32.mrf.mxu0
      %v1295 = vadd.f32 0.0, %v1294
      %v1296 = vpop.f32.mrf.mxu0
      %v1297 = vadd.f32 0.0, %v1296
      %1298 = vmatmul.bf16.gmra.mxu0 %v538
      %v1299 = vpop.f32.mrf.mxu0
      %v1300 = vadd.f32 0.0, %v1299
      %v1301 = vpop.f32.mrf.mxu0
      %v1302 = vadd.f32 0.0, %v1301
      %1303 = vmatmul.bf16.gmra.mxu0 %v541
      %v1304 = vpop.f32.mrf.mxu0
      %v1305 = vadd.f32 0.0, %v1304
      %v1306 = vpop.f32.mrf.mxu0
      %v1307 = vadd.f32 0.0, %v1306
      %1308 = vmatmul.bf16.gmra.mxu0 %v544
      %v1309 = vpop.f32.mrf.mxu0
      %v1310 = vadd.f32 0.0, %v1309
      %v1311 = vpop.f32.mrf.mxu0
      %v1312 = vadd.f32 0.0, %v1311
      %1313 = vmatmul.bf16.gmra.mxu0 %v547
      %v1314 = vpop.f32.mrf.mxu0
      %v1315 = vadd.f32 0.0, %v1314
      %v1316 = vpop.f32.mrf.mxu0
      %v1317 = vadd.f32 0.0, %v1316
      %1318 = vmatmul.bf16.gmra.mxu0 %v550
      %v1319 = vpop.f32.mrf.mxu0
      %v1320 = vadd.f32 0.0, %v1319
      %v1321 = vpop.f32.mrf.mxu0
      %v1322 = vadd.f32 0.0, %v1321
      %1323 = vmatmul.bf16.gmra.mxu0 %v1235
      %v1324 = vpop.f32.mrf.mxu0
      %v1325 = vadd.f32 0.0, %v1324
      %v1326 = vpop.f32.mrf.mxu0
      %v1327 = vadd.f32 0.0, %v1326
      %1328 = vdwg.mxu0
      %v1329 = vadd.f32 %v1189, %v1250
      %v1330 = vadd.f32 %v1190, %v1252
      %v1331 = vadd.f32 %v1191, %v1255
      %v1332 = vadd.f32 %v1192, %v1257
      %v1333 = vadd.f32 %v1193, %v1260
      %v1334 = vadd.f32 %v1194, %v1262
      %v1335 = vadd.f32 %v1195, %v1265
      %v1336 = vadd.f32 %v1196, %v1267
      %v1337 = vadd.f32 %v1197, %v1270
      %v1338 = vadd.f32 %v1198, %v1272
      %v1339 = vadd.f32 %v1199, %v1275
      %v1340 = vadd.f32 %v1200, %v1277
      %v1341 = vadd.f32 %v1201, %v1280
      %v1342 = vadd.f32 %v1202, %v1282
      %v1343 = vadd.f32 %v1203, %v1285
      %v1344 = vadd.f32 %v1204, %v1287
      %v1345 = vadd.f32 %v1205, %v1290
      %v1346 = vadd.f32 %v1206, %v1292
      %v1347 = vadd.f32 %v1207, %v1295
      %v1348 = vadd.f32 %v1208, %v1297
      %v1349 = vadd.f32 %v1209, %v1300
      %v1350 = vadd.f32 %v1210, %v1302
      %v1351 = vadd.f32 %v1211, %v1305
      %v1352 = vadd.f32 %v1212, %v1307
      %v1353 = vadd.f32 %v1213, %v1310
      %v1354 = vadd.f32 %v1214, %v1312
      %v1355 = vadd.f32 %v1215, %v1315
      %v1356 = vadd.f32 %v1216, %v1317
      %v1357 = vadd.f32 %v1217, %v1320
      %v1358 = vadd.f32 %v1218, %v1322
      %v1359 = vadd.f32 %v1219, %v1325
      %v1360 = vadd.f32 %v1220, %v1327
      %v1361 = vrot.slane %v301, 2
      %v1362 = vrot.slane %v302, 2
      %v1363 = vsel %vm788, %v1361, %v1362
      %v1364 = vrot.slane %v303, 2
      %v1365 = vsel %vm788, %v1362, %v1364
      %v1368 = vpack.c.bf16 %v1365, %v1363
      %s1369 = scalar_lea.vmem %s1, 10
      %v1370 = vld [vmem:[%s1369] sm:$0x3]
      %v1372 = vsel %vm503, %v1368, 0
      %v1375 = vand.u32 %v1370, %v555
      %1377 = vmatpush.bf16.msra.mxu0 0
      %1378 = vmatpush.bf16.msra.mxu0 0
      %1379 = vmatpush.bf16.msra.mxu0 0
      %1380 = vmatpush.bf16.msra.mxu0 0
      %1381 = vmatpush.bf16.msra.mxu0 0
      %1382 = vmatpush.bf16.msra.mxu0 0
      %1383 = vmatpush.bf16.msra.mxu0 0
      %1384 = vmatpush.bf16.msra.mxu0 %v1375
      %1385 = vmatmul.bf16.gmra.mxu0 %v923
      %v1386 = vpop.f32.mrf.mxu0
      %v1387 = vadd.f32 0.0, %v1386
      %v1388 = vpop.f32.mrf.mxu0
      %v1389 = vadd.f32 0.0, %v1388
      %1390 = vmatmul.bf16.gmra.mxu0 %v926
      %v1391 = vpop.f32.mrf.mxu0
      %v1392 = vadd.f32 0.0, %v1391
      %v1393 = vpop.f32.mrf.mxu0
      %v1394 = vadd.f32 0.0, %v1393
      %1395 = vmatmul.bf16.gmra.mxu0 %v929
      %v1396 = vpop.f32.mrf.mxu0
      %v1397 = vadd.f32 0.0, %v1396
      %v1398 = vpop.f32.mrf.mxu0
      %v1399 = vadd.f32 0.0, %v1398
      %1400 = vmatmul.bf16.gmra.mxu0 %v932
      %v1401 = vpop.f32.mrf.mxu0
      %v1402 = vadd.f32 0.0, %v1401
      %v1403 = vpop.f32.mrf.mxu0
      %v1404 = vadd.f32 0.0, %v1403
      %1405 = vmatmul.bf16.gmra.mxu0 %v935
      %v1406 = vpop.f32.mrf.mxu0
      %v1407 = vadd.f32 0.0, %v1406
      %v1408 = vpop.f32.mrf.mxu0
      %v1409 = vadd.f32 0.0, %v1408
      %1410 = vmatmul.bf16.gmra.mxu0 %v938
      %v1411 = vpop.f32.mrf.mxu0
      %v1412 = vadd.f32 0.0, %v1411
      %v1413 = vpop.f32.mrf.mxu0
      %v1414 = vadd.f32 0.0, %v1413
      %1415 = vmatmul.bf16.gmra.mxu0 %v941
      %v1416 = vpop.f32.mrf.mxu0
      %v1417 = vadd.f32 0.0, %v1416
      %v1418 = vpop.f32.mrf.mxu0
      %v1419 = vadd.f32 0.0, %v1418
      %1420 = vmatmul.bf16.gmra.mxu0 %v944
      %v1421 = vpop.f32.mrf.mxu0
      %v1422 = vadd.f32 0.0, %v1421
      %v1423 = vpop.f32.mrf.mxu0
      %v1424 = vadd.f32 0.0, %v1423
      %1425 = vmatmul.bf16.gmra.mxu0 %v947
      %v1426 = vpop.f32.mrf.mxu0
      %v1427 = vadd.f32 0.0, %v1426
      %v1428 = vpop.f32.mrf.mxu0
      %v1429 = vadd.f32 0.0, %v1428
      %1430 = vmatmul.bf16.gmra.mxu0 %v950
      %v1431 = vpop.f32.mrf.mxu0
      %v1432 = vadd.f32 0.0, %v1431
      %v1433 = vpop.f32.mrf.mxu0
      %v1434 = vadd.f32 0.0, %v1433
      %1435 = vmatmul.bf16.gmra.mxu0 %v953
      %v1436 = vpop.f32.mrf.mxu0
      %v1437 = vadd.f32 0.0, %v1436
      %v1438 = vpop.f32.mrf.mxu0
      %v1439 = vadd.f32 0.0, %v1438
      %1440 = vmatmul.bf16.gmra.mxu0 %v956
      %v1441 = vpop.f32.mrf.mxu0
      %v1442 = vadd.f32 0.0, %v1441
      %v1443 = vpop.f32.mrf.mxu0
      %v1444 = vadd.f32 0.0, %v1443
      %1445 = vmatmul.bf16.gmra.mxu0 %v959
      %v1446 = vpop.f32.mrf.mxu0
      %v1447 = vadd.f32 0.0, %v1446
      %v1448 = vpop.f32.mrf.mxu0
      %v1449 = vadd.f32 0.0, %v1448
      %1450 = vmatmul.bf16.gmra.mxu0 %v962
      %v1451 = vpop.f32.mrf.mxu0
      %v1452 = vadd.f32 0.0, %v1451
      %v1453 = vpop.f32.mrf.mxu0
      %v1454 = vadd.f32 0.0, %v1453
      %1455 = vmatmul.bf16.gmra.mxu0 %v965
      %v1456 = vpop.f32.mrf.mxu0
      %v1457 = vadd.f32 0.0, %v1456
      %v1458 = vpop.f32.mrf.mxu0
      %v1459 = vadd.f32 0.0, %v1458
      %1460 = vmatmul.bf16.gmra.mxu0 %v1372
      %v1461 = vpop.f32.mrf.mxu0
      %v1462 = vadd.f32 0.0, %v1461
      %v1463 = vpop.f32.mrf.mxu0
      %v1464 = vadd.f32 0.0, %v1463
      %1465 = vdwg.mxu0
      %v1466 = vadd.f32 %v1329, %v1387
      %v1467 = vadd.f32 %v1330, %v1389
      %v1468 = vadd.f32 %v1331, %v1392
      %v1469 = vadd.f32 %v1332, %v1394
      %v1470 = vadd.f32 %v1333, %v1397
      %v1471 = vadd.f32 %v1334, %v1399
      %v1472 = vadd.f32 %v1335, %v1402
      %v1473 = vadd.f32 %v1336, %v1404
      %v1474 = vadd.f32 %v1337, %v1407
      %v1475 = vadd.f32 %v1338, %v1409
      %v1476 = vadd.f32 %v1339, %v1412
      %v1477 = vadd.f32 %v1340, %v1414
      %v1478 = vadd.f32 %v1341, %v1417
      %v1479 = vadd.f32 %v1342, %v1419
      %v1480 = vadd.f32 %v1343, %v1422
      %v1481 = vadd.f32 %v1344, %v1424
      %v1482 = vadd.f32 %v1345, %v1427
      %v1483 = vadd.f32 %v1346, %v1429
      %v1484 = vadd.f32 %v1347, %v1432
      %v1485 = vadd.f32 %v1348, %v1434
      %v1486 = vadd.f32 %v1349, %v1437
      %v1487 = vadd.f32 %v1350, %v1439
      %v1488 = vadd.f32 %v1351, %v1442
      %v1489 = vadd.f32 %v1352, %v1444
      %v1490 = vadd.f32 %v1353, %v1447
      %v1491 = vadd.f32 %v1354, %v1449
      %v1492 = vadd.f32 %v1355, %v1452
      %v1493 = vadd.f32 %v1356, %v1454
      %v1494 = vadd.f32 %v1357, %v1457
      %v1495 = vadd.f32 %v1358, %v1459
      %v1496 = vadd.f32 %v1359, %v1462
      %v1497 = vadd.f32 %v1360, %v1464
      %v1498 = vpack.c.bf16 %v305, %v304
      %s1499 = scalar_lea.vmem %s1, 12
      %v1500 = vld [vmem:[%s1499] sm:$0x3]
      %v1502 = vsel %vm503, %v1498, 0
      %v1505 = vand.u32 %v1500, %v555
      %1507 = vmatpush.bf16.msra.mxu0 0
      %1508 = vmatpush.bf16.msra.mxu0 0
      %1509 = vmatpush.bf16.msra.mxu0 0
      %1510 = vmatpush.bf16.msra.mxu0 0
      %1511 = vmatpush.bf16.msra.mxu0 0
      %1512 = vmatpush.bf16.msra.mxu0 0
      %1513 = vmatpush.bf16.msra.mxu0 0
      %1514 = vmatpush.bf16.msra.mxu0 %v1505
      %1515 = vmatmul.bf16.gmra.mxu0 %v655
      %v1516 = vpop.f32.mrf.mxu0
      %v1517 = vadd.f32 0.0, %v1516
      %v1518 = vpop.f32.mrf.mxu0
      %v1519 = vadd.f32 0.0, %v1518
      %1520 = vmatmul.bf16.gmra.mxu0 %v658
      %v1521 = vpop.f32.mrf.mxu0
      %v1522 = vadd.f32 0.0, %v1521
      %v1523 = vpop.f32.mrf.mxu0
      %v1524 = vadd.f32 0.0, %v1523
      %1525 = vmatmul.bf16.gmra.mxu0 %v661
      %v1526 = vpop.f32.mrf.mxu0
      %v1527 = vadd.f32 0.0, %v1526
      %v1528 = vpop.f32.mrf.mxu0
      %v1529 = vadd.f32 0.0, %v1528
      %1530 = vmatmul.bf16.gmra.mxu0 %v664
      %v1531 = vpop.f32.mrf.mxu0
      %v1532 = vadd.f32 0.0, %v1531
      %v1533 = vpop.f32.mrf.mxu0
      %v1534 = vadd.f32 0.0, %v1533
      %1535 = vmatmul.bf16.gmra.mxu0 %v667
      %v1536 = vpop.f32.mrf.mxu0
      %v1537 = vadd.f32 0.0, %v1536
      %v1538 = vpop.f32.mrf.mxu0
      %v1539 = vadd.f32 0.0, %v1538
      %1540 = vmatmul.bf16.gmra.mxu0 %v670
      %v1541 = vpop.f32.mrf.mxu0
      %v1542 = vadd.f32 0.0, %v1541
      %v1543 = vpop.f32.mrf.mxu0
      %v1544 = vadd.f32 0.0, %v1543
      %1545 = vmatmul.bf16.gmra.mxu0 %v673
      %v1546 = vpop.f32.mrf.mxu0
      %v1547 = vadd.f32 0.0, %v1546
      %v1548 = vpop.f32.mrf.mxu0
      %v1549 = vadd.f32 0.0, %v1548
      %1550 = vmatmul.bf16.gmra.mxu0 %v676
      %v1551 = vpop.f32.mrf.mxu0
      %v1552 = vadd.f32 0.0, %v1551
      %v1553 = vpop.f32.mrf.mxu0
      %v1554 = vadd.f32 0.0, %v1553
      %1555 = vmatmul.bf16.gmra.mxu0 %v679
      %v1556 = vpop.f32.mrf.mxu0
      %v1557 = vadd.f32 0.0, %v1556
      %v1558 = vpop.f32.mrf.mxu0
      %v1559 = vadd.f32 0.0, %v1558
      %1560 = vmatmul.bf16.gmra.mxu0 %v682
      %v1561 = vpop.f32.mrf.mxu0
      %v1562 = vadd.f32 0.0, %v1561
      %v1563 = vpop.f32.mrf.mxu0
      %v1564 = vadd.f32 0.0, %v1563
      %1565 = vmatmul.bf16.gmra.mxu0 %v685
      %v1566 = vpop.f32.mrf.mxu0
      %v1567 = vadd.f32 0.0, %v1566
      %v1568 = vpop.f32.mrf.mxu0
      %v1569 = vadd.f32 0.0, %v1568
      %1570 = vmatmul.bf16.gmra.mxu0 %v688
      %v1571 = vpop.f32.mrf.mxu0
      %v1572 = vadd.f32 0.0, %v1571
      %v1573 = vpop.f32.mrf.mxu0
      %v1574 = vadd.f32 0.0, %v1573
      %1575 = vmatmul.bf16.gmra.mxu0 %v691
      %v1576 = vpop.f32.mrf.mxu0
      %v1577 = vadd.f32 0.0, %v1576
      %v1578 = vpop.f32.mrf.mxu0
      %v1579 = vadd.f32 0.0, %v1578
      %1580 = vmatmul.bf16.gmra.mxu0 %v694
      %v1581 = vpop.f32.mrf.mxu0
      %v1582 = vadd.f32 0.0, %v1581
      %v1583 = vpop.f32.mrf.mxu0
      %v1584 = vadd.f32 0.0, %v1583
      %1585 = vmatmul.bf16.gmra.mxu0 %v1095
      %v1586 = vpop.f32.mrf.mxu0
      %v1587 = vadd.f32 0.0, %v1586
      %v1588 = vpop.f32.mrf.mxu0
      %v1589 = vadd.f32 0.0, %v1588
      %1590 = vmatmul.bf16.gmra.mxu0 %v1502
      %v1591 = vpop.f32.mrf.mxu0
      %v1592 = vadd.f32 0.0, %v1591
      %v1593 = vpop.f32.mrf.mxu0
      %v1594 = vadd.f32 0.0, %v1593
      %1595 = vdwg.mxu0
      %v1596 = vadd.f32 %v1466, %v1517
      %v1597 = vadd.f32 %v1467, %v1519
      %v1598 = vadd.f32 %v1468, %v1522
      %v1599 = vadd.f32 %v1469, %v1524
      %v1600 = vadd.f32 %v1470, %v1527
      %v1601 = vadd.f32 %v1471, %v1529
      %v1602 = vadd.f32 %v1472, %v1532
      %v1603 = vadd.f32 %v1473, %v1534
      %v1604 = vadd.f32 %v1474, %v1537
      %v1605 = vadd.f32 %v1475, %v1539
      %v1606 = vadd.f32 %v1476, %v1542
      %v1607 = vadd.f32 %v1477, %v1544
      %v1608 = vadd.f32 %v1478, %v1547
      %v1609 = vadd.f32 %v1479, %v1549
      %v1610 = vadd.f32 %v1480, %v1552
      %v1611 = vadd.f32 %v1481, %v1554
      %v1612 = vadd.f32 %v1482, %v1557
      %v1613 = vadd.f32 %v1483, %v1559
      %v1614 = vadd.f32 %v1484, %v1562
      %v1615 = vadd.f32 %v1485, %v1564
      %v1616 = vadd.f32 %v1486, %v1567
      %v1617 = vadd.f32 %v1487, %v1569
      %v1618 = vadd.f32 %v1488, %v1572
      %v1619 = vadd.f32 %v1489, %v1574
      %v1620 = vadd.f32 %v1490, %v1577
      %v1621 = vadd.f32 %v1491, %v1579
      %v1622 = vadd.f32 %v1492, %v1582
      %v1623 = vadd.f32 %v1493, %v1584
      %v1624 = vadd.f32 %v1494, %v1587
      %v1625 = vadd.f32 %v1495, %v1589
      %v1626 = vadd.f32 %v1496, %v1592
      %v1627 = vadd.f32 %v1497, %v1594
      %v1631 = vrot.slane %v304, 1
      %v1632 = vrot.slane %v305, 1
      %v1633 = vsel %vm372, %v1631, %v1632
      %v1634 = vrot.slane %v306, 1
      %v1635 = vsel %vm372, %v1632, %v1634
      %v1638 = vpack.c.bf16 %v1635, %v1633
      %s1639 = scalar_lea.vmem %s1, 14
      %v1640 = vld [vmem:[%s1639] sm:$0x3]
      %v1642 = vsel %vm503, %v1638, 0
      %v1645 = vand.u32 %v1640, %v555
      %1647 = vmatpush.bf16.msra.mxu0 0
      %1648 = vmatpush.bf16.msra.mxu0 0
      %1649 = vmatpush.bf16.msra.mxu0 0
      %1650 = vmatpush.bf16.msra.mxu0 0
      %1651 = vmatpush.bf16.msra.mxu0 0
      %1652 = vmatpush.bf16.msra.mxu0 0
      %1653 = vmatpush.bf16.msra.mxu0 0
      %1654 = vmatpush.bf16.msra.mxu0 %v1645
      %1655 = vmatmul.bf16.gmra.mxu0 %v511
      %v1656 = vpop.f32.mrf.mxu0
      %v1657 = vadd.f32 0.0, %v1656
      %v1658 = vpop.f32.mrf.mxu0
      %v1659 = vadd.f32 0.0, %v1658
      %1660 = vmatmul.bf16.gmra.mxu0 %v514
      %v1661 = vpop.f32.mrf.mxu0
      %v1662 = vadd.f32 0.0, %v1661
      %v1663 = vpop.f32.mrf.mxu0
      %v1664 = vadd.f32 0.0, %v1663
      %1665 = vmatmul.bf16.gmra.mxu0 %v517
      %v1666 = vpop.f32.mrf.mxu0
      %v1667 = vadd.f32 0.0, %v1666
      %v1668 = vpop.f32.mrf.mxu0
      %v1669 = vadd.f32 0.0, %v1668
      %1670 = vmatmul.bf16.gmra.mxu0 %v520
      %v1671 = vpop.f32.mrf.mxu0
      %v1672 = vadd.f32 0.0, %v1671
      %v1673 = vpop.f32.mrf.mxu0
      %v1674 = vadd.f32 0.0, %v1673
      %1675 = vmatmul.bf16.gmra.mxu0 %v523
      %v1676 = vpop.f32.mrf.mxu0
      %v1677 = vadd.f32 0.0, %v1676
      %v1678 = vpop.f32.mrf.mxu0
      %v1679 = vadd.f32 0.0, %v1678
      %1680 = vmatmul.bf16.gmra.mxu0 %v526
      %v1681 = vpop.f32.mrf.mxu0
      %v1682 = vadd.f32 0.0, %v1681
      %v1683 = vpop.f32.mrf.mxu0
      %v1684 = vadd.f32 0.0, %v1683
      %1685 = vmatmul.bf16.gmra.mxu0 %v529
      %v1686 = vpop.f32.mrf.mxu0
      %v1687 = vadd.f32 0.0, %v1686
      %v1688 = vpop.f32.mrf.mxu0
      %v1689 = vadd.f32 0.0, %v1688
      %1690 = vmatmul.bf16.gmra.mxu0 %v532
      %v1691 = vpop.f32.mrf.mxu0
      %v1692 = vadd.f32 0.0, %v1691
      %v1693 = vpop.f32.mrf.mxu0
      %v1694 = vadd.f32 0.0, %v1693
      %1695 = vmatmul.bf16.gmra.mxu0 %v535
      %v1696 = vpop.f32.mrf.mxu0
      %v1697 = vadd.f32 0.0, %v1696
      %v1698 = vpop.f32.mrf.mxu0
      %v1699 = vadd.f32 0.0, %v1698
      %1700 = vmatmul.bf16.gmra.mxu0 %v538
      %v1701 = vpop.f32.mrf.mxu0
      %v1702 = vadd.f32 0.0, %v1701
      %v1703 = vpop.f32.mrf.mxu0
      %v1704 = vadd.f32 0.0, %v1703
      %1705 = vmatmul.bf16.gmra.mxu0 %v541
      %v1706 = vpop.f32.mrf.mxu0
      %v1707 = vadd.f32 0.0, %v1706
      %v1708 = vpop.f32.mrf.mxu0
      %v1709 = vadd.f32 0.0, %v1708
      %1710 = vmatmul.bf16.gmra.mxu0 %v544
      %v1711 = vpop.f32.mrf.mxu0
      %v1712 = vadd.f32 0.0, %v1711
      %v1713 = vpop.f32.mrf.mxu0
      %v1714 = vadd.f32 0.0, %v1713
      %1715 = vmatmul.bf16.gmra.mxu0 %v547
      %v1716 = vpop.f32.mrf.mxu0
      %v1717 = vadd.f32 0.0, %v1716
      %v1718 = vpop.f32.mrf.mxu0
      %v1719 = vadd.f32 0.0, %v1718
      %1720 = vmatmul.bf16.gmra.mxu0 %v550
      %v1721 = vpop.f32.mrf.mxu0
      %v1722 = vadd.f32 0.0, %v1721
      %v1723 = vpop.f32.mrf.mxu0
      %v1724 = vadd.f32 0.0, %v1723
      %1725 = vmatmul.bf16.gmra.mxu0 %v1235
      %v1726 = vpop.f32.mrf.mxu0
      %v1727 = vadd.f32 0.0, %v1726
      %v1728 = vpop.f32.mrf.mxu0
      %v1729 = vadd.f32 0.0, %v1728
      %1730 = vmatmul.bf16.gmra.mxu0 %v1642
      %v1731 = vpop.f32.mrf.mxu0
      %v1732 = vadd.f32 0.0, %v1731
      %v1733 = vpop.f32.mrf.mxu0
      %v1734 = vadd.f32 0.0, %v1733
      %1735 = vdwg.mxu0
      %v1736 = vadd.f32 %v1596, %v1657
      %v1737 = vadd.f32 %v1597, %v1659
      %v1738 = vadd.f32 %v1598, %v1662
      %v1739 = vadd.f32 %v1599, %v1664
      %v1740 = vadd.f32 %v1600, %v1667
      %v1741 = vadd.f32 %v1601, %v1669
      %v1742 = vadd.f32 %v1602, %v1672
      %v1743 = vadd.f32 %v1603, %v1674
      %v1744 = vadd.f32 %v1604, %v1677
      %v1745 = vadd.f32 %v1605, %v1679
      %v1746 = vadd.f32 %v1606, %v1682
      %v1747 = vadd.f32 %v1607, %v1684
      %v1748 = vadd.f32 %v1608, %v1687
      %v1749 = vadd.f32 %v1609, %v1689
      %v1750 = vadd.f32 %v1610, %v1692
      %v1751 = vadd.f32 %v1611, %v1694
      %v1752 = vadd.f32 %v1612, %v1697
      %v1753 = vadd.f32 %v1613, %v1699
      %v1754 = vadd.f32 %v1614, %v1702
      %v1755 = vadd.f32 %v1615, %v1704
      %v1756 = vadd.f32 %v1616, %v1707
      %v1757 = vadd.f32 %v1617, %v1709
      %v1758 = vadd.f32 %v1618, %v1712
      %v1759 = vadd.f32 %v1619, %v1714
      %v1760 = vadd.f32 %v1620, %v1717
      %v1761 = vadd.f32 %v1621, %v1719
      %v1762 = vadd.f32 %v1622, %v1722
      %v1763 = vadd.f32 %v1623, %v1724
      %v1764 = vadd.f32 %v1624, %v1727
      %v1765 = vadd.f32 %v1625, %v1729
      %v1766 = vadd.f32 %v1626, %v1732
      %v1767 = vadd.f32 %v1627, %v1734
      %v1768 = vrot.slane %v304, 2
      %v1769 = vrot.slane %v305, 2
      %v1770 = vsel %vm788, %v1768, %v1769
      %v1771 = vrot.slane %v306, 2
      %v1772 = vsel %vm788, %v1769, %v1771
      %v1775 = vpack.c.bf16 %v1772, %v1770
      %s1776 = scalar_lea.vmem %s1, 16
      %v1777 = vld [vmem:[%s1776] sm:$0x3]
      %v1779 = vsel %vm503, %v1775, 0
      %v1782 = vand.u32 %v1777, %v555
      %1784 = vmatpush.bf16.msra.mxu0 0
      %1785 = vmatpush.bf16.msra.mxu0 0
      %1786 = vmatpush.bf16.msra.mxu0 0
      %1787 = vmatpush.bf16.msra.mxu0 0
      %1788 = vmatpush.bf16.msra.mxu0 0
      %1789 = vmatpush.bf16.msra.mxu0 0
      %1790 = vmatpush.bf16.msra.mxu0 0
      %1791 = vmatpush.bf16.msra.mxu0 %v1782
      %1792 = vmatmul.bf16.gmra.mxu0 %v926
      %v1793 = vpop.f32.mrf.mxu0
      %v1794 = vadd.f32 0.0, %v1793
      %v1795 = vpop.f32.mrf.mxu0
      %v1796 = vadd.f32 0.0, %v1795
      %1797 = vmatmul.bf16.gmra.mxu0 %v929
      %v1798 = vpop.f32.mrf.mxu0
      %v1799 = vadd.f32 0.0, %v1798
      %v1800 = vpop.f32.mrf.mxu0
      %v1801 = vadd.f32 0.0, %v1800
      %1802 = vmatmul.bf16.gmra.mxu0 %v932
      %v1803 = vpop.f32.mrf.mxu0
      %v1804 = vadd.f32 0.0, %v1803
      %v1805 = vpop.f32.mrf.mxu0
      %v1806 = vadd.f32 0.0, %v1805
      %1807 = vmatmul.bf16.gmra.mxu0 %v935
      %v1808 = vpop.f32.mrf.mxu0
      %v1809 = vadd.f32 0.0, %v1808
      %v1810 = vpop.f32.mrf.mxu0
      %v1811 = vadd.f32 0.0, %v1810
      %1812 = vmatmul.bf16.gmra.mxu0 %v938
      %v1813 = vpop.f32.mrf.mxu0
      %v1814 = vadd.f32 0.0, %v1813
      %v1815 = vpop.f32.mrf.mxu0
      %v1816 = vadd.f32 0.0, %v1815
      %1817 = vmatmul.bf16.gmra.mxu0 %v941
      %v1818 = vpop.f32.mrf.mxu0
      %v1819 = vadd.f32 0.0, %v1818
      %v1820 = vpop.f32.mrf.mxu0
      %v1821 = vadd.f32 0.0, %v1820
      %1822 = vmatmul.bf16.gmra.mxu0 %v944
      %v1823 = vpop.f32.mrf.mxu0
      %v1824 = vadd.f32 0.0, %v1823
      %v1825 = vpop.f32.mrf.mxu0
      %v1826 = vadd.f32 0.0, %v1825
      %1827 = vmatmul.bf16.gmra.mxu0 %v947
      %v1828 = vpop.f32.mrf.mxu0
      %v1829 = vadd.f32 0.0, %v1828
      %v1830 = vpop.f32.mrf.mxu0
      %v1831 = vadd.f32 0.0, %v1830
      %1832 = vmatmul.bf16.gmra.mxu0 %v950
      %v1833 = vpop.f32.mrf.mxu0
      %v1834 = vadd.f32 0.0, %v1833
      %v1835 = vpop.f32.mrf.mxu0
      %v1836 = vadd.f32 0.0, %v1835
      %1837 = vmatmul.bf16.gmra.mxu0 %v953
      %v1838 = vpop.f32.mrf.mxu0
      %v1839 = vadd.f32 0.0, %v1838
      %v1840 = vpop.f32.mrf.mxu0
      %v1841 = vadd.f32 0.0, %v1840
      %1842 = vmatmul.bf16.gmra.mxu0 %v956
      %v1843 = vpop.f32.mrf.mxu0
      %v1844 = vadd.f32 0.0, %v1843
      %v1845 = vpop.f32.mrf.mxu0
      %v1846 = vadd.f32 0.0, %v1845
      %1847 = vmatmul.bf16.gmra.mxu0 %v959
      %v1848 = vpop.f32.mrf.mxu0
      %v1849 = vadd.f32 0.0, %v1848
      %v1850 = vpop.f32.mrf.mxu0
      %v1851 = vadd.f32 0.0, %v1850
      %1852 = vmatmul.bf16.gmra.mxu0 %v962
      %v1853 = vpop.f32.mrf.mxu0
      %v1854 = vadd.f32 0.0, %v1853
      %v1855 = vpop.f32.mrf.mxu0
      %v1856 = vadd.f32 0.0, %v1855
      %1857 = vmatmul.bf16.gmra.mxu0 %v965
      %v1858 = vpop.f32.mrf.mxu0
      %v1859 = vadd.f32 0.0, %v1858
      %v1860 = vpop.f32.mrf.mxu0
      %v1861 = vadd.f32 0.0, %v1860
      %1862 = vmatmul.bf16.gmra.mxu0 %v1372
      %v1863 = vpop.f32.mrf.mxu0
      %v1864 = vadd.f32 0.0, %v1863
      %v1865 = vpop.f32.mrf.mxu0
      %v1866 = vadd.f32 0.0, %v1865
      %1867 = vmatmul.bf16.gmra.mxu0 %v1779
      %v1868 = vpop.f32.mrf.mxu0
      %v1869 = vadd.f32 0.0, %v1868
      %v1870 = vpop.f32.mrf.mxu0
      %v1871 = vadd.f32 0.0, %v1870
      %1872 = vdwg.mxu0
      %v1873 = vadd.f32 %v1736, %v1794
      %v1874 = vadd.f32 %v1737, %v1796
      %v1875 = vadd.f32 %v1738, %v1799
      %v1876 = vadd.f32 %v1739, %v1801
      %v1877 = vadd.f32 %v1740, %v1804
      %v1878 = vadd.f32 %v1741, %v1806
      %v1879 = vadd.f32 %v1742, %v1809
      %v1880 = vadd.f32 %v1743, %v1811
      %v1881 = vadd.f32 %v1744, %v1814
      %v1882 = vadd.f32 %v1745, %v1816
      %v1883 = vadd.f32 %v1746, %v1819
      %v1884 = vadd.f32 %v1747, %v1821
      %v1885 = vadd.f32 %v1748, %v1824
      %v1886 = vadd.f32 %v1749, %v1826
      %v1887 = vadd.f32 %v1750, %v1829
      %v1888 = vadd.f32 %v1751, %v1831
      %v1889 = vadd.f32 %v1752, %v1834
      %v1890 = vadd.f32 %v1753, %v1836
      %v1891 = vadd.f32 %v1754, %v1839
      %v1892 = vadd.f32 %v1755, %v1841
      %v1893 = vadd.f32 %v1756, %v1844
      %v1894 = vadd.f32 %v1757, %v1846
      %v1895 = vadd.f32 %v1758, %v1849
      %v1896 = vadd.f32 %v1759, %v1851
      %v1897 = vadd.f32 %v1760, %v1854
      %v1898 = vadd.f32 %v1761, %v1856
      %v1899 = vadd.f32 %v1762, %v1859
      %v1900 = vadd.f32 %v1763, %v1861
      %v1901 = vadd.f32 %v1764, %v1864
      %v1902 = vadd.f32 %v1765, %v1866
      %v1903 = vadd.f32 %v1766, %v1869
      %v1904 = vadd.f32 %v1767, %v1871
      %v1905 = vld [vmem:[%s2] sm:$0x1]
      %v1907 = vperm.slane %v1905, 0
      %v1909 = vmul.f32 %v1873, %v1907
      %v1910 = vmul.f32 %v1874, %v1907
      %v1911 = vmul.f32 %v1875, %v1907
      %v1912 = vmul.f32 %v1876, %v1907
      %v1913 = vmul.f32 %v1877, %v1907
      %v1914 = vmul.f32 %v1878, %v1907
      %v1915 = vmul.f32 %v1879, %v1907
      %v1916 = vmul.f32 %v1880, %v1907
      %v1917 = vmul.f32 %v1881, %v1907
      %v1918 = vmul.f32 %v1882, %v1907
      %v1919 = vmul.f32 %v1883, %v1907
      %v1920 = vmul.f32 %v1884, %v1907
      %v1921 = vmul.f32 %v1885, %v1907
      %v1922 = vmul.f32 %v1886, %v1907
      %v1923 = vmul.f32 %v1887, %v1907
      %v1924 = vmul.f32 %v1888, %v1907
      %v1925 = vmul.f32 %v1889, %v1907
      %v1926 = vmul.f32 %v1890, %v1907
      %v1927 = vmul.f32 %v1891, %v1907
      %v1928 = vmul.f32 %v1892, %v1907
      %v1929 = vmul.f32 %v1893, %v1907
      %v1930 = vmul.f32 %v1894, %v1907
      %v1931 = vmul.f32 %v1895, %v1907
      %v1932 = vmul.f32 %v1896, %v1907
      %v1933 = vmul.f32 %v1897, %v1907
      %v1934 = vmul.f32 %v1898, %v1907
      %v1935 = vmul.f32 %v1899, %v1907
      %v1936 = vmul.f32 %v1900, %v1907
      %v1937 = vmul.f32 %v1901, %v1907
      %v1938 = vmul.f32 %v1902, %v1907
      %v1939 = vmul.f32 %v1903, %v1907
      %v1940 = vmul.f32 %v1904, %v1907
      %v1941 = vld [vmem:[%s3] sm:$0x1]
      %v1943 = vperm.slane %v1941, 0
      %v1945 = vadd.f32 %v1909, %v1943
      %v1946 = vadd.f32 %v1910, %v1943
      %v1947 = vadd.f32 %v1911, %v1943
      %v1948 = vadd.f32 %v1912, %v1943
      %v1949 = vadd.f32 %v1913, %v1943
      %v1950 = vadd.f32 %v1914, %v1943
      %v1951 = vadd.f32 %v1915, %v1943
      %v1952 = vadd.f32 %v1916, %v1943
      %v1953 = vadd.f32 %v1917, %v1943
      %v1954 = vadd.f32 %v1918, %v1943
      %v1955 = vadd.f32 %v1919, %v1943
      %v1956 = vadd.f32 %v1920, %v1943
      %v1957 = vadd.f32 %v1921, %v1943
      %v1958 = vadd.f32 %v1922, %v1943
      %v1959 = vadd.f32 %v1923, %v1943
      %v1960 = vadd.f32 %v1924, %v1943
      %v1961 = vadd.f32 %v1925, %v1943
      %v1962 = vadd.f32 %v1926, %v1943
      %v1963 = vadd.f32 %v1927, %v1943
      %v1964 = vadd.f32 %v1928, %v1943
      %v1965 = vadd.f32 %v1929, %v1943
      %v1966 = vadd.f32 %v1930, %v1943
      %v1967 = vadd.f32 %v1931, %v1943
      %v1968 = vadd.f32 %v1932, %v1943
      %v1969 = vadd.f32 %v1933, %v1943
      %v1970 = vadd.f32 %v1934, %v1943
      %v1971 = vadd.f32 %v1935, %v1943
      %v1972 = vadd.f32 %v1936, %v1943
      %v1973 = vadd.f32 %v1937, %v1943
      %v1974 = vadd.f32 %v1938, %v1943
      %v1975 = vadd.f32 %v1939, %v1943
      %v1976 = vadd.f32 %v1940, %v1943
      %v1977 = vmax.f32 %v1945, 0.0
      %v1978 = vmax.f32 %v1946, 0.0
      %v1979 = vmax.f32 %v1947, 0.0
      %v1980 = vmax.f32 %v1948, 0.0
      %v1981 = vmax.f32 %v1949, 0.0
      %v1982 = vmax.f32 %v1950, 0.0
      %v1983 = vmax.f32 %v1951, 0.0
      %v1984 = vmax.f32 %v1952, 0.0
      %v1985 = vmax.f32 %v1953, 0.0
      %v1986 = vmax.f32 %v1954, 0.0
      %v1987 = vmax.f32 %v1955, 0.0
      %v1988 = vmax.f32 %v1956, 0.0
      %v1989 = vmax.f32 %v1957, 0.0
      %v1990 = vmax.f32 %v1958, 0.0
      %v1991 = vmax.f32 %v1959, 0.0
      %v1992 = vmax.f32 %v1960, 0.0
      %v1993 = vmax.f32 %v1961, 0.0
      %v1994 = vmax.f32 %v1962, 0.0
      %v1995 = vmax.f32 %v1963, 0.0
      %v1996 = vmax.f32 %v1964, 0.0
      %v1997 = vmax.f32 %v1965, 0.0
      %v1998 = vmax.f32 %v1966, 0.0
      %v1999 = vmax.f32 %v1967, 0.0
      %v2000 = vmax.f32 %v1968, 0.0
      %v2001 = vmax.f32 %v1969, 0.0
      %v2002 = vmax.f32 %v1970, 0.0
      %v2003 = vmax.f32 %v1971, 0.0
      %v2004 = vmax.f32 %v1972, 0.0
      %v2005 = vmax.f32 %v1973, 0.0
      %v2006 = vmax.f32 %v1974, 0.0
      %v2007 = vmax.f32 %v1975, 0.0
      %v2008 = vmax.f32 %v1976, 0.0
      %v2009 = vpack.c.bf16 %v1977, %v1977
      %v2010 = vpack.c.bf16 %v1978, %v1978
      %v2011 = vpack.c.bf16 %v1979, %v1979
      %v2012 = vpack.c.bf16 %v1980, %v1980
      %v2013 = vpack.c.bf16 %v1981, %v1981
      %v2014 = vpack.c.bf16 %v1982, %v1982
      %v2015 = vpack.c.bf16 %v1983, %v1983
      %v2016 = vpack.c.bf16 %v1984, %v1984
      %v2017 = vpack.c.bf16 %v1985, %v1985
      %v2018 = vpack.c.bf16 %v1986, %v1986
      %v2019 = vpack.c.bf16 %v1987, %v1987
      %v2020 = vpack.c.bf16 %v1988, %v1988
      %v2021 = vpack.c.bf16 %v1989, %v1989
      %v2022 = vpack.c.bf16 %v1990, %v1990
      %v2023 = vpack.c.bf16 %v1991, %v1991
      %v2024 = vpack.c.bf16 %v1992, %v1992
      %v2025 = vpack.c.bf16 %v1993, %v1993
      %v2026 = vpack.c.bf16 %v1994, %v1994
      %v2027 = vpack.c.bf16 %v1995, %v1995
      %v2028 = vpack.c.bf16 %v1996, %v1996
      %v2029 = vpack.c.bf16 %v1997, %v1997
      %v2030 = vpack.c.bf16 %v1998, %v1998
      %v2031 = vpack.c.bf16 %v1999, %v1999
      %v2032 = vpack.c.bf16 %v2000, %v2000
      %v2033 = vpack.c.bf16 %v2001, %v2001
      %v2034 = vpack.c.bf16 %v2002, %v2002
      %v2035 = vpack.c.bf16 %v2003, %v2003
      %v2036 = vpack.c.bf16 %v2004, %v2004
      %v2037 = vpack.c.bf16 %v2005, %v2005
      %v2038 = vpack.c.bf16 %v2006, %v2006
      %v2039 = vpack.c.bf16 %v2007, %v2007
      %v2040 = vpack.c.bf16 %v2008, %v2008
      %vm2041 = vcmask 257024
      %2042 = vst.msk [vmem:[%s197] sm:$0xf] %vm2041, %v2009
      %2043 = vst.msk [vmem:[%s197 + $0x4] sm:$0xf] %vm2041, %v2010
      %2044 = vst.msk [vmem:[%s197 + $0x8] sm:$0xf] %vm2041, %v2011
      %2045 = vst.msk [vmem:[%s197 + $0xc] sm:$0xf] %vm2041, %v2012
      %2046 = vst.msk [vmem:[%s197 + $0x10] sm:$0xf] %vm2041, %v2013
      %2047 = vst.msk [vmem:[%s197 + $0x14] sm:$0xf] %vm2041, %v2014
      %2048 = vst.msk [vmem:[%s197 + $0x18] sm:$0xf] %vm2041, %v2015
      %2049 = vst.msk [vmem:[%s197 + $0x1c] sm:$0xf] %vm2041, %v2016
      %2050 = vst.msk [vmem:[%s197 + $0x20] sm:$0xf] %vm2041, %v2017
      %2051 = vst.msk [vmem:[%s197 + $0x24] sm:$0xf] %vm2041, %v2018
      %2052 = vst.msk [vmem:[%s197 + $0x28] sm:$0xf] %vm2041, %v2019
      %2053 = vst.msk [vmem:[%s197 + $0x2c] sm:$0xf] %vm2041, %v2020
      %2054 = vst.msk [vmem:[%s197 + $0x30] sm:$0xf] %vm2041, %v2021
      %2055 = vst.msk [vmem:[%s197 + $0x34] sm:$0xf] %vm2041, %v2022
      %2056 = vst.msk [vmem:[%s197 + $0x38] sm:$0xf] %vm2041, %v2023
      %2057 = vst.msk [vmem:[%s197 + $0x3c] sm:$0xf] %vm2041, %v2024
      %2058 = vst.msk [vmem:[%s197 + $0x40] sm:$0xf] %vm2041, %v2025
      %2059 = vst.msk [vmem:[%s197 + $0x44] sm:$0xf] %vm2041, %v2026
      %2060 = vst.msk [vmem:[%s197 + $0x48] sm:$0xf] %vm2041, %v2027
      %2061 = vst.msk [vmem:[%s197 + $0x4c] sm:$0xf] %vm2041, %v2028
      %2062 = vst.msk [vmem:[%s197 + $0x50] sm:$0xf] %vm2041, %v2029
      %2063 = vst.msk [vmem:[%s197 + $0x54] sm:$0xf] %vm2041, %v2030
      %2064 = vst.msk [vmem:[%s197 + $0x58] sm:$0xf] %vm2041, %v2031
      %2065 = vst.msk [vmem:[%s197 + $0x5c] sm:$0xf] %vm2041, %v2032
      %2066 = vst.msk [vmem:[%s197 + $0x60] sm:$0xf] %vm2041, %v2033
      %2067 = vst.msk [vmem:[%s197 + $0x64] sm:$0xf] %vm2041, %v2034
      %2068 = vst.msk [vmem:[%s197 + $0x68] sm:$0xf] %vm2041, %v2035
      %2069 = vst.msk [vmem:[%s197 + $0x6c] sm:$0xf] %vm2041, %v2036
      %2070 = vst.msk [vmem:[%s197 + $0x70] sm:$0xf] %vm2041, %v2037
      %2071 = vst.msk [vmem:[%s197 + $0x74] sm:$0xf] %vm2041, %v2038
      %2072 = vst.msk [vmem:[%s197 + $0x78] sm:$0xf] %vm2041, %v2039
      %2073 = vst.msk [vmem:[%s197 + $0x7c] sm:$0xf] %vm2041, %v2040
      %p2074 = scmp.lt.s32.totalorder %s15, 1
      %s2075 = scalar_select %p2074, %s15, 1
      %s2076 = smul.addr %s2075, 32
      %s2077 = smul.addr %s2076, 4
      %s2078 = scalar_lea.vmem %s4, %s2077
      // Predicated region
      $region37: #{iteration_forward.2} parent=35 // pred_check
        %p2079 = pneg %p122
      $region38: #{iteration_forward.2} parent=35 // pred_check_branch
        %2081 = sbr.rel (%p2079) target = $region40
      $region39: #{iteration_forward.2} parent=35 // pred_region
        _
      $region40: #{iteration_forward.2} parent=35 // pred_fallthru
        _
    $region36: #{iteration_forward.2} parent=5 // pred_fallthru
      _
    %p2082 = scmp.le.s32.totalorder 2, %s10
    // Predicated region
    $region41: #{iteration_forward.2} parent=5 // pred_check
      %p2083 = pneg %p2082
    $region42: #{iteration_forward.2} parent=5 // pred_check_branch
      %2085 = sbr.rel (%p2083) target = $region44
    $region43: #{iteration_forward.2} parent=5 // pred_region
      %s2086 = ssub.s32 %s10, 2
      // Predicated region
      $region45: #{iteration_forward.2} parent=43 // pred_check
        %p2087 = pneg %p128
      $region46: #{iteration_forward.2} parent=43 // pred_check_branch
        %2089 = sbr.rel (%p2087) target = $region48
      $region47: #{iteration_forward.2} parent=43 // pred_region
        %p2090 = scmp.lt.s32.totalorder %s16, 1
        %s2091 = scalar_select %p2090, %s16, 1
        %s2092 = smul.addr %s2091, 32
        %s2093 = smul.addr %s2092, 4
        %s2094 = scalar_lea.vmem %s4, %s2093
      $region48: #{iteration_forward.2} parent=43 // pred_fallthru
        _
    $region44: #{iteration_forward.2} parent=5 // pred_fallthru
      _
  $region6: #{iteration_forward.2} parent=0 // loop_footer
    %s14 = sadd.s32 1, %s10
  $region7: #{iteration_forward.2} parent=0 // loop_footer_branch
    %9 = sbr.rel target = $region3
  $region8: #{iteration_forward.2} parent=0 // loop_exit
    _

// kernel: iteration_forward.3
$region0: #{iteration_forward.3}
  #allocation0 [shape = 'u32[]', space=smem, size = 0x4, offset = 0x4, fixed_abs, tag = 'smem constant byte address 0x4 - core index']
  #allocation1 [shape = 'u32[72,128]{1,0:T(1,128)}', space=vmem, size = 0x9000, scoped, tag = 'internal scratch']
  %s0 = inlined_call_operand.vmem [shape: bf16[2,18,18,32], index: 0, kind: input, shape index: {}]
  %s1 = inlined_call_operand.vmem [shape: bf16[9,32,32], index: 1, kind: input, shape index: {}]
  %s2 = inlined_call_operand.vmem [shape: f32[1,32], index: 2, kind: input, shape index: {}]
  %s3 = inlined_call_operand.vmem [shape: f32[1,32], index: 3, kind: input, shape index: {}]
  %s4 = inlined_call_operand.vmem [shape: f32[1,32], index: 4, kind: input, shape index: {}]
  %s5 = inlined_call_operand.vmem [shape: f32[2,16,16], index: 5, kind: input, shape index: {}]
  %s6 = inlined_call_operand.vmem [shape: f32[2], index: 6, kind: input, shape index: {}]
  %s7 = inlined_call_operand.hbm [shape: f32[2,16,16], index: 7, kind: output, shape index: {}]
  %s8 = sld [smem:[#allocation0]]
  $region65: #{iteration_forward.3} parent=0
    _
  %s10 = ssub.s32 1, %s8
  %s11 = scalar_select 0, %s10, %s8
  $region1: #{iteration_forward.3} parent=0
    #allocation2 [shape = 'u8[512]{0}', space=smem, size = 0x200, scoped, tag = 'input window, operand 6, single buffered']
    #allocation3 [shape = 's32[2]{0}', space=sflag, size = 0x8, scoped, tag = 'scoped memory for iteration_forward.3']
    #allocation4 [shape = 's32[2]{0}', space=sflag, size = 0x8, scoped, tag = 'scoped memory for iteration_forward.3']
    #allocation5 [shape = 'u8[16384]{0}', space=vmem, size = 0x4000, scoped, tag = 'output window, operand 0']
    %12 = vsyncpa [#allocation4], 0
    %13 = vsyncpa [#allocation3], 0
    %s14 = scalar_lea.sflag [#allocation3], 1
    %15 = vsyncpa %s14, 0
    loop: start=0, step=1, limit=4
    $region2: #{iteration_forward.3} parent=1 // loop_pre_header
      _
    $region3: #{iteration_forward.3} parent=1 // loop_header
      %s17 = sphi 0, %s21
      %p18 = scmp.ge.s32.totalorder %s17, 4
      %s27 = sphi 0, %s29
      %s30 = sphi 0, %s27
      %s31 = sphi 0, %s30
      %s47 = sphi 0, %s31
      %s51 = sphi 0, %s51
      %s53 = sphi 0, %s51
      %s54 = sphi 0, %s53
      %s68 = sphi 0, %s54
      %s72 = sphi 0, %s72
      %s74 = sphi 0, %s72
      %s75 = sphi 0, %s74
      %s89 = sphi 0, %s75
      %s93 = sphi 0, %s93
      %s95 = sphi 0, %s93
      %s96 = sphi 0, %s95
      %s110 = sphi 0, %s96
      %s114 = sphi 0, %s114
      %s116 = sphi 0, %s114
      %s117 = sphi 0, %s116
      %s131 = sphi 0, %s117
      %s137 = sphi 0, %s139
      %s140 = sphi 0, %s137
      %s141 = sphi 0, %s140
      %s157 = sphi 0, %s141
      %s161 = sphi 0, %s161
      %s163 = sphi 0, %s161
      %s164 = sphi 0, %s163
      %s178 = sphi 0, %s164
      %s184 = sphi 0, %s186
      %s187 = sphi 0, %s184
      %s188 = sphi 0, %s187
      %s204 = sphi 0, %s188
    $region4: #{iteration_forward.3} parent=1 // loop_header_branch
      %20 = sbr.rel (%p18) target = $region8
    $region5: #{iteration_forward.3} parent=1 // loop_body
      %s22 = ssub.s32 %s17, 1
      %s23 = ssub.s32 %s17, 2
      %s24 = sadd.s32 %s17, 1
      %s25 = ssub.s32 %s17, %s24
      %p26 = scmp.eq.s32.totalorder %s25, 0
      %s28 = sadd.s32 %s27, 1
      %s29 = scalar_select %p26, %s27, %s28
      %p32 = pneg %p26
      %p33 = scmp.eq.s32.totalorder %s17, 1
      %p34 = por %p32, %p33
      %p35 = scmp.ne.s32.totalorder %s27, %s30
      %p36 = scmp.eq.s32.totalorder %s17, 0
      %p37 = por %p35, %p36
      %p38 = scmp.ne.s32.totalorder %s27, %s30
      %p39 = scmp.eq.s32.totalorder %s22, 1
      %p40 = por %p38, %p39
      %p41 = scmp.ne.s32.totalorder %s30, %s31
      %p42 = scmp.eq.s32.totalorder %s22, 0
      %p43 = por %p41, %p42
      %p44 = scmp.ne.s32.totalorder %s30, %s31
      %p45 = scmp.eq.s32.totalorder %s23, 1
      %p46 = por %p44, %p45
      %p48 = scmp.ne.s32.totalorder %s31, %s47
      %p49 = scmp.eq.s32.totalorder %s23, 0
      %p50 = por %p48, %p49
      %s52 = sadd.s32 %s51, 1
      %p55 = scmp.eq.s32.totalorder %s17, 1
      %p56 = scmp.ne.s32.totalorder %s51, %s53
      %p57 = scmp.eq.s32.totalorder %s17, 0
      %p58 = por %p56, %p57
      %p59 = scmp.ne.s32.totalorder %s51, %s53
      %p60 = scmp.eq.s32.totalorder %s22, 1
      %p61 = por %p59, %p60
      %p62 = scmp.ne.s32.totalorder %s53, %s54
      %p63 = scmp.eq.s32.totalorder %s22, 0
      %p64 = por %p62, %p63
      %p65 = scmp.ne.s32.totalorder %s53, %s54
      %p66 = scmp.eq.s32.totalorder %s23, 1
      %p67 = por %p65, %p66
      %p69 = scmp.ne.s32.totalorder %s54, %s68
      %p70 = scmp.eq.s32.totalorder %s23, 0
      %p71 = por %p69, %p70
      %s73 = sadd.s32 %s72, 1
      %p76 = scmp.eq.s32.totalorder %s17, 1
      %p77 = scmp.ne.s32.totalorder %s72, %s74
      %p78 = scmp.eq.s32.totalorder %s17, 0
      %p79 = por %p77, %p78
      %p80 = scmp.ne.s32.totalorder %s72, %s74
      %p81 = scmp.eq.s32.totalorder %s22, 1
      %p82 = por %p80, %p81
      %p83 = scmp.ne.s32.totalorder %s74, %s75
      %p84 = scmp.eq.s32.totalorder %s22, 0
      %p85 = por %p83, %p84
      %p86 = scmp.ne.s32.totalorder %s74, %s75
      %p87 = scmp.eq.s32.totalorder %s23, 1
      %p88 = por %p86, %p87
      %p90 = scmp.ne.s32.totalorder %s75, %s89
      %p91 = scmp.eq.s32.totalorder %s23, 0
      %p92 = por %p90, %p91
      %s94 = sadd.s32 %s93, 1
      %p97 = scmp.eq.s32.totalorder %s17, 1
      %p98 = scmp.ne.s32.totalorder %s93, %s95
      %p99 = scmp.eq.s32.totalorder %s17, 0
      %p100 = por %p98, %p99
      %p101 = scmp.ne.s32.totalorder %s93, %s95
      %p102 = scmp.eq.s32.totalorder %s22, 1
      %p103 = por %p101, %p102
      %p104 = scmp.ne.s32.totalorder %s95, %s96
      %p105 = scmp.eq.s32.totalorder %s22, 0
      %p106 = por %p104, %p105
      %p107 = scmp.ne.s32.totalorder %s95, %s96
      %p108 = scmp.eq.s32.totalorder %s23, 1
      %p109 = por %p107, %p108
      %p111 = scmp.ne.s32.totalorder %s96, %s110
      %p112 = scmp.eq.s32.totalorder %s23, 0
      %p113 = por %p111, %p112
      %s115 = sadd.s32 %s114, 1
      %p118 = scmp.eq.s32.totalorder %s17, 1
      %p119 = scmp.ne.s32.totalorder %s114, %s116
      %p120 = scmp.eq.s32.totalorder %s17, 0
      %p121 = por %p119, %p120
      %p122 = scmp.ne.s32.totalorder %s114, %s116
      %p123 = scmp.eq.s32.totalorder %s22, 1
      %p124 = por %p122, %p123
      %p125 = scmp.ne.s32.totalorder %s116, %s117
      %p126 = scmp.eq.s32.totalorder %s22, 0
      %p127 = por %p125, %p126
      %p128 = scmp.ne.s32.totalorder %s116, %s117
      %p129 = scmp.eq.s32.totalorder %s23, 1
      %p130 = por %p128, %p129
      %p132 = scmp.ne.s32.totalorder %s117, %s131
      %p133 = scmp.eq.s32.totalorder %s23, 0
      %p134 = por %p132, %p133
      %s135 = ssub.s32 %s17, %s24
      %p136 = scmp.eq.s32.totalorder %s135, 0
      %s138 = sadd.s32 %s137, 1
      %s139 = scalar_select %p136, %s137, %s138
      %p142 = pneg %p136
      %p143 = scmp.eq.s32.totalorder %s17, 1
      %p144 = por %p142, %p143
      %p145 = scmp.ne.s32.totalorder %s137, %s140
      %p146 = scmp.eq.s32.totalorder %s17, 0
      %p147 = por %p145, %p146
      %p148 = scmp.ne.s32.totalorder %s137, %s140
      %p149 = scmp.eq.s32.totalorder %s22, 1
      %p150 = por %p148, %p149
      %p151 = scmp.ne.s32.totalorder %s140, %s141
      %p152 = scmp.eq.s32.totalorder %s22, 0
      %p153 = por %p151, %p152
      %p154 = scmp.ne.s32.totalorder %s140, %s141
      %p155 = scmp.eq.s32.totalorder %s23, 1
      %p156 = por %p154, %p155
      %p158 = scmp.ne.s32.totalorder %s141, %s157
      %p159 = scmp.eq.s32.totalorder %s23, 0
      %p160 = por %p158, %p159
      %s162 = sadd.s32 %s161, 1
      %p165 = scmp.eq.s32.totalorder %s17, 1
      %p166 = scmp.ne.s32.totalorder %s161, %s163
      %p167 = scmp.eq.s32.totalorder %s17, 0
      %p168 = por %p166, %p167
      %p169 = scmp.ne.s32.totalorder %s161, %s163
      %p170 = scmp.eq.s32.totalorder %s22, 1
      %p171 = por %p169, %p170
      %p172 = scmp.ne.s32.totalorder %s163, %s164
      %p173 = scmp.eq.s32.totalorder %s22, 0
      %p174 = por %p172, %p173
      %p175 = scmp.ne.s32.totalorder %s163, %s164
      %p176 = scmp.eq.s32.totalorder %s23, 1
      %p177 = por %p175, %p176
      %p179 = scmp.ne.s32.totalorder %s164, %s178
      %p180 = scmp.eq.s32.totalorder %s23, 0
      %p181 = por %p179, %p180
      %s182 = ssub.s32 %s17, %s24
      %p183 = scmp.eq.s32.totalorder %s182, 0
      %s185 = sadd.s32 %s184, 1
      %s186 = scalar_select %p183, %s184, %s185
      %p189 = pneg %p183
      %p190 = scmp.eq.s32.totalorder %s17, 1
      %p191 = por %p189, %p190
      %p192 = scmp.ne.s32.totalorder %s184, %s187
      %p193 = scmp.eq.s32.totalorder %s17, 0
      %p194 = por %p192, %p193
      %p195 = scmp.ne.s32.totalorder %s184, %s187
      %p196 = scmp.eq.s32.totalorder %s22, 1
      %p197 = por %p195, %p196
      %p198 = scmp.ne.s32.totalorder %s187, %s188
      %p199 = scmp.eq.s32.totalorder %s22, 0
      %p200 = por %p198, %p199
      %p201 = scmp.ne.s32.totalorder %s187, %s188
      %p202 = scmp.eq.s32.totalorder %s23, 1
      %p203 = por %p201, %p202
      %p205 = scmp.ne.s32.totalorder %s188, %s204
      %p206 = scmp.eq.s32.totalorder %s23, 0
      %p207 = por %p205, %p206
      %p208 = scmp.le.s32.totalorder 1, %s17
      %p209 = scmp.lt.s32.totalorder %s17, 3
      %p210 = pnand %p208, %p209
      %p211 = pneg %p210
      // Predicated region
      $region9: #{iteration_forward.3} parent=5 // pred_check
        _
      $region10: #{iteration_forward.3} parent=5 // pred_check_branch
        %213 = sbr.rel (%p210) target = $region12
      $region11: #{iteration_forward.3} parent=5 // pred_region
        %s214 = ssub.s32 %s17, 1
        // Predicated region
        $region13: #{iteration_forward.3} parent=11 // pred_check
          %p215 = pneg %p64
        $region14: #{iteration_forward.3} parent=11 // pred_check_branch
          %217 = sbr.rel (%p215) target = $region16
        $region15: #{iteration_forward.3} parent=11 // pred_region
          _
        $region16: #{iteration_forward.3} parent=11 // pred_fallthru
          _
        // Predicated region
        $region17: #{iteration_forward.3} parent=11 // pred_check
          %p218 = pneg %p85
        $region18: #{iteration_forward.3} parent=11 // pred_check_branch
          %220 = sbr.rel (%p218) target = $region20
        $region19: #{iteration_forward.3} parent=11 // pred_region
          _
        $region20: #{iteration_forward.3} parent=11 // pred_fallthru
          _
        // Predicated region
        $region21: #{iteration_forward.3} parent=11 // pred_check
          %p221 = pneg %p106
        $region22: #{iteration_forward.3} parent=11 // pred_check_branch
          %223 = sbr.rel (%p221) target = $region24
        $region23: #{iteration_forward.3} parent=11 // pred_region
          _
        $region24: #{iteration_forward.3} parent=11 // pred_fallthru
          _
        // Predicated region
        $region25: #{iteration_forward.3} parent=11 // pred_check
          %p224 = pneg %p127
        $region26: #{iteration_forward.3} parent=11 // pred_check_branch
          %226 = sbr.rel (%p224) target = $region28
        $region27: #{iteration_forward.3} parent=11 // pred_region
          _
        $region28: #{iteration_forward.3} parent=11 // pred_fallthru
          _
        // Predicated region
        $region29: #{iteration_forward.3} parent=11 // pred_check
          %p227 = pneg %p174
        $region30: #{iteration_forward.3} parent=11 // pred_check_branch
          %229 = sbr.rel (%p227) target = $region32
        $region31: #{iteration_forward.3} parent=11 // pred_region
          %231 = vsyncadd [#allocation4], 0
          %s233 = sshll.u32 %s6, 4
          %s234 = int_to_ptr.vmem [resolvable:$true] %s233
          %236 = dma.vmem_to_smem %s234, 16, [#allocation2], [#allocation4]
        $region32: #{iteration_forward.3} parent=11 // pred_fallthru
          _
      $region12: #{iteration_forward.3} parent=5 // pred_fallthru
        _
      %p237 = scmp.lt.s32.totalorder %s17, 2
      // Predicated region
      $region33: #{iteration_forward.3} parent=5 // pred_check
        %p238 = pneg %p237
      $region34: #{iteration_forward.3} parent=5 // pred_check_branch
        %240 = sbr.rel (%p238) target = $region36
      $region35: #{iteration_forward.3} parent=5 // pred_region
        // Predicated region
        $region37: #{iteration_forward.3} parent=35 // pred_check
          %p241 = pneg %p37
        $region38: #{iteration_forward.3} parent=35 // pred_check_branch
          %243 = sbr.rel (%p241) target = $region40
        $region39: #{iteration_forward.3} parent=35 // pred_region
          %p244 = scmp.lt.s32.totalorder %s17, 1
          %s245 = scalar_select %p244, %s17, 1
          %s246 = smul.addr %s245, 54
          %s247 = smul.addr %s246, 4
          %s248 = scalar_lea.vmem %s0, %s247
        $region40: #{iteration_forward.3} parent=35 // pred_fallthru
          _
        // Predicated region
        $region41: #{iteration_forward.3} parent=35 // pred_check
          %p249 = pneg %p147
        $region42: #{iteration_forward.3} parent=35 // pred_check_branch
          %251 = sbr.rel (%p249) target = $region44
        $region43: #{iteration_forward.3} parent=35 // pred_region
          %p252 = scmp.lt.s32.totalorder %s17, 1
          %s253 = scalar_select %p252, %s17, 1
          %s254 = smul.addr %s253, 2
          %s255 = smul.addr %s254, 8
          %s256 = scalar_lea.vmem %s5, %s255
        $region44: #{iteration_forward.3} parent=35 // pred_fallthru
          _
      $region36: #{iteration_forward.3} parent=5 // pred_fallthru
        _
      %p257 = scmp.le.s32.totalorder 1, %s17
      %p258 = scmp.lt.s32.totalorder %s17, 3
      %p259 = pnand %p257, %p258
      %p260 = pneg %p259
      // Predicated region
      $region45: #{iteration_forward.3} parent=5 // pred_check
        _
      $region46: #{iteration_forward.3} parent=5 // pred_check_branch
        %262 = sbr.rel (%p259) target = $region48
      $region47: #{iteration_forward.3} parent=5 // pred_region
        %s263 = ssub.s32 %s17, 1
        // Predicated region
        $region49: #{iteration_forward.3} parent=47 // pred_check
          %p264 = pneg %p174
        $region50: #{iteration_forward.3} parent=47 // pred_check_branch
          %266 = sbr.rel (%p264) target = $region52
        $region51: #{iteration_forward.3} parent=47 // pred_region
          %268 = dma.done [#allocation4], 16
        $region52: #{iteration_forward.3} parent=47 // pred_fallthru
          _
        %269 = sfence
        %p270 = scmp.lt.s32.totalorder %s22, 1
        %s271 = scalar_select %p270, %s22, 1
        %s272 = smul.addr %s271, 54
        %s273 = smul.addr %s272, 4
        %s274 = scalar_lea.vmem %s0, %s273
        %p275 = pneg %p43
        %p276 = pneg %p40
        %p277 = pneg %p64
        %p278 = pneg %p61
        %p279 = pneg %p85
        %p280 = pneg %p82
        %p281 = pneg %p106
        %p282 = pneg %p103
        %p283 = pneg %p127
        %p284 = pneg %p124
        %p285 = scmp.lt.s32.totalorder %s22, 1
        %s286 = scalar_select %p285, %s22, 1
        %s287 = smul.addr %s286, 2
        %s288 = smul.addr %s287, 8
        %s289 = scalar_lea.vmem %s5, %s288
        %p290 = pneg %p153
        %p291 = pneg %p150
        %p292 = pneg %p174
        %p293 = pneg %p171
        %p294 = pneg %p200
        %p295 = pneg %p197
        %s296 = sand.u32 %s187, 1
        %s297 = scalar_lea.sflag [#allocation3], %s296
        %s298 = sand.u32 %s187, 1
        %s299 = smul.addr %s298, 16
        %s300 = scalar_lea.vmem [#allocation5], %s299
        %p301 = scmp.lt.s32.totalorder %s22, 1
        %s302 = scalar_select %p301, %s22, 1
        %s303 = smul.addr %s302, 54
        %s304 = smul.addr %s303, 4
        %s305 = scalar_lea.vmem %s0, %s304
        %p306 = scmp.lt.s32.totalorder %s22, 1
        %s307 = scalar_select %p306, %s22, 1
        %s308 = smul.addr %s307, 2
        %s309 = smul.addr %s308, 8
        %s310 = scalar_lea.vmem %s5, %s309
        %v312 = vld [vmem:[%s305] sm:$0xf]
        %v313 = vld [vmem:[%s305 + $0x4] sm:$0xf]
        %v314 = vld [vmem:[%s305 + $0x8] sm:$0x1]
        %v315 = vld [vmem:[%s305 + $0xc] sm:$0xf]
        %v316 = vld [vmem:[%s305 + $0x10] sm:$0xf]
        %v317 = vld [vmem:[%s305 + $0x14] sm:$0x1]
        %v318 = vld [vmem:[%s305 + $0x18] sm:$0xf]
        %v319 = vld [vmem:[%s305 + $0x1c] sm:$0xf]
        %v320 = vld [vmem:[%s305 + $0x20] sm:$0x1]
        %v321 = vld [vmem:[%s305 + $0x24] sm:$0xf]
        %v322 = vld [vmem:[%s305 + $0x28] sm:$0xf]
        %v323 = vld [vmem:[%s305 + $0x2c] sm:$0x1]
        %v324 = vld [vmem:[%s305 + $0x30] sm:$0xf]
        %v325 = vld [vmem:[%s305 + $0x34] sm:$0xf]
        %v326 = vld [vmem:[%s305 + $0x38] sm:$0x1]
        %v327 = vld [vmem:[%s305 + $0x3c] sm:$0xf]
        %v328 = vld [vmem:[%s305 + $0x40] sm:$0xf]
        %v329 = vld [vmem:[%s305 + $0x44] sm:$0x1]
        %v330 = vld [vmem:[%s305 + $0x48] sm:$0xf]
        %v331 = vld [vmem:[%s305 + $0x4c] sm:$0xf]
        %v332 = vld [vmem:[%s305 + $0x50] sm:$0x1]
        %v333 = vld [vmem:[%s305 + $0x54] sm:$0xf]
        %v334 = vld [vmem:[%s305 + $0x58] sm:$0xf]
        %v335 = vld [vmem:[%s305 + $0x5c] sm:$0x1]
        %v336 = vld [vmem:[%s305 + $0x60] sm:$0xf]
        %v337 = vld [vmem:[%s305 + $0x64] sm:$0xf]
        %v338 = vld [vmem:[%s305 + $0x68] sm:$0x1]
        %v339 = vld [vmem:[%s305 + $0x6c] sm:$0xf]
        %v340 = vld [vmem:[%s305 + $0x70] sm:$0xf]
        %v341 = vld [vmem:[%s305 + $0x74] sm:$0x1]
        %v342 = vld [vmem:[%s305 + $0x78] sm:$0xf]
        %v343 = vld [vmem:[%s305 + $0x7c] sm:$0xf]
        %v344 = vld [vmem:[%s305 + $0x80] sm:$0x1]
        %v345 = vld [vmem:[%s305 + $0x84] sm:$0xf]
        %v346 = vld [vmem:[%s305 + $0x88] sm:$0xf]
        %v347 = vld [vmem:[%s305 + $0x8c] sm:$0x1]
        %v348 = vld [vmem:[%s305 + $0x90] sm:$0xf]
        %v349 = vld [vmem:[%s305 + $0x94] sm:$0xf]
        %v350 = vld [vmem:[%s305 + $0x98] sm:$0x1]
        %v351 = vld [vmem:[%s305 + $0x9c] sm:$0xf]
        %v352 = vld [vmem:[%s305 + $0xa0] sm:$0xf]
        %v353 = vld [vmem:[%s305 + $0xa4] sm:$0x1]
        %v354 = vld [vmem:[%s305 + $0xa8] sm:$0xf]
        %v355 = vld [vmem:[%s305 + $0xac] sm:$0xf]
        %v356 = vld [vmem:[%s305 + $0xb0] sm:$0x1]
        %v357 = vld [vmem:[%s305 + $0xb4] sm:$0xf]
        %v358 = vld [vmem:[%s305 + $0xb8] sm:$0xf]
        %v359 = vld [vmem:[%s305 + $0xbc] sm:$0x1]
        %v360 = vld [vmem:[%s305 + $0xc0] sm:$0xf]
        %v361 = vld [vmem:[%s305 + $0xc4] sm:$0xf]
        %v362 = vld [vmem:[%s305 + $0xc8] sm:$0x1]
        %v363 = vld [vmem:[%s305 + $0xcc] sm:$0xf]
        %v364 = vld [vmem:[%s305 + $0xd0] sm:$0xf]
        %v365 = vld [vmem:[%s305 + $0xd4] sm:$0x1]
        %v366 = vunpack.c.l.bf16 %v312
        %v367 = vunpack.c.l.bf16 %v313
        %v368 = vunpack.c.l.bf16 %v314
        %v369 = vunpack.c.l.bf16 %v315
        %v370 = vunpack.c.l.bf16 %v316
        %v371 = vunpack.c.l.bf16 %v317
        %v372 = vunpack.c.l.bf16 %v318
        %v373 = vunpack.c.l.bf16 %v319
        %v374 = vunpack.c.l.bf16 %v320
        %v375 = vunpack.c.l.bf16 %v321
        %v376 = vunpack.c.l.bf16 %v322
        %v377 = vunpack.c.l.bf16 %v323
        %v378 = vunpack.c.l.bf16 %v324
        %v379 = vunpack.c.l.bf16 %v325
        %v380 = vunpack.c.l.bf16 %v326
        %v381 = vunpack.c.l.bf16 %v327
        %v382 = vunpack.c.l.bf16 %v328
        %v383 = vunpack.c.l.bf16 %v329
        %v384 = vunpack.c.l.bf16 %v330
        %v385 = vunpack.c.l.bf16 %v331
        %v386 = vunpack.c.l.bf16 %v332
        %v387 = vunpack.c.l.bf16 %v333
        %v388 = vunpack.c.l.bf16 %v334
        %v389 = vunpack.c.l.bf16 %v335
        %v390 = vunpack.c.l.bf16 %v336
        %v391 = vunpack.c.l.bf16 %v337
        %v392 = vunpack.c.l.bf16 %v338
        %v393 = vunpack.c.l.bf16 %v339
        %v394 = vunpack.c.l.bf16 %v340
        %v395 = vunpack.c.l.bf16 %v341
        %v396 = vunpack.c.l.bf16 %v342
        %v397 = vunpack.c.l.bf16 %v343
        %v398 = vunpack.c.l.bf16 %v344
        %v399 = vunpack.c.l.bf16 %v345
        %v400 = vunpack.c.l.bf16 %v346
        %v401 = vunpack.c.l.bf16 %v347
        %v402 = vunpack.c.l.bf16 %v348
        %v403 = vunpack.c.l.bf16 %v349
        %v404 = vunpack.c.l.bf16 %v350
        %v405 = vunpack.c.l.bf16 %v351
        %v406 = vunpack.c.l.bf16 %v352
        %v407 = vunpack.c.l.bf16 %v353
        %v408 = vunpack.c.l.bf16 %v354
        %v409 = vunpack.c.l.bf16 %v355
        %v410 = vunpack.c.l.bf16 %v356
        %v411 = vunpack.c.l.bf16 %v357
        %v412 = vunpack.c.l.bf16 %v358
        %v413 = vunpack.c.l.bf16 %v359
        %v414 = vunpack.c.l.bf16 %v360
        %v415 = vunpack.c.l.bf16 %v361
        %v416 = vunpack.c.l.bf16 %v362
        %v417 = vunpack.c.l.bf16 %v363
        %v418 = vunpack.c.l.bf16 %v364
        %v419 = vunpack.c.l.bf16 %v365
        %v420 = vpack.c.bf16 %v367, %v366
        %v421 = vpack.c.bf16 %v370, %v369
        %v422 = vpack.c.bf16 %v373, %v372
        %v423 = vpack.c.bf16 %v376, %v375
        %v424 = vpack.c.bf16 %v379, %v378
        %v425 = vpack.c.bf16 %v382, %v381
        %v426 = vpack.c.bf16 %v385, %v384
        %v427 = vpack.c.bf16 %v388, %v387
        %v428 = vpack.c.bf16 %v391, %v390
        %v429 = vpack.c.bf16 %v394, %v393
        %v430 = vpack.c.bf16 %v397, %v396
        %v431 = vpack.c.bf16 %v400, %v399
        %v432 = vpack.c.bf16 %v403, %v402
        %v433 = vpack.c.bf16 %v406, %v405
        %v434 = vpack.c.bf16 %v409, %v408
        %v435 = vpack.c.bf16 %v412, %v411
        %v436 = vld [vmem:[%s1] sm:$0xf]
        %v437 = vld [vmem:[%s1 + $0x4] sm:$0xf]
        %v438 = vld [vmem:[%s1 + $0x8] sm:$0xf]
        %v439 = vld [vmem:[%s1 + $0xc] sm:$0xf]
        %vm488 = vcmask 1046528
        %v489 = vrot.slane %v366, 1
        %v490 = vrot.slane %v367, 1
        %v491 = vsel %vm488, %v489, %v490
        %v492 = vrot.slane %v368, 1
        %v493 = vsel %vm488, %v490, %v492
        %v494 = vrot.slane %v369, 1
        %v495 = vrot.slane %v370, 1
        %v496 = vsel %vm488, %v494, %v495
        %v497 = vrot.slane %v371, 1
        %v498 = vsel %vm488, %v495, %v497
        %v499 = vrot.slane %v372, 1
        %v500 = vrot.slane %v373, 1
        %v501 = vsel %vm488, %v499, %v500
        %v502 = vrot.slane %v374, 1
        %v503 = vsel %vm488, %v500, %v502
        %v504 = vrot.slane %v375, 1
        %v505 = vrot.slane %v376, 1
        %v506 = vsel %vm488, %v504, %v505
        %v507 = vrot.slane %v377, 1
        %v508 = vsel %vm488, %v505, %v507
        %v509 = vrot.slane %v378, 1
        %v510 = vrot.slane %v379, 1
        %v511 = vsel %vm488, %v509, %v510
        %v512 = vrot.slane %v380, 1
        %v513 = vsel %vm488, %v510, %v512
        %v514 = vrot.slane %v381, 1
        %v515 = vrot.slane %v382, 1
        %v516 = vsel %vm488, %v514, %v515
        %v517 = vrot.slane %v383, 1
        %v518 = vsel %vm488, %v515, %v517
        %v519 = vrot.slane %v384, 1
        %v520 = vrot.slane %v385, 1
        %v521 = vsel %vm488, %v519, %v520
        %v522 = vrot.slane %v386, 1
        %v523 = vsel %vm488, %v520, %v522
        %v524 = vrot.slane %v387, 1
        %v525 = vrot.slane %v388, 1
        %v526 = vsel %vm488, %v524, %v525
        %v527 = vrot.slane %v389, 1
        %v528 = vsel %vm488, %v525, %v527
        %v529 = vrot.slane %v390, 1
        %v530 = vrot.slane %v391, 1
        %v531 = vsel %vm488, %v529, %v530
        %v532 = vrot.slane %v392, 1
        %v533 = vsel %vm488, %v530, %v532
        %v534 = vrot.slane %v393, 1
        %v535 = vrot.slane %v394, 1
        %v536 = vsel %vm488, %v534, %v535
        %v537 = vrot.slane %v395, 1
        %v538 = vsel %vm488, %v535, %v537
        %v539 = vrot.slane %v396, 1
        %v540 = vrot.slane %v397, 1
        %v541 = vsel %vm488, %v539, %v540
        %v542 = vrot.slane %v398, 1
        %v543 = vsel %vm488, %v540, %v542
        %v544 = vrot.slane %v399, 1
        %v545 = vrot.slane %v400, 1
        %v546 = vsel %vm488, %v544, %v545
        %v547 = vrot.slane %v401, 1
        %v548 = vsel %vm488, %v545, %v547
        %v549 = vrot.slane %v402, 1
        %v550 = vrot.slane %v403, 1
        %v551 = vsel %vm488, %v549, %v550
        %v552 = vrot.slane %v404, 1
        %v553 = vsel %vm488, %v550, %v552
        %v554 = vrot.slane %v405, 1
        %v555 = vrot.slane %v406, 1
        %v556 = vsel %vm488, %v554, %v555
        %v557 = vrot.slane %v407, 1
        %v558 = vsel %vm488, %v555, %v557
        %v559 = vrot.slane %v408, 1
        %v560 = vrot.slane %v409, 1
        %v561 = vsel %vm488, %v559, %v560
        %v562 = vrot.slane %v410, 1
        %v563 = vsel %vm488, %v560, %v562
        %v564 = vrot.slane %v411, 1
        %v565 = vrot.slane %v412, 1
        %v566 = vsel %vm488, %v564, %v565
        %v567 = vrot.slane %v413, 1
        %v568 = vsel %vm488, %v565, %v567
        %v601 = vpack.c.bf16 %v493, %v491
        %v602 = vpack.c.bf16 %v498, %v496
        %v603 = vpack.c.bf16 %v503, %v501
        %v604 = vpack.c.bf16 %v508, %v506
        %v605 = vpack.c.bf16 %v513, %v511
        %v606 = vpack.c.bf16 %v518, %v516
        %v607 = vpack.c.bf16 %v523, %v521
        %v608 = vpack.c.bf16 %v528, %v526
        %v609 = vpack.c.bf16 %v533, %v531
        %v610 = vpack.c.bf16 %v538, %v536
        %v611 = vpack.c.bf16 %v543, %v541
        %v612 = vpack.c.bf16 %v548, %v546
        %v613 = vpack.c.bf16 %v553, %v551
        %v614 = vpack.c.bf16 %v558, %v556
        %v615 = vpack.c.bf16 %v563, %v561
        %v616 = vpack.c.bf16 %v568, %v566
        %s617 = scalar_lea.vmem %s1, 16
        %v618 = vld [vmem:[%s617] sm:$0xf]
        %v619 = vld [vmem:[%s617 + $0x4] sm:$0xf]
        %v620 = vld [vmem:[%s617 + $0x8] sm:$0xf]
        %v621 = vld [vmem:[%s617 + $0xc] sm:$0xf]
        %v626 = vunpack.c.l.b16 %v618
        %v627 = vunpack.c.l.b16 %v619
        %v628 = vunpack.c.l.b16 %v620
        %v629 = vunpack.c.l.b16 %v621
        %v630 = vpack.c.b16 %v627, %v626
        %v631 = vpack.c.b16 %v629, %v628
        %vm634 = vcmask 261120
        %v636 = vsel %vm634, %v601, 0
        %v639 = vsel %vm634, %v602, 0
        %v642 = vsel %vm634, %v603, 0
        %v645 = vsel %vm634, %v604, 0
        %v648 = vsel %vm634, %v605, 0
        %v651 = vsel %vm634, %v606, 0
        %v654 = vsel %vm634, %v607, 0
        %v657 = vsel %vm634, %v608, 0
        %v660 = vsel %vm634, %v609, 0
        %v663 = vsel %vm634, %v610, 0
        %v666 = vsel %vm634, %v611, 0
        %v669 = vsel %vm634, %v612, 0
        %v672 = vsel %vm634, %v613, 0
        %v675 = vsel %vm634, %v614, 0
        %v678 = vsel %vm634, %v615, 0
        %v681 = vsel %vm634, %v616, 0
        %683 = vmatpush.bf16.msra.mxu0 0
        %684 = vmatpush.bf16.msra.mxu0 0
        %685 = vmatpush.bf16.msra.mxu0 0
        %686 = vmatpush.bf16.msra.mxu0 0
        %687 = vmatpush.bf16.msra.mxu0 0
        %688 = vmatpush.bf16.msra.mxu0 0
        %689 = vmatpush.bf16.msra.mxu0 %v631
        %690 = vmatpush.bf16.msra.mxu0 %v630
        %691 = vmatmul.bf16.gmra.mxu0 %v636
        %v692 = vpop.f32.mrf.mxu0
        %v693 = vadd.f32 0.0, %v692
        %v694 = vpop.f32.mrf.mxu0
        %v695 = vadd.f32 0.0, %v694
        %696 = vmatmul.bf16.gmra.mxu0 %v639
        %v697 = vpop.f32.mrf.mxu0
        %v698 = vadd.f32 0.0, %v697
        %v699 = vpop.f32.mrf.mxu0
        %v700 = vadd.f32 0.0, %v699
        %701 = vmatmul.bf16.gmra.mxu0 %v642
        %v702 = vpop.f32.mrf.mxu0
        %v703 = vadd.f32 0.0, %v702
        %v704 = vpop.f32.mrf.mxu0
        %v705 = vadd.f32 0.0, %v704
        %706 = vmatmul.bf16.gmra.mxu0 %v645
        %v707 = vpop.f32.mrf.mxu0
        %v708 = vadd.f32 0.0, %v707
        %v709 = vpop.f32.mrf.mxu0
        %v710 = vadd.f32 0.0, %v709
        %711 = vmatmul.bf16.gmra.mxu0 %v648
        %v712 = vpop.f32.mrf.mxu0
        %v713 = vadd.f32 0.0, %v712
        %v714 = vpop.f32.mrf.mxu0
        %v715 = vadd.f32 0.0, %v714
        %716 = vmatmul.bf16.gmra.mxu0 %v651
        %v717 = vpop.f32.mrf.mxu0
        %v718 = vadd.f32 0.0, %v717
        %v719 = vpop.f32.mrf.mxu0
        %v720 = vadd.f32 0.0, %v719
        %721 = vmatmul.bf16.gmra.mxu0 %v654
        %v722 = vpop.f32.mrf.mxu0
        %v723 = vadd.f32 0.0, %v722
        %v724 = vpop.f32.mrf.mxu0
        %v725 = vadd.f32 0.0, %v724
        %726 = vmatmul.bf16.gmra.mxu0 %v657
        %v727 = vpop.f32.mrf.mxu0
        %v728 = vadd.f32 0.0, %v727
        %v729 = vpop.f32.mrf.mxu0
        %v730 = vadd.f32 0.0, %v729
        %731 = vmatmul.bf16.gmra.mxu0 %v660
        %v732 = vpop.f32.mrf.mxu0
        %v733 = vadd.f32 0.0, %v732
        %v734 = vpop.f32.mrf.mxu0
        %v735 = vadd.f32 0.0, %v734
        %736 = vmatmul.bf16.gmra.mxu0 %v663
        %v737 = vpop.f32.mrf.mxu0
        %v738 = vadd.f32 0.0, %v737
        %v739 = vpop.f32.mrf.mxu0
        %v740 = vadd.f32 0.0, %v739
        %741 = vmatmul.bf16.gmra.mxu0 %v666
        %v742 = vpop.f32.mrf.mxu0
        %v743 = vadd.f32 0.0, %v742
        %v744 = vpop.f32.mrf.mxu0
        %v745 = vadd.f32 0.0, %v744
        %746 = vmatmul.bf16.gmra.mxu0 %v669
        %v747 = vpop.f32.mrf.mxu0
        %v748 = vadd.f32 0.0, %v747
        %v749 = vpop.f32.mrf.mxu0
        %v750 = vadd.f32 0.0, %v749
        %751 = vmatmul.bf16.gmra.mxu0 %v672
        %v752 = vpop.f32.mrf.mxu0
        %v753 = vadd.f32 0.0, %v752
        %v754 = vpop.f32.mrf.mxu0
        %v755 = vadd.f32 0.0, %v754
        %756 = vmatmul.bf16.gmra.mxu0 %v675
        %v757 = vpop.f32.mrf.mxu0
        %v758 = vadd.f32 0.0, %v757
        %v759 = vpop.f32.mrf.mxu0
        %v760 = vadd.f32 0.0, %v759
        %761 = vmatmul.bf16.gmra.mxu0 %v678
        %v762 = vpop.f32.mrf.mxu0
        %v763 = vadd.f32 0.0, %v762
        %v764 = vpop.f32.mrf.mxu0
        %v765 = vadd.f32 0.0, %v764
        %766 = vmatmul.bf16.gmra.mxu0 %v681
        %v767 = vpop.f32.mrf.mxu0
        %v768 = vadd.f32 0.0, %v767
        %v769 = vpop.f32.mrf.mxu0
        %v770 = vadd.f32 0.0, %v769
        %771 = vdwg.mxu0
        %v776 = vunpack.c.l.b16 %v436
        %v777 = vunpack.c.l.b16 %v437
        %v778 = vunpack.c.l.b16 %v438
        %v779 = vunpack.c.l.b16 %v439
        %v780 = vpack.c.b16 %v777, %v776
        %v781 = vpack.c.b16 %v779, %v778
        %v785 = vsel %vm634, %v420, 0
        %v788 = vsel %vm634, %v421, 0
        %v791 = vsel %vm634, %v422, 0
        %v794 = vsel %vm634, %v423, 0
        %v797 = vsel %vm634, %v424, 0
        %v800 = vsel %vm634, %v425, 0
        %v803 = vsel %vm634, %v426, 0
        %v806 = vsel %vm634, %v427, 0
        %v809 = vsel %vm634, %v428, 0
        %v812 = vsel %vm634, %v429, 0
        %v815 = vsel %vm634, %v430, 0
        %v818 = vsel %vm634, %v431, 0
        %v821 = vsel %vm634, %v432, 0
        %v824 = vsel %vm634, %v433, 0
        %v827 = vsel %vm634, %v434, 0
        %v830 = vsel %vm634, %v435, 0
        %832 = vmatpush.bf16.msra.mxu0 0
        %833 = vmatpush.bf16.msra.mxu0 0
        %834 = vmatpush.bf16.msra.mxu0 0
        %835 = vmatpush.bf16.msra.mxu0 0
        %836 = vmatpush.bf16.msra.mxu0 0
        %837 = vmatpush.bf16.msra.mxu0 0
        %838 = vmatpush.bf16.msra.mxu0 %v781
        %839 = vmatpush.bf16.msra.mxu0 %v780
        %840 = vmatmul.bf16.gmra.mxu0 %v785
        %v841 = vpop.f32.mrf.mxu0
        %v842 = vadd.f32 %v693, %v841
        %v843 = vpop.f32.mrf.mxu0
        %v844 = vadd.f32 %v695, %v843
        %845 = vmatmul.bf16.gmra.mxu0 %v788
        %v846 = vpop.f32.mrf.mxu0
        %v847 = vadd.f32 %v698, %v846
        %v848 = vpop.f32.mrf.mxu0
        %v849 = vadd.f32 %v700, %v848
        %850 = vmatmul.bf16.gmra.mxu0 %v791
        %v851 = vpop.f32.mrf.mxu0
        %v852 = vadd.f32 %v703, %v851
        %v853 = vpop.f32.mrf.mxu0
        %v854 = vadd.f32 %v705, %v853
        %855 = vmatmul.bf16.gmra.mxu0 %v794
        %v856 = vpop.f32.mrf.mxu0
        %v857 = vadd.f32 %v708, %v856
        %v858 = vpop.f32.mrf.mxu0
        %v859 = vadd.f32 %v710, %v858
        %860 = vmatmul.bf16.gmra.mxu0 %v797
        %v861 = vpop.f32.mrf.mxu0
        %v862 = vadd.f32 %v713, %v861
        %v863 = vpop.f32.mrf.mxu0
        %v864 = vadd.f32 %v715, %v863
        %865 = vmatmul.bf16.gmra.mxu0 %v800
        %v866 = vpop.f32.mrf.mxu0
        %v867 = vadd.f32 %v718, %v866
        %v868 = vpop.f32.mrf.mxu0
        %v869 = vadd.f32 %v720, %v868
        %870 = vmatmul.bf16.gmra.mxu0 %v803
        %v871 = vpop.f32.mrf.mxu0
        %v872 = vadd.f32 %v723, %v871
        %v873 = vpop.f32.mrf.mxu0
        %v874 = vadd.f32 %v725, %v873
        %875 = vmatmul.bf16.gmra.mxu0 %v806
        %v876 = vpop.f32.mrf.mxu0
        %v877 = vadd.f32 %v728, %v876
        %v878 = vpop.f32.mrf.mxu0
        %v879 = vadd.f32 %v730, %v878
        %880 = vmatmul.bf16.gmra.mxu0 %v809
        %v881 = vpop.f32.mrf.mxu0
        %v882 = vadd.f32 %v733, %v881
        %v883 = vpop.f32.mrf.mxu0
        %v884 = vadd.f32 %v735, %v883
        %885 = vmatmul.bf16.gmra.mxu0 %v812
        %v886 = vpop.f32.mrf.mxu0
        %v887 = vadd.f32 %v738, %v886
        %v888 = vpop.f32.mrf.mxu0
        %v889 = vadd.f32 %v740, %v888
        %890 = vmatmul.bf16.gmra.mxu0 %v815
        %v891 = vpop.f32.mrf.mxu0
        %v892 = vadd.f32 %v743, %v891
        %v893 = vpop.f32.mrf.mxu0
        %v894 = vadd.f32 %v745, %v893
        %895 = vmatmul.bf16.gmra.mxu0 %v818
        %v896 = vpop.f32.mrf.mxu0
        %v897 = vadd.f32 %v748, %v896
        %v898 = vpop.f32.mrf.mxu0
        %v899 = vadd.f32 %v750, %v898
        %900 = vmatmul.bf16.gmra.mxu0 %v821
        %v901 = vpop.f32.mrf.mxu0
        %v902 = vadd.f32 %v753, %v901
        %v903 = vpop.f32.mrf.mxu0
        %v904 = vadd.f32 %v755, %v903
        %905 = vmatmul.bf16.gmra.mxu0 %v824
        %v906 = vpop.f32.mrf.mxu0
        %v907 = vadd.f32 %v758, %v906
        %v908 = vpop.f32.mrf.mxu0
        %v909 = vadd.f32 %v760, %v908
        %910 = vmatmul.bf16.gmra.mxu0 %v827
        %v911 = vpop.f32.mrf.mxu0
        %v912 = vadd.f32 %v763, %v911
        %v913 = vpop.f32.mrf.mxu0
        %v914 = vadd.f32 %v765, %v913
        %915 = vmatmul.bf16.gmra.mxu0 %v830
        %v916 = vpop.f32.mrf.mxu0
        %v917 = vadd.f32 %v768, %v916
        %v918 = vpop.f32.mrf.mxu0
        %v919 = vadd.f32 %v770, %v918
        %920 = vdwg.mxu0
        %vm921 = vcmask 1045504
        %v922 = vrot.slane %v366, 2
        %v923 = vrot.slane %v367, 2
        %v924 = vsel %vm921, %v922, %v923
        %v925 = vrot.slane %v368, 2
        %v926 = vsel %vm921, %v923, %v925
        %v927 = vrot.slane %v369, 2
        %v928 = vrot.slane %v370, 2
        %v929 = vsel %vm921, %v927, %v928
        %v930 = vrot.slane %v371, 2
        %v931 = vsel %vm921, %v928, %v930
        %v932 = vrot.slane %v372, 2
        %v933 = vrot.slane %v373, 2
        %v934 = vsel %vm921, %v932, %v933
        %v935 = vrot.slane %v374, 2
        %v936 = vsel %vm921, %v933, %v935
        %v937 = vrot.slane %v375, 2
        %v938 = vrot.slane %v376, 2
        %v939 = vsel %vm921, %v937, %v938
        %v940 = vrot.slane %v377, 2
        %v941 = vsel %vm921, %v938, %v940
        %v942 = vrot.slane %v378, 2
        %v943 = vrot.slane %v379, 2
        %v944 = vsel %vm921, %v942, %v943
        %v945 = vrot.slane %v380, 2
        %v946 = vsel %vm921, %v943, %v945
        %v947 = vrot.slane %v381, 2
        %v948 = vrot.slane %v382, 2
        %v949 = vsel %vm921, %v947, %v948
        %v950 = vrot.slane %v383, 2
        %v951 = vsel %vm921, %v948, %v950
        %v952 = vrot.slane %v384, 2
        %v953 = vrot.slane %v385, 2
        %v954 = vsel %vm921, %v952, %v953
        %v955 = vrot.slane %v386, 2
        %v956 = vsel %vm921, %v953, %v955
        %v957 = vrot.slane %v387, 2
        %v958 = vrot.slane %v388, 2
        %v959 = vsel %vm921, %v957, %v958
        %v960 = vrot.slane %v389, 2
        %v961 = vsel %vm921, %v958, %v960
        %v962 = vrot.slane %v390, 2
        %v963 = vrot.slane %v391, 2
        %v964 = vsel %vm921, %v962, %v963
        %v965 = vrot.slane %v392, 2
        %v966 = vsel %vm921, %v963, %v965
        %v967 = vrot.slane %v393, 2
        %v968 = vrot.slane %v394, 2
        %v969 = vsel %vm921, %v967, %v968
        %v970 = vrot.slane %v395, 2
        %v971 = vsel %vm921, %v968, %v970
        %v972 = vrot.slane %v396, 2
        %v973 = vrot.slane %v397, 2
        %v974 = vsel %vm921, %v972, %v973
        %v975 = vrot.slane %v398, 2
        %v976 = vsel %vm921, %v973, %v975
        %v977 = vrot.slane %v399, 2
        %v978 = vrot.slane %v400, 2
        %v979 = vsel %vm921, %v977, %v978
        %v980 = vrot.slane %v401, 2
        %v981 = vsel %vm921, %v978, %v980
        %v982 = vrot.slane %v402, 2
        %v983 = vrot.slane %v403, 2
        %v984 = vsel %vm921, %v982, %v983
        %v985 = vrot.slane %v404, 2
        %v986 = vsel %vm921, %v983, %v985
        %v987 = vrot.slane %v405, 2
        %v988 = vrot.slane %v406, 2
        %v989 = vsel %vm921, %v987, %v988
        %v990 = vrot.slane %v407, 2
        %v991 = vsel %vm921, %v988, %v990
        %v992 = vrot.slane %v408, 2
        %v993 = vrot.slane %v409, 2
        %v994 = vsel %vm921, %v992, %v993
        %v995 = vrot.slane %v410, 2
        %v996 = vsel %vm921, %v993, %v995
        %v997 = vrot.slane %v411, 2
        %v998 = vrot.slane %v412, 2
        %v999 = vsel %vm921, %v997, %v998
        %v1000 = vrot.slane %v413, 2
        %v1001 = vsel %vm921, %v998, %v1000
        %v1034 = vpack.c.bf16 %v926, %v924
        %v1035 = vpack.c.bf16 %v931, %v929
        %v1036 = vpack.c.bf16 %v936, %v934
        %v1037 = vpack.c.bf16 %v941, %v939
        %v1038 = vpack.c.bf16 %v946, %v944
        %v1039 = vpack.c.bf16 %v951, %v949
        %v1040 = vpack.c.bf16 %v956, %v954
        %v1041 = vpack.c.bf16 %v961, %v959
        %v1042 = vpack.c.bf16 %v966, %v964
        %v1043 = vpack.c.bf16 %v971, %v969
        %v1044 = vpack.c.bf16 %v976, %v974
        %v1045 = vpack.c.bf16 %v981, %v979
        %v1046 = vpack.c.bf16 %v986, %v984
        %v1047 = vpack.c.bf16 %v991, %v989
        %v1048 = vpack.c.bf16 %v996, %v994
        %v1049 = vpack.c.bf16 %v1001, %v999
        %s1050 = scalar_lea.vmem %s1, 32
        %v1051 = vld [vmem:[%s1050] sm:$0xf]
        %v1052 = vld [vmem:[%s1050 + $0x4] sm:$0xf]
        %v1053 = vld [vmem:[%s1050 + $0x8] sm:$0xf]
        %v1054 = vld [vmem:[%s1050 + $0xc] sm:$0xf]
        %v1059 = vunpack.c.l.b16 %v1051
        %v1060 = vunpack.c.l.b16 %v1052
        %v1061 = vunpack.c.l.b16 %v1053
        %v1062 = vunpack.c.l.b16 %v1054
        %v1063 = vpack.c.b16 %v1060, %v1059
        %v1064 = vpack.c.b16 %v1062, %v1061
        %v1068 = vsel %vm634, %v1034, 0
        %v1071 = vsel %vm634, %v1035, 0
        %v1074 = vsel %vm634, %v1036, 0
        %v1077 = vsel %vm634, %v1037, 0
        %v1080 = vsel %vm634, %v1038, 0
        %v1083 = vsel %vm634, %v1039, 0
        %v1086 = vsel %vm634, %v1040, 0
        %v1089 = vsel %vm634, %v1041, 0
        %v1092 = vsel %vm634, %v1042, 0
        %v1095 = vsel %vm634, %v1043, 0
        %v1098 = vsel %vm634, %v1044, 0
        %v1101 = vsel %vm634, %v1045, 0
        %v1104 = vsel %vm634, %v1046, 0
        %v1107 = vsel %vm634, %v1047, 0
        %v1110 = vsel %vm634, %v1048, 0
        %v1113 = vsel %vm634, %v1049, 0
        %1115 = vmatpush.bf16.msra.mxu0 0
        %1116 = vmatpush.bf16.msra.mxu0 0
        %1117 = vmatpush.bf16.msra.mxu0 0
        %1118 = vmatpush.bf16.msra.mxu0 0
        %1119 = vmatpush.bf16.msra.mxu0 0
        %1120 = vmatpush.bf16.msra.mxu0 0
        %1121 = vmatpush.bf16.msra.mxu0 %v1064
        %1122 = vmatpush.bf16.msra.mxu0 %v1063
        %1123 = vmatmul.bf16.gmra.mxu0 %v1068
        %v1124 = vpop.f32.mrf.mxu0
        %v1125 = vadd.f32 0.0, %v1124
        %v1126 = vpop.f32.mrf.mxu0
        %v1127 = vadd.f32 0.0, %v1126
        %1128 = vmatmul.bf16.gmra.mxu0 %v1071
        %v1129 = vpop.f32.mrf.mxu0
        %v1130 = vadd.f32 0.0, %v1129
        %v1131 = vpop.f32.mrf.mxu0
        %v1132 = vadd.f32 0.0, %v1131
        %1133 = vmatmul.bf16.gmra.mxu0 %v1074
        %v1134 = vpop.f32.mrf.mxu0
        %v1135 = vadd.f32 0.0, %v1134
        %v1136 = vpop.f32.mrf.mxu0
        %v1137 = vadd.f32 0.0, %v1136
        %1138 = vmatmul.bf16.gmra.mxu0 %v1077
        %v1139 = vpop.f32.mrf.mxu0
        %v1140 = vadd.f32 0.0, %v1139
        %v1141 = vpop.f32.mrf.mxu0
        %v1142 = vadd.f32 0.0, %v1141
        %1143 = vmatmul.bf16.gmra.mxu0 %v1080
        %v1144 = vpop.f32.mrf.mxu0
        %v1145 = vadd.f32 0.0, %v1144
        %v1146 = vpop.f32.mrf.mxu0
        %v1147 = vadd.f32 0.0, %v1146
        %1148 = vmatmul.bf16.gmra.mxu0 %v1083
        %v1149 = vpop.f32.mrf.mxu0
        %v1150 = vadd.f32 0.0, %v1149
        %v1151 = vpop.f32.mrf.mxu0
        %v1152 = vadd.f32 0.0, %v1151
        %1153 = vmatmul.bf16.gmra.mxu0 %v1086
        %v1154 = vpop.f32.mrf.mxu0
        %v1155 = vadd.f32 0.0, %v1154
        %v1156 = vpop.f32.mrf.mxu0
        %v1157 = vadd.f32 0.0, %v1156
        %1158 = vmatmul.bf16.gmra.mxu0 %v1089
        %v1159 = vpop.f32.mrf.mxu0
        %v1160 = vadd.f32 0.0, %v1159
        %v1161 = vpop.f32.mrf.mxu0
        %v1162 = vadd.f32 0.0, %v1161
        %1163 = vmatmul.bf16.gmra.mxu0 %v1092
        %v1164 = vpop.f32.mrf.mxu0
        %v1165 = vadd.f32 0.0, %v1164
        %v1166 = vpop.f32.mrf.mxu0
        %v1167 = vadd.f32 0.0, %v1166
        %1168 = vmatmul.bf16.gmra.mxu0 %v1095
        %v1169 = vpop.f32.mrf.mxu0
        %v1170 = vadd.f32 0.0, %v1169
        %v1171 = vpop.f32.mrf.mxu0
        %v1172 = vadd.f32 0.0, %v1171
        %1173 = vmatmul.bf16.gmra.mxu0 %v1098
        %v1174 = vpop.f32.mrf.mxu0
        %v1175 = vadd.f32 0.0, %v1174
        %v1176 = vpop.f32.mrf.mxu0
        %v1177 = vadd.f32 0.0, %v1176
        %1178 = vmatmul.bf16.gmra.mxu0 %v1101
        %v1179 = vpop.f32.mrf.mxu0
        %v1180 = vadd.f32 0.0, %v1179
        %v1181 = vpop.f32.mrf.mxu0
        %v1182 = vadd.f32 0.0, %v1181
        %1183 = vmatmul.bf16.gmra.mxu0 %v1104
        %v1184 = vpop.f32.mrf.mxu0
        %v1185 = vadd.f32 0.0, %v1184
        %v1186 = vpop.f32.mrf.mxu0
        %v1187 = vadd.f32 0.0, %v1186
        %1188 = vmatmul.bf16.gmra.mxu0 %v1107
        %v1189 = vpop.f32.mrf.mxu0
        %v1190 = vadd.f32 0.0, %v1189
        %v1191 = vpop.f32.mrf.mxu0
        %v1192 = vadd.f32 0.0, %v1191
        %1193 = vmatmul.bf16.gmra.mxu0 %v1110
        %v1194 = vpop.f32.mrf.mxu0
        %v1195 = vadd.f32 0.0, %v1194
        %v1196 = vpop.f32.mrf.mxu0
        %v1197 = vadd.f32 0.0, %v1196
        %1198 = vmatmul.bf16.gmra.mxu0 %v1113
        %v1199 = vpop.f32.mrf.mxu0
        %v1200 = vadd.f32 0.0, %v1199
        %v1201 = vpop.f32.mrf.mxu0
        %v1202 = vadd.f32 0.0, %v1201
        %1203 = vdwg.mxu0
        %v1204 = vadd.f32 %v842, %v1125
        %v1205 = vadd.f32 %v844, %v1127
        %v1206 = vadd.f32 %v847, %v1130
        %v1207 = vadd.f32 %v849, %v1132
        %v1208 = vadd.f32 %v852, %v1135
        %v1209 = vadd.f32 %v854, %v1137
        %v1210 = vadd.f32 %v857, %v1140
        %v1211 = vadd.f32 %v859, %v1142
        %v1212 = vadd.f32 %v862, %v1145
        %v1213 = vadd.f32 %v864, %v1147
        %v1214 = vadd.f32 %v867, %v1150
        %v1215 = vadd.f32 %v869, %v1152
        %v1216 = vadd.f32 %v872, %v1155
        %v1217 = vadd.f32 %v874, %v1157
        %v1218 = vadd.f32 %v877, %v1160
        %v1219 = vadd.f32 %v879, %v1162
        %v1220 = vadd.f32 %v882, %v1165
        %v1221 = vadd.f32 %v884, %v1167
        %v1222 = vadd.f32 %v887, %v1170
        %v1223 = vadd.f32 %v889, %v1172
        %v1224 = vadd.f32 %v892, %v1175
        %v1225 = vadd.f32 %v894, %v1177
        %v1226 = vadd.f32 %v897, %v1180
        %v1227 = vadd.f32 %v899, %v1182
        %v1228 = vadd.f32 %v902, %v1185
        %v1229 = vadd.f32 %v904, %v1187
        %v1230 = vadd.f32 %v907, %v1190
        %v1231 = vadd.f32 %v909, %v1192
        %v1232 = vadd.f32 %v912, %v1195
        %v1233 = vadd.f32 %v914, %v1197
        %v1234 = vadd.f32 %v917, %v1200
        %v1235 = vadd.f32 %v919, %v1202
        %v1236 = vpack.c.bf16 %v415, %v414
        %s1237 = scalar_lea.vmem %s1, 48
        %v1238 = vld [vmem:[%s1237] sm:$0xf]
        %v1239 = vld [vmem:[%s1237 + $0x4] sm:$0xf]
        %v1240 = vld [vmem:[%s1237 + $0x8] sm:$0xf]
        %v1241 = vld [vmem:[%s1237 + $0xc] sm:$0xf]
        %v1246 = vunpack.c.l.b16 %v1238
        %v1247 = vunpack.c.l.b16 %v1239
        %v1248 = vunpack.c.l.b16 %v1240
        %v1249 = vunpack.c.l.b16 %v1241
        %v1250 = vpack.c.b16 %v1247, %v1246
        %v1251 = vpack.c.b16 %v1249, %v1248
        %v1255 = vsel %vm634, %v1236, 0
        %1257 = vmatpush.bf16.msra.mxu0 0
        %1258 = vmatpush.bf16.msra.mxu0 0
        %1259 = vmatpush.bf16.msra.mxu0 0
        %1260 = vmatpush.bf16.msra.mxu0 0
        %1261 = vmatpush.bf16.msra.mxu0 0
        %1262 = vmatpush.bf16.msra.mxu0 0
        %1263 = vmatpush.bf16.msra.mxu0 %v1251
        %1264 = vmatpush.bf16.msra.mxu0 %v1250
        %1265 = vmatmul.bf16.gmra.mxu0 %v788
        %v1266 = vpop.f32.mrf.mxu0
        %v1267 = vadd.f32 0.0, %v1266
        %v1268 = vpop.f32.mrf.mxu0
        %v1269 = vadd.f32 0.0, %v1268
        %1270 = vmatmul.bf16.gmra.mxu0 %v791
        %v1271 = vpop.f32.mrf.mxu0
        %v1272 = vadd.f32 0.0, %v1271
        %v1273 = vpop.f32.mrf.mxu0
        %v1274 = vadd.f32 0.0, %v1273
        %1275 = vmatmul.bf16.gmra.mxu0 %v794
        %v1276 = vpop.f32.mrf.mxu0
        %v1277 = vadd.f32 0.0, %v1276
        %v1278 = vpop.f32.mrf.mxu0
        %v1279 = vadd.f32 0.0, %v1278
        %1280 = vmatmul.bf16.gmra.mxu0 %v797
        %v1281 = vpop.f32.mrf.mxu0
        %v1282 = vadd.f32 0.0, %v1281
        %v1283 = vpop.f32.mrf.mxu0
        %v1284 = vadd.f32 0.0, %v1283
        %1285 = vmatmul.bf16.gmra.mxu0 %v800
        %v1286 = vpop.f32.mrf.mxu0
        %v1287 = vadd.f32 0.0, %v1286
        %v1288 = vpop.f32.mrf.mxu0
        %v1289 = vadd.f32 0.0, %v1288
        %1290 = vmatmul.bf16.gmra.mxu0 %v803
        %v1291 = vpop.f32.mrf.mxu0
        %v1292 = vadd.f32 0.0, %v1291
        %v1293 = vpop.f32.mrf.mxu0
        %v1294 = vadd.f32 0.0, %v1293
        %1295 = vmatmul.bf16.gmra.mxu0 %v806
        %v1296 = vpop.f32.mrf.mxu0
        %v1297 = vadd.f32 0.0, %v1296
        %v1298 = vpop.f32.mrf.mxu0
        %v1299 = vadd.f32 0.0, %v1298
        %1300 = vmatmul.bf16.gmra.mxu0 %v809
        %v1301 = vpop.f32.mrf.mxu0
        %v1302 = vadd.f32 0.0, %v1301
        %v1303 = vpop.f32.mrf.mxu0
        %v1304 = vadd.f32 0.0, %v1303
        %1305 = vmatmul.bf16.gmra.mxu0 %v812
        %v1306 = vpop.f32.mrf.mxu0
        %v1307 = vadd.f32 0.0, %v1306
        %v1308 = vpop.f32.mrf.mxu0
        %v1309 = vadd.f32 0.0, %v1308
        %1310 = vmatmul.bf16.gmra.mxu0 %v815
        %v1311 = vpop.f32.mrf.mxu0
        %v1312 = vadd.f32 0.0, %v1311
        %v1313 = vpop.f32.mrf.mxu0
        %v1314 = vadd.f32 0.0, %v1313
        %1315 = vmatmul.bf16.gmra.mxu0 %v818
        %v1316 = vpop.f32.mrf.mxu0
        %v1317 = vadd.f32 0.0, %v1316
        %v1318 = vpop.f32.mrf.mxu0
        %v1319 = vadd.f32 0.0, %v1318
        %1320 = vmatmul.bf16.gmra.mxu0 %v821
        %v1321 = vpop.f32.mrf.mxu0
        %v1322 = vadd.f32 0.0, %v1321
        %v1323 = vpop.f32.mrf.mxu0
        %v1324 = vadd.f32 0.0, %v1323
        %1325 = vmatmul.bf16.gmra.mxu0 %v824
        %v1326 = vpop.f32.mrf.mxu0
        %v1327 = vadd.f32 0.0, %v1326
        %v1328 = vpop.f32.mrf.mxu0
        %v1329 = vadd.f32 0.0, %v1328
        %1330 = vmatmul.bf16.gmra.mxu0 %v827
        %v1331 = vpop.f32.mrf.mxu0
        %v1332 = vadd.f32 0.0, %v1331
        %v1333 = vpop.f32.mrf.mxu0
        %v1334 = vadd.f32 0.0, %v1333
        %1335 = vmatmul.bf16.gmra.mxu0 %v830
        %v1336 = vpop.f32.mrf.mxu0
        %v1337 = vadd.f32 0.0, %v1336
        %v1338 = vpop.f32.mrf.mxu0
        %v1339 = vadd.f32 0.0, %v1338
        %1340 = vmatmul.bf16.gmra.mxu0 %v1255
        %v1341 = vpop.f32.mrf.mxu0
        %v1342 = vadd.f32 0.0, %v1341
        %v1343 = vpop.f32.mrf.mxu0
        %v1344 = vadd.f32 0.0, %v1343
        %1345 = vdwg.mxu0
        %v1346 = vadd.f32 %v1204, %v1267
        %v1347 = vadd.f32 %v1205, %v1269
        %v1348 = vadd.f32 %v1206, %v1272
        %v1349 = vadd.f32 %v1207, %v1274
        %v1350 = vadd.f32 %v1208, %v1277
        %v1351 = vadd.f32 %v1209, %v1279
        %v1352 = vadd.f32 %v1210, %v1282
        %v1353 = vadd.f32 %v1211, %v1284
        %v1354 = vadd.f32 %v1212, %v1287
        %v1355 = vadd.f32 %v1213, %v1289
        %v1356 = vadd.f32 %v1214, %v1292
        %v1357 = vadd.f32 %v1215, %v1294
        %v1358 = vadd.f32 %v1216, %v1297
        %v1359 = vadd.f32 %v1217, %v1299
        %v1360 = vadd.f32 %v1218, %v1302
        %v1361 = vadd.f32 %v1219, %v1304
        %v1362 = vadd.f32 %v1220, %v1307
        %v1363 = vadd.f32 %v1221, %v1309
        %v1364 = vadd.f32 %v1222, %v1312
        %v1365 = vadd.f32 %v1223, %v1314
        %v1366 = vadd.f32 %v1224, %v1317
        %v1367 = vadd.f32 %v1225, %v1319
        %v1368 = vadd.f32 %v1226, %v1322
        %v1369 = vadd.f32 %v1227, %v1324
        %v1370 = vadd.f32 %v1228, %v1327
        %v1371 = vadd.f32 %v1229, %v1329
        %v1372 = vadd.f32 %v1230, %v1332
        %v1373 = vadd.f32 %v1231, %v1334
        %v1374 = vadd.f32 %v1232, %v1337
        %v1375 = vadd.f32 %v1233, %v1339
        %v1376 = vadd.f32 %v1234, %v1342
        %v1377 = vadd.f32 %v1235, %v1344
        %v1381 = vrot.slane %v414, 1
        %v1382 = vrot.slane %v415, 1
        %v1383 = vsel %vm488, %v1381, %v1382
        %v1384 = vrot.slane %v416, 1
        %v1385 = vsel %vm488, %v1382, %v1384
        %v1388 = vpack.c.bf16 %v1385, %v1383
        %s1389 = scalar_lea.vmem %s1, 64
        %v1390 = vld [vmem:[%s1389] sm:$0xf]
        %v1391 = vld [vmem:[%s1389 + $0x4] sm:$0xf]
        %v1392 = vld [vmem:[%s1389 + $0x8] sm:$0xf]
        %v1393 = vld [vmem:[%s1389 + $0xc] sm:$0xf]
        %v1398 = vunpack.c.l.b16 %v1390
        %v1399 = vunpack.c.l.b16 %v1391
        %v1400 = vunpack.c.l.b16 %v1392
        %v1401 = vunpack.c.l.b16 %v1393
        %v1402 = vpack.c.b16 %v1399, %v1398
        %v1403 = vpack.c.b16 %v1401, %v1400
        %v1407 = vsel %vm634, %v1388, 0
        %1409 = vmatpush.bf16.msra.mxu0 0
        %1410 = vmatpush.bf16.msra.mxu0 0
        %1411 = vmatpush.bf16.msra.mxu0 0
        %1412 = vmatpush.bf16.msra.mxu0 0
        %1413 = vmatpush.bf16.msra.mxu0 0
        %1414 = vmatpush.bf16.msra.mxu0 0
        %1415 = vmatpush.bf16.msra.mxu0 %v1403
        %1416 = vmatpush.bf16.msra.mxu0 %v1402
        %1417 = vmatmul.bf16.gmra.mxu0 %v639
        %v1418 = vpop.f32.mrf.mxu0
        %v1419 = vadd.f32 0.0, %v1418
        %v1420 = vpop.f32.mrf.mxu0
        %v1421 = vadd.f32 0.0, %v1420
        %1422 = vmatmul.bf16.gmra.mxu0 %v642
        %v1423 = vpop.f32.mrf.mxu0
        %v1424 = vadd.f32 0.0, %v1423
        %v1425 = vpop.f32.mrf.mxu0
        %v1426 = vadd.f32 0.0, %v1425
        %1427 = vmatmul.bf16.gmra.mxu0 %v645
        %v1428 = vpop.f32.mrf.mxu0
        %v1429 = vadd.f32 0.0, %v1428
        %v1430 = vpop.f32.mrf.mxu0
        %v1431 = vadd.f32 0.0, %v1430
        %1432 = vmatmul.bf16.gmra.mxu0 %v648
        %v1433 = vpop.f32.mrf.mxu0
        %v1434 = vadd.f32 0.0, %v1433
        %v1435 = vpop.f32.mrf.mxu0
        %v1436 = vadd.f32 0.0, %v1435
        %1437 = vmatmul.bf16.gmra.mxu0 %v651
        %v1438 = vpop.f32.mrf.mxu0
        %v1439 = vadd.f32 0.0, %v1438
        %v1440 = vpop.f32.mrf.mxu0
        %v1441 = vadd.f32 0.0, %v1440
        %1442 = vmatmul.bf16.gmra.mxu0 %v654
        %v1443 = vpop.f32.mrf.mxu0
        %v1444 = vadd.f32 0.0, %v1443
        %v1445 = vpop.f32.mrf.mxu0
        %v1446 = vadd.f32 0.0, %v1445
        %1447 = vmatmul.bf16.gmra.mxu0 %v657
        %v1448 = vpop.f32.mrf.mxu0
        %v1449 = vadd.f32 0.0, %v1448
        %v1450 = vpop.f32.mrf.mxu0
        %v1451 = vadd.f32 0.0, %v1450
        %1452 = vmatmul.bf16.gmra.mxu0 %v660
        %v1453 = vpop.f32.mrf.mxu0
        %v1454 = vadd.f32 0.0, %v1453
        %v1455 = vpop.f32.mrf.mxu0
        %v1456 = vadd.f32 0.0, %v1455
        %1457 = vmatmul.bf16.gmra.mxu0 %v663
        %v1458 = vpop.f32.mrf.mxu0
        %v1459 = vadd.f32 0.0, %v1458
        %v1460 = vpop.f32.mrf.mxu0
        %v1461 = vadd.f32 0.0, %v1460
        %1462 = vmatmul.bf16.gmra.mxu0 %v666
        %v1463 = vpop.f32.mrf.mxu0
        %v1464 = vadd.f32 0.0, %v1463
        %v1465 = vpop.f32.mrf.mxu0
        %v1466 = vadd.f32 0.0, %v1465
        %1467 = vmatmul.bf16.gmra.mxu0 %v669
        %v1468 = vpop.f32.mrf.mxu0
        %v1469 = vadd.f32 0.0, %v1468
        %v1470 = vpop.f32.mrf.mxu0
        %v1471 = vadd.f32 0.0, %v1470
        %1472 = vmatmul.bf16.gmra.mxu0 %v672
        %v1473 = vpop.f32.mrf.mxu0
        %v1474 = vadd.f32 0.0, %v1473
        %v1475 = vpop.f32.mrf.mxu0
        %v1476 = vadd.f32 0.0, %v1475
        %1477 = vmatmul.bf16.gmra.mxu0 %v675
        %v1478 = vpop.f32.mrf.mxu0
        %v1479 = vadd.f32 0.0, %v1478
        %v1480 = vpop.f32.mrf.mxu0
        %v1481 = vadd.f32 0.0, %v1480
        %1482 = vmatmul.bf16.gmra.mxu0 %v678
        %v1483 = vpop.f32.mrf.mxu0
        %v1484 = vadd.f32 0.0, %v1483
        %v1485 = vpop.f32.mrf.mxu0
        %v1486 = vadd.f32 0.0, %v1485
        %1487 = vmatmul.bf16.gmra.mxu0 %v681
        %v1488 = vpop.f32.mrf.mxu0
        %v1489 = vadd.f32 0.0, %v1488
        %v1490 = vpop.f32.mrf.mxu0
        %v1491 = vadd.f32 0.0, %v1490
        %1492 = vmatmul.bf16.gmra.mxu0 %v1407
        %v1493 = vpop.f32.mrf.mxu0
        %v1494 = vadd.f32 0.0, %v1493
        %v1495 = vpop.f32.mrf.mxu0
        %v1496 = vadd.f32 0.0, %v1495
        %1497 = vdwg.mxu0
        %v1498 = vadd.f32 %v1346, %v1419
        %v1499 = vadd.f32 %v1347, %v1421
        %v1500 = vadd.f32 %v1348, %v1424
        %v1501 = vadd.f32 %v1349, %v1426
        %v1502 = vadd.f32 %v1350, %v1429
        %v1503 = vadd.f32 %v1351, %v1431
        %v1504 = vadd.f32 %v1352, %v1434
        %v1505 = vadd.f32 %v1353, %v1436
        %v1506 = vadd.f32 %v1354, %v1439
        %v1507 = vadd.f32 %v1355, %v1441
        %v1508 = vadd.f32 %v1356, %v1444
        %v1509 = vadd.f32 %v1357, %v1446
        %v1510 = vadd.f32 %v1358, %v1449
        %v1511 = vadd.f32 %v1359, %v1451
        %v1512 = vadd.f32 %v1360, %v1454
        %v1513 = vadd.f32 %v1361, %v1456
        %v1514 = vadd.f32 %v1362, %v1459
        %v1515 = vadd.f32 %v1363, %v1461
        %v1516 = vadd.f32 %v1364, %v1464
        %v1517 = vadd.f32 %v1365, %v1466
        %v1518 = vadd.f32 %v1366, %v1469
        %v1519 = vadd.f32 %v1367, %v1471
        %v1520 = vadd.f32 %v1368, %v1474
        %v1521 = vadd.f32 %v1369, %v1476
        %v1522 = vadd.f32 %v1370, %v1479
        %v1523 = vadd.f32 %v1371, %v1481
        %v1524 = vadd.f32 %v1372, %v1484
        %v1525 = vadd.f32 %v1373, %v1486
        %v1526 = vadd.f32 %v1374, %v1489
        %v1527 = vadd.f32 %v1375, %v1491
        %v1528 = vadd.f32 %v1376, %v1494
        %v1529 = vadd.f32 %v1377, %v1496
        %v1530 = vrot.slane %v414, 2
        %v1531 = vrot.slane %v415, 2
        %v1532 = vsel %vm921, %v1530, %v1531
        %v1533 = vrot.slane %v416, 2
        %v1534 = vsel %vm921, %v1531, %v1533
        %v1537 = vpack.c.bf16 %v1534, %v1532
        %s1538 = scalar_lea.vmem %s1, 80
        %v1539 = vld [vmem:[%s1538] sm:$0xf]
        %v1540 = vld [vmem:[%s1538 + $0x4] sm:$0xf]
        %v1541 = vld [vmem:[%s1538 + $0x8] sm:$0xf]
        %v1542 = vld [vmem:[%s1538 + $0xc] sm:$0xf]
        %v1547 = vunpack.c.l.b16 %v1539
        %v1548 = vunpack.c.l.b16 %v1540
        %v1549 = vunpack.c.l.b16 %v1541
        %v1550 = vunpack.c.l.b16 %v1542
        %v1551 = vpack.c.b16 %v1548, %v1547
        %v1552 = vpack.c.b16 %v1550, %v1549
        %v1556 = vsel %vm634, %v1537, 0
        %1558 = vmatpush.bf16.msra.mxu0 0
        %1559 = vmatpush.bf16.msra.mxu0 0
        %1560 = vmatpush.bf16.msra.mxu0 0
        %1561 = vmatpush.bf16.msra.mxu0 0
        %1562 = vmatpush.bf16.msra.mxu0 0
        %1563 = vmatpush.bf16.msra.mxu0 0
        %1564 = vmatpush.bf16.msra.mxu0 %v1552
        %1565 = vmatpush.bf16.msra.mxu0 %v1551
        %1566 = vmatmul.bf16.gmra.mxu0 %v1071
        %v1567 = vpop.f32.mrf.mxu0
        %v1568 = vadd.f32 0.0, %v1567
        %v1569 = vpop.f32.mrf.mxu0
        %v1570 = vadd.f32 0.0, %v1569
        %1571 = vmatmul.bf16.gmra.mxu0 %v1074
        %v1572 = vpop.f32.mrf.mxu0
        %v1573 = vadd.f32 0.0, %v1572
        %v1574 = vpop.f32.mrf.mxu0
        %v1575 = vadd.f32 0.0, %v1574
        %1576 = vmatmul.bf16.gmra.mxu0 %v1077
        %v1577 = vpop.f32.mrf.mxu0
        %v1578 = vadd.f32 0.0, %v1577
        %v1579 = vpop.f32.mrf.mxu0
        %v1580 = vadd.f32 0.0, %v1579
        %1581 = vmatmul.bf16.gmra.mxu0 %v1080
        %v1582 = vpop.f32.mrf.mxu0
        %v1583 = vadd.f32 0.0, %v1582
        %v1584 = vpop.f32.mrf.mxu0
        %v1585 = vadd.f32 0.0, %v1584
        %1586 = vmatmul.bf16.gmra.mxu0 %v1083
        %v1587 = vpop.f32.mrf.mxu0
        %v1588 = vadd.f32 0.0, %v1587
        %v1589 = vpop.f32.mrf.mxu0
        %v1590 = vadd.f32 0.0, %v1589
        %1591 = vmatmul.bf16.gmra.mxu0 %v1086
        %v1592 = vpop.f32.mrf.mxu0
        %v1593 = vadd.f32 0.0, %v1592
        %v1594 = vpop.f32.mrf.mxu0
        %v1595 = vadd.f32 0.0, %v1594
        %1596 = vmatmul.bf16.gmra.mxu0 %v1089
        %v1597 = vpop.f32.mrf.mxu0
        %v1598 = vadd.f32 0.0, %v1597
        %v1599 = vpop.f32.mrf.mxu0
        %v1600 = vadd.f32 0.0, %v1599
        %1601 = vmatmul.bf16.gmra.mxu0 %v1092
        %v1602 = vpop.f32.mrf.mxu0
        %v1603 = vadd.f32 0.0, %v1602
        %v1604 = vpop.f32.mrf.mxu0
        %v1605 = vadd.f32 0.0, %v1604
        %1606 = vmatmul.bf16.gmra.mxu0 %v1095
        %v1607 = vpop.f32.mrf.mxu0
        %v1608 = vadd.f32 0.0, %v1607
        %v1609 = vpop.f32.mrf.mxu0
        %v1610 = vadd.f32 0.0, %v1609
        %1611 = vmatmul.bf16.gmra.mxu0 %v1098
        %v1612 = vpop.f32.mrf.mxu0
        %v1613 = vadd.f32 0.0, %v1612
        %v1614 = vpop.f32.mrf.mxu0
        %v1615 = vadd.f32 0.0, %v1614
        %1616 = vmatmul.bf16.gmra.mxu0 %v1101
        %v1617 = vpop.f32.mrf.mxu0
        %v1618 = vadd.f32 0.0, %v1617
        %v1619 = vpop.f32.mrf.mxu0
        %v1620 = vadd.f32 0.0, %v1619
        %1621 = vmatmul.bf16.gmra.mxu0 %v1104
        %v1622 = vpop.f32.mrf.mxu0
        %v1623 = vadd.f32 0.0, %v1622
        %v1624 = vpop.f32.mrf.mxu0
        %v1625 = vadd.f32 0.0, %v1624
        %1626 = vmatmul.bf16.gmra.mxu0 %v1107
        %v1627 = vpop.f32.mrf.mxu0
        %v1628 = vadd.f32 0.0, %v1627
        %v1629 = vpop.f32.mrf.mxu0
        %v1630 = vadd.f32 0.0, %v1629
        %1631 = vmatmul.bf16.gmra.mxu0 %v1110
        %v1632 = vpop.f32.mrf.mxu0
        %v1633 = vadd.f32 0.0, %v1632
        %v1634 = vpop.f32.mrf.mxu0
        %v1635 = vadd.f32 0.0, %v1634
        %1636 = vmatmul.bf16.gmra.mxu0 %v1113
        %v1637 = vpop.f32.mrf.mxu0
        %v1638 = vadd.f32 0.0, %v1637
        %v1639 = vpop.f32.mrf.mxu0
        %v1640 = vadd.f32 0.0, %v1639
        %1641 = vmatmul.bf16.gmra.mxu0 %v1556
        %v1642 = vpop.f32.mrf.mxu0
        %v1643 = vadd.f32 0.0, %v1642
        %v1644 = vpop.f32.mrf.mxu0
        %v1645 = vadd.f32 0.0, %v1644
        %1646 = vdwg.mxu0
        %v1647 = vadd.f32 %v1498, %v1568
        %v1648 = vadd.f32 %v1499, %v1570
        %v1649 = vadd.f32 %v1500, %v1573
        %v1650 = vadd.f32 %v1501, %v1575
        %v1651 = vadd.f32 %v1502, %v1578
        %v1652 = vadd.f32 %v1503, %v1580
        %v1653 = vadd.f32 %v1504, %v1583
        %v1654 = vadd.f32 %v1505, %v1585
        %v1655 = vadd.f32 %v1506, %v1588
        %v1656 = vadd.f32 %v1507, %v1590
        %v1657 = vadd.f32 %v1508, %v1593
        %v1658 = vadd.f32 %v1509, %v1595
        %v1659 = vadd.f32 %v1510, %v1598
        %v1660 = vadd.f32 %v1511, %v1600
        %v1661 = vadd.f32 %v1512, %v1603
        %v1662 = vadd.f32 %v1513, %v1605
        %v1663 = vadd.f32 %v1514, %v1608
        %v1664 = vadd.f32 %v1515, %v1610
        %v1665 = vadd.f32 %v1516, %v1613
        %v1666 = vadd.f32 %v1517, %v1615
        %v1667 = vadd.f32 %v1518, %v1618
        %v1668 = vadd.f32 %v1519, %v1620
        %v1669 = vadd.f32 %v1520, %v1623
        %v1670 = vadd.f32 %v1521, %v1625
        %v1671 = vadd.f32 %v1522, %v1628
        %v1672 = vadd.f32 %v1523, %v1630
        %v1673 = vadd.f32 %v1524, %v1633
        %v1674 = vadd.f32 %v1525, %v1635
        %v1675 = vadd.f32 %v1526, %v1638
        %v1676 = vadd.f32 %v1527, %v1640
        %v1677 = vadd.f32 %v1528, %v1643
        %v1678 = vadd.f32 %v1529, %v1645
        %v1679 = vpack.c.bf16 %v418, %v417
        %s1680 = scalar_lea.vmem %s1, 96
        %v1681 = vld [vmem:[%s1680] sm:$0xf]
        %v1682 = vld [vmem:[%s1680 + $0x4] sm:$0xf]
        %v1683 = vld [vmem:[%s1680 + $0x8] sm:$0xf]
        %v1684 = vld [vmem:[%s1680 + $0xc] sm:$0xf]
        %v1689 = vunpack.c.l.b16 %v1681
        %v1690 = vunpack.c.l.b16 %v1682
        %v1691 = vunpack.c.l.b16 %v1683
        %v1692 = vunpack.c.l.b16 %v1684
        %v1693 = vpack.c.b16 %v1690, %v1689
        %v1694 = vpack.c.b16 %v1692, %v1691
        %v1698 = vsel %vm634, %v1679, 0
        %1700 = vmatpush.bf16.msra.mxu0 0
        %1701 = vmatpush.bf16.msra.mxu0 0
        %1702 = vmatpush.bf16.msra.mxu0 0
        %1703 = vmatpush.bf16.msra.mxu0 0
        %1704 = vmatpush.bf16.msra.mxu0 0
        %1705 = vmatpush.bf16.msra.mxu0 0
        %1706 = vmatpush.bf16.msra.mxu0 %v1694
        %1707 = vmatpush.bf16.msra.mxu0 %v1693
        %1708 = vmatmul.bf16.gmra.mxu0 %v791
        %v1709 = vpop.f32.mrf.mxu0
        %v1710 = vadd.f32 0.0, %v1709
        %v1711 = vpop.f32.mrf.mxu0
        %v1712 = vadd.f32 0.0, %v1711
        %1713 = vmatmul.bf16.gmra.mxu0 %v794
        %v1714 = vpop.f32.mrf.mxu0
        %v1715 = vadd.f32 0.0, %v1714
        %v1716 = vpop.f32.mrf.mxu0
        %v1717 = vadd.f32 0.0, %v1716
        %1718 = vmatmul.bf16.gmra.mxu0 %v797
        %v1719 = vpop.f32.mrf.mxu0
        %v1720 = vadd.f32 0.0, %v1719
        %v1721 = vpop.f32.mrf.mxu0
        %v1722 = vadd.f32 0.0, %v1721
        %1723 = vmatmul.bf16.gmra.mxu0 %v800
        %v1724 = vpop.f32.mrf.mxu0
        %v1725 = vadd.f32 0.0, %v1724
        %v1726 = vpop.f32.mrf.mxu0
        %v1727 = vadd.f32 0.0, %v1726
        %1728 = vmatmul.bf16.gmra.mxu0 %v803
        %v1729 = vpop.f32.mrf.mxu0
        %v1730 = vadd.f32 0.0, %v1729
        %v1731 = vpop.f32.mrf.mxu0
        %v1732 = vadd.f32 0.0, %v1731
        %1733 = vmatmul.bf16.gmra.mxu0 %v806
        %v1734 = vpop.f32.mrf.mxu0
        %v1735 = vadd.f32 0.0, %v1734
        %v1736 = vpop.f32.mrf.mxu0
        %v1737 = vadd.f32 0.0, %v1736
        %1738 = vmatmul.bf16.gmra.mxu0 %v809
        %v1739 = vpop.f32.mrf.mxu0
        %v1740 = vadd.f32 0.0, %v1739
        %v1741 = vpop.f32.mrf.mxu0
        %v1742 = vadd.f32 0.0, %v1741
        %1743 = vmatmul.bf16.gmra.mxu0 %v812
        %v1744 = vpop.f32.mrf.mxu0
        %v1745 = vadd.f32 0.0, %v1744
        %v1746 = vpop.f32.mrf.mxu0
        %v1747 = vadd.f32 0.0, %v1746
        %1748 = vmatmul.bf16.gmra.mxu0 %v815
        %v1749 = vpop.f32.mrf.mxu0
        %v1750 = vadd.f32 0.0, %v1749
        %v1751 = vpop.f32.mrf.mxu0
        %v1752 = vadd.f32 0.0, %v1751
        %1753 = vmatmul.bf16.gmra.mxu0 %v818
        %v1754 = vpop.f32.mrf.mxu0
        %v1755 = vadd.f32 0.0, %v1754
        %v1756 = vpop.f32.mrf.mxu0
        %v1757 = vadd.f32 0.0, %v1756
        %1758 = vmatmul.bf16.gmra.mxu0 %v821
        %v1759 = vpop.f32.mrf.mxu0
        %v1760 = vadd.f32 0.0, %v1759
        %v1761 = vpop.f32.mrf.mxu0
        %v1762 = vadd.f32 0.0, %v1761
        %1763 = vmatmul.bf16.gmra.mxu0 %v824
        %v1764 = vpop.f32.mrf.mxu0
        %v1765 = vadd.f32 0.0, %v1764
        %v1766 = vpop.f32.mrf.mxu0
        %v1767 = vadd.f32 0.0, %v1766
        %1768 = vmatmul.bf16.gmra.mxu0 %v827
        %v1769 = vpop.f32.mrf.mxu0
        %v1770 = vadd.f32 0.0, %v1769
        %v1771 = vpop.f32.mrf.mxu0
        %v1772 = vadd.f32 0.0, %v1771
        %1773 = vmatmul.bf16.gmra.mxu0 %v830
        %v1774 = vpop.f32.mrf.mxu0
        %v1775 = vadd.f32 0.0, %v1774
        %v1776 = vpop.f32.mrf.mxu0
        %v1777 = vadd.f32 0.0, %v1776
        %1778 = vmatmul.bf16.gmra.mxu0 %v1255
        %v1779 = vpop.f32.mrf.mxu0
        %v1780 = vadd.f32 0.0, %v1779
        %v1781 = vpop.f32.mrf.mxu0
        %v1782 = vadd.f32 0.0, %v1781
        %1783 = vmatmul.bf16.gmra.mxu0 %v1698
        %v1784 = vpop.f32.mrf.mxu0
        %v1785 = vadd.f32 0.0, %v1784
        %v1786 = vpop.f32.mrf.mxu0
        %v1787 = vadd.f32 0.0, %v1786
        %1788 = vdwg.mxu0
        %v1789 = vadd.f32 %v1647, %v1710
        %v1790 = vadd.f32 %v1648, %v1712
        %v1791 = vadd.f32 %v1649, %v1715
        %v1792 = vadd.f32 %v1650, %v1717
        %v1793 = vadd.f32 %v1651, %v1720
        %v1794 = vadd.f32 %v1652, %v1722
        %v1795 = vadd.f32 %v1653, %v1725
        %v1796 = vadd.f32 %v1654, %v1727
        %v1797 = vadd.f32 %v1655, %v1730
        %v1798 = vadd.f32 %v1656, %v1732
        %v1799 = vadd.f32 %v1657, %v1735
        %v1800 = vadd.f32 %v1658, %v1737
        %v1801 = vadd.f32 %v1659, %v1740
        %v1802 = vadd.f32 %v1660, %v1742
        %v1803 = vadd.f32 %v1661, %v1745
        %v1804 = vadd.f32 %v1662, %v1747
        %v1805 = vadd.f32 %v1663, %v1750
        %v1806 = vadd.f32 %v1664, %v1752
        %v1807 = vadd.f32 %v1665, %v1755
        %v1808 = vadd.f32 %v1666, %v1757
        %v1809 = vadd.f32 %v1667, %v1760
        %v1810 = vadd.f32 %v1668, %v1762
        %v1811 = vadd.f32 %v1669, %v1765
        %v1812 = vadd.f32 %v1670, %v1767
        %v1813 = vadd.f32 %v1671, %v1770
        %v1814 = vadd.f32 %v1672, %v1772
        %v1815 = vadd.f32 %v1673, %v1775
        %v1816 = vadd.f32 %v1674, %v1777
        %v1817 = vadd.f32 %v1675, %v1780
        %v1818 = vadd.f32 %v1676, %v1782
        %v1819 = vadd.f32 %v1677, %v1785
        %v1820 = vadd.f32 %v1678, %v1787
        %v1824 = vrot.slane %v417, 1
        %v1825 = vrot.slane %v418, 1
        %v1826 = vsel %vm488, %v1824, %v1825
        %v1827 = vrot.slane %v419, 1
        %v1828 = vsel %vm488, %v1825, %v1827
        %v1831 = vpack.c.bf16 %v1828, %v1826
        %s1832 = scalar_lea.vmem %s1, 112
        %v1833 = vld [vmem:[%s1832] sm:$0xf]
        %v1834 = vld [vmem:[%s1832 + $0x4] sm:$0xf]
        %v1835 = vld [vmem:[%s1832 + $0x8] sm:$0xf]
        %v1836 = vld [vmem:[%s1832 + $0xc] sm:$0xf]
        %v1841 = vunpack.c.l.b16 %v1833
        %v1842 = vunpack.c.l.b16 %v1834
        %v1843 = vunpack.c.l.b16 %v1835
        %v1844 = vunpack.c.l.b16 %v1836
        %v1845 = vpack.c.b16 %v1842, %v1841
        %v1846 = vpack.c.b16 %v1844, %v1843
        %v1850 = vsel %vm634, %v1831, 0
        %1852 = vmatpush.bf16.msra.mxu0 0
        %1853 = vmatpush.bf16.msra.mxu0 0
        %1854 = vmatpush.bf16.msra.mxu0 0
        %1855 = vmatpush.bf16.msra.mxu0 0
        %1856 = vmatpush.bf16.msra.mxu0 0
        %1857 = vmatpush.bf16.msra.mxu0 0
        %1858 = vmatpush.bf16.msra.mxu0 %v1846
        %1859 = vmatpush.bf16.msra.mxu0 %v1845
        %1860 = vmatmul.bf16.gmra.mxu0 %v642
        %v1861 = vpop.f32.mrf.mxu0
        %v1862 = vadd.f32 0.0, %v1861
        %v1863 = vpop.f32.mrf.mxu0
        %v1864 = vadd.f32 0.0, %v1863
        %1865 = vmatmul.bf16.gmra.mxu0 %v645
        %v1866 = vpop.f32.mrf.mxu0
        %v1867 = vadd.f32 0.0, %v1866
        %v1868 = vpop.f32.mrf.mxu0
        %v1869 = vadd.f32 0.0, %v1868
        %1870 = vmatmul.bf16.gmra.mxu0 %v648
        %v1871 = vpop.f32.mrf.mxu0
        %v1872 = vadd.f32 0.0, %v1871
        %v1873 = vpop.f32.mrf.mxu0
        %v1874 = vadd.f32 0.0, %v1873
        %1875 = vmatmul.bf16.gmra.mxu0 %v651
        %v1876 = vpop.f32.mrf.mxu0
        %v1877 = vadd.f32 0.0, %v1876
        %v1878 = vpop.f32.mrf.mxu0
        %v1879 = vadd.f32 0.0, %v1878
        %1880 = vmatmul.bf16.gmra.mxu0 %v654
        %v1881 = vpop.f32.mrf.mxu0
        %v1882 = vadd.f32 0.0, %v1881
        %v1883 = vpop.f32.mrf.mxu0
        %v1884 = vadd.f32 0.0, %v1883
        %1885 = vmatmul.bf16.gmra.mxu0 %v657
        %v1886 = vpop.f32.mrf.mxu0
        %v1887 = vadd.f32 0.0, %v1886
        %v1888 = vpop.f32.mrf.mxu0
        %v1889 = vadd.f32 0.0, %v1888
        %1890 = vmatmul.bf16.gmra.mxu0 %v660
        %v1891 = vpop.f32.mrf.mxu0
        %v1892 = vadd.f32 0.0, %v1891
        %v1893 = vpop.f32.mrf.mxu0
        %v1894 = vadd.f32 0.0, %v1893
        %1895 = vmatmul.bf16.gmra.mxu0 %v663
        %v1896 = vpop.f32.mrf.mxu0
        %v1897 = vadd.f32 0.0, %v1896
        %v1898 = vpop.f32.mrf.mxu0
        %v1899 = vadd.f32 0.0, %v1898
        %1900 = vmatmul.bf16.gmra.mxu0 %v666
        %v1901 = vpop.f32.mrf.mxu0
        %v1902 = vadd.f32 0.0, %v1901
        %v1903 = vpop.f32.mrf.mxu0
        %v1904 = vadd.f32 0.0, %v1903
        %1905 = vmatmul.bf16.gmra.mxu0 %v669
        %v1906 = vpop.f32.mrf.mxu0
        %v1907 = vadd.f32 0.0, %v1906
        %v1908 = vpop.f32.mrf.mxu0
        %v1909 = vadd.f32 0.0, %v1908
        %1910 = vmatmul.bf16.gmra.mxu0 %v672
        %v1911 = vpop.f32.mrf.mxu0
        %v1912 = vadd.f32 0.0, %v1911
        %v1913 = vpop.f32.mrf.mxu0
        %v1914 = vadd.f32 0.0, %v1913
        %1915 = vmatmul.bf16.gmra.mxu0 %v675
        %v1916 = vpop.f32.mrf.mxu0
        %v1917 = vadd.f32 0.0, %v1916
        %v1918 = vpop.f32.mrf.mxu0
        %v1919 = vadd.f32 0.0, %v1918
        %1920 = vmatmul.bf16.gmra.mxu0 %v678
        %v1921 = vpop.f32.mrf.mxu0
        %v1922 = vadd.f32 0.0, %v1921
        %v1923 = vpop.f32.mrf.mxu0
        %v1924 = vadd.f32 0.0, %v1923
        %1925 = vmatmul.bf16.gmra.mxu0 %v681
        %v1926 = vpop.f32.mrf.mxu0
        %v1927 = vadd.f32 0.0, %v1926
        %v1928 = vpop.f32.mrf.mxu0
        %v1929 = vadd.f32 0.0, %v1928
        %1930 = vmatmul.bf16.gmra.mxu0 %v1407
        %v1931 = vpop.f32.mrf.mxu0
        %v1932 = vadd.f32 0.0, %v1931
        %v1933 = vpop.f32.mrf.mxu0
        %v1934 = vadd.f32 0.0, %v1933
        %1935 = vmatmul.bf16.gmra.mxu0 %v1850
        %v1936 = vpop.f32.mrf.mxu0
        %v1937 = vadd.f32 0.0, %v1936
        %v1938 = vpop.f32.mrf.mxu0
        %v1939 = vadd.f32 0.0, %v1938
        %1940 = vdwg.mxu0
        %v1941 = vadd.f32 %v1789, %v1862
        %v1942 = vadd.f32 %v1790, %v1864
        %v1943 = vadd.f32 %v1791, %v1867
        %v1944 = vadd.f32 %v1792, %v1869
        %v1945 = vadd.f32 %v1793, %v1872
        %v1946 = vadd.f32 %v1794, %v1874
        %v1947 = vadd.f32 %v1795, %v1877
        %v1948 = vadd.f32 %v1796, %v1879
        %v1949 = vadd.f32 %v1797, %v1882
        %v1950 = vadd.f32 %v1798, %v1884
        %v1951 = vadd.f32 %v1799, %v1887
        %v1952 = vadd.f32 %v1800, %v1889
        %v1953 = vadd.f32 %v1801, %v1892
        %v1954 = vadd.f32 %v1802, %v1894
        %v1955 = vadd.f32 %v1803, %v1897
        %v1956 = vadd.f32 %v1804, %v1899
        %v1957 = vadd.f32 %v1805, %v1902
        %v1958 = vadd.f32 %v1806, %v1904
        %v1959 = vadd.f32 %v1807, %v1907
        %v1960 = vadd.f32 %v1808, %v1909
        %v1961 = vadd.f32 %v1809, %v1912
        %v1962 = vadd.f32 %v1810, %v1914
        %v1963 = vadd.f32 %v1811, %v1917
        %v1964 = vadd.f32 %v1812, %v1919
        %v1965 = vadd.f32 %v1813, %v1922
        %v1966 = vadd.f32 %v1814, %v1924
        %v1967 = vadd.f32 %v1815, %v1927
        %v1968 = vadd.f32 %v1816, %v1929
        %v1969 = vadd.f32 %v1817, %v1932
        %v1970 = vadd.f32 %v1818, %v1934
        %v1971 = vadd.f32 %v1819, %v1937
        %v1972 = vadd.f32 %v1820, %v1939
        %v1973 = vrot.slane %v417, 2
        %v1974 = vrot.slane %v418, 2
        %v1975 = vsel %vm921, %v1973, %v1974
        %v1976 = vrot.slane %v419, 2
        %v1977 = vsel %vm921, %v1974, %v1976
        %v1980 = vpack.c.bf16 %v1977, %v1975
        %s1981 = scalar_lea.vmem %s1, 128
        %v1982 = vld [vmem:[%s1981] sm:$0xf]
        %v1983 = vld [vmem:[%s1981 + $0x4] sm:$0xf]
        %v1984 = vld [vmem:[%s1981 + $0x8] sm:$0xf]
        %v1985 = vld [vmem:[%s1981 + $0xc] sm:$0xf]
        %v1990 = vunpack.c.l.b16 %v1982
        %v1991 = vunpack.c.l.b16 %v1983
        %v1992 = vunpack.c.l.b16 %v1984
        %v1993 = vunpack.c.l.b16 %v1985
        %v1994 = vpack.c.b16 %v1991, %v1990
        %v1995 = vpack.c.b16 %v1993, %v1992
        %v1999 = vsel %vm634, %v1980, 0
        %2001 = vmatpush.bf16.msra.mxu0 0
        %2002 = vmatpush.bf16.msra.mxu0 0
        %2003 = vmatpush.bf16.msra.mxu0 0
        %2004 = vmatpush.bf16.msra.mxu0 0
        %2005 = vmatpush.bf16.msra.mxu0 0
        %2006 = vmatpush.bf16.msra.mxu0 0
        %2007 = vmatpush.bf16.msra.mxu0 %v1995
        %2008 = vmatpush.bf16.msra.mxu0 %v1994
        %2009 = vmatmul.bf16.gmra.mxu0 %v1074
        %v2010 = vpop.f32.mrf.mxu0
        %v2011 = vadd.f32 0.0, %v2010
        %v2012 = vpop.f32.mrf.mxu0
        %v2013 = vadd.f32 0.0, %v2012
        %2014 = vmatmul.bf16.gmra.mxu0 %v1077
        %v2015 = vpop.f32.mrf.mxu0
        %v2016 = vadd.f32 0.0, %v2015
        %v2017 = vpop.f32.mrf.mxu0
        %v2018 = vadd.f32 0.0, %v2017
        %2019 = vmatmul.bf16.gmra.mxu0 %v1080
        %v2020 = vpop.f32.mrf.mxu0
        %v2021 = vadd.f32 0.0, %v2020
        %v2022 = vpop.f32.mrf.mxu0
        %v2023 = vadd.f32 0.0, %v2022
        %2024 = vmatmul.bf16.gmra.mxu0 %v1083
        %v2025 = vpop.f32.mrf.mxu0
        %v2026 = vadd.f32 0.0, %v2025
        %v2027 = vpop.f32.mrf.mxu0
        %v2028 = vadd.f32 0.0, %v2027
        %2029 = vmatmul.bf16.gmra.mxu0 %v1086
        %v2030 = vpop.f32.mrf.mxu0
        %v2031 = vadd.f32 0.0, %v2030
        %v2032 = vpop.f32.mrf.mxu0
        %v2033 = vadd.f32 0.0, %v2032
        %2034 = vmatmul.bf16.gmra.mxu0 %v1089
        %v2035 = vpop.f32.mrf.mxu0
        %v2036 = vadd.f32 0.0, %v2035
        %v2037 = vpop.f32.mrf.mxu0
        %v2038 = vadd.f32 0.0, %v2037
        %2039 = vmatmul.bf16.gmra.mxu0 %v1092
        %v2040 = vpop.f32.mrf.mxu0
        %v2041 = vadd.f32 0.0, %v2040
        %v2042 = vpop.f32.mrf.mxu0
        %v2043 = vadd.f32 0.0, %v2042
        %2044 = vmatmul.bf16.gmra.mxu0 %v1095
        %v2045 = vpop.f32.mrf.mxu0
        %v2046 = vadd.f32 0.0, %v2045
        %v2047 = vpop.f32.mrf.mxu0
        %v2048 = vadd.f32 0.0, %v2047
        %2049 = vmatmul.bf16.gmra.mxu0 %v1098
        %v2050 = vpop.f32.mrf.mxu0
        %v2051 = vadd.f32 0.0, %v2050
        %v2052 = vpop.f32.mrf.mxu0
        %v2053 = vadd.f32 0.0, %v2052
        %2054 = vmatmul.bf16.gmra.mxu0 %v1101
        %v2055 = vpop.f32.mrf.mxu0
        %v2056 = vadd.f32 0.0, %v2055
        %v2057 = vpop.f32.mrf.mxu0
        %v2058 = vadd.f32 0.0, %v2057
        %2059 = vmatmul.bf16.gmra.mxu0 %v1104
        %v2060 = vpop.f32.mrf.mxu0
        %v2061 = vadd.f32 0.0, %v2060
        %v2062 = vpop.f32.mrf.mxu0
        %v2063 = vadd.f32 0.0, %v2062
        %2064 = vmatmul.bf16.gmra.mxu0 %v1107
        %v2065 = vpop.f32.mrf.mxu0
        %v2066 = vadd.f32 0.0, %v2065
        %v2067 = vpop.f32.mrf.mxu0
        %v2068 = vadd.f32 0.0, %v2067
        %2069 = vmatmul.bf16.gmra.mxu0 %v1110
        %v2070 = vpop.f32.mrf.mxu0
        %v2071 = vadd.f32 0.0, %v2070
        %v2072 = vpop.f32.mrf.mxu0
        %v2073 = vadd.f32 0.0, %v2072
        %2074 = vmatmul.bf16.gmra.mxu0 %v1113
        %v2075 = vpop.f32.mrf.mxu0
        %v2076 = vadd.f32 0.0, %v2075
        %v2077 = vpop.f32.mrf.mxu0
        %v2078 = vadd.f32 0.0, %v2077
        %2079 = vmatmul.bf16.gmra.mxu0 %v1556
        %v2080 = vpop.f32.mrf.mxu0
        %v2081 = vadd.f32 0.0, %v2080
        %v2082 = vpop.f32.mrf.mxu0
        %v2083 = vadd.f32 0.0, %v2082
        %2084 = vmatmul.bf16.gmra.mxu0 %v1999
        %v2085 = vpop.f32.mrf.mxu0
        %v2086 = vadd.f32 0.0, %v2085
        %v2087 = vpop.f32.mrf.mxu0
        %v2088 = vadd.f32 0.0, %v2087
        %2089 = vdwg.mxu0
        %v2090 = vadd.f32 %v1941, %v2011
        %v2091 = vadd.f32 %v1942, %v2013
        %v2092 = vadd.f32 %v1943, %v2016
        %v2093 = vadd.f32 %v1944, %v2018
        %v2094 = vadd.f32 %v1945, %v2021
        %v2095 = vadd.f32 %v1946, %v2023
        %v2096 = vadd.f32 %v1947, %v2026
        %v2097 = vadd.f32 %v1948, %v2028
        %v2098 = vadd.f32 %v1949, %v2031
        %v2099 = vadd.f32 %v1950, %v2033
        %v2100 = vadd.f32 %v1951, %v2036
        %v2101 = vadd.f32 %v1952, %v2038
        %v2102 = vadd.f32 %v1953, %v2041
        %v2103 = vadd.f32 %v1954, %v2043
        %v2104 = vadd.f32 %v1955, %v2046
        %v2105 = vadd.f32 %v1956, %v2048
        %v2106 = vadd.f32 %v1957, %v2051
        %v2107 = vadd.f32 %v1958, %v2053
        %v2108 = vadd.f32 %v1959, %v2056
        %v2109 = vadd.f32 %v1960, %v2058
        %v2110 = vadd.f32 %v1961, %v2061
        %v2111 = vadd.f32 %v1962, %v2063
        %v2112 = vadd.f32 %v1963, %v2066
        %v2113 = vadd.f32 %v1964, %v2068
        %v2114 = vadd.f32 %v1965, %v2071
        %v2115 = vadd.f32 %v1966, %v2073
        %v2116 = vadd.f32 %v1967, %v2076
        %v2117 = vadd.f32 %v1968, %v2078
        %v2118 = vadd.f32 %v1969, %v2081
        %v2119 = vadd.f32 %v1970, %v2083
        %v2120 = vadd.f32 %v1971, %v2086
        %v2121 = vadd.f32 %v1972, %v2088
        %v2122 = vld [vmem:[%s2] sm:$0x1]
        %v2124 = vperm.slane %v2122, 0
        %v2126 = vmul.f32 %v2090, %v2124
        %v2127 = vmul.f32 %v2091, %v2124
        %v2128 = vmul.f32 %v2092, %v2124
        %v2129 = vmul.f32 %v2093, %v2124
        %v2130 = vmul.f32 %v2094, %v2124
        %v2131 = vmul.f32 %v2095, %v2124
        %v2132 = vmul.f32 %v2096, %v2124
        %v2133 = vmul.f32 %v2097, %v2124
        %v2134 = vmul.f32 %v2098, %v2124
        %v2135 = vmul.f32 %v2099, %v2124
        %v2136 = vmul.f32 %v2100, %v2124
        %v2137 = vmul.f32 %v2101, %v2124
        %v2138 = vmul.f32 %v2102, %v2124
        %v2139 = vmul.f32 %v2103, %v2124
        %v2140 = vmul.f32 %v2104, %v2124
        %v2141 = vmul.f32 %v2105, %v2124
        %v2142 = vmul.f32 %v2106, %v2124
        %v2143 = vmul.f32 %v2107, %v2124
        %v2144 = vmul.f32 %v2108, %v2124
        %v2145 = vmul.f32 %v2109, %v2124
        %v2146 = vmul.f32 %v2110, %v2124
        %v2147 = vmul.f32 %v2111, %v2124
        %v2148 = vmul.f32 %v2112, %v2124
        %v2149 = vmul.f32 %v2113, %v2124
        %v2150 = vmul.f32 %v2114, %v2124
        %v2151 = vmul.f32 %v2115, %v2124
        %v2152 = vmul.f32 %v2116, %v2124
        %v2153 = vmul.f32 %v2117, %v2124
        %v2154 = vmul.f32 %v2118, %v2124
        %v2155 = vmul.f32 %v2119, %v2124
        %v2156 = vmul.f32 %v2120, %v2124
        %v2157 = vmul.f32 %v2121, %v2124
        %v2158 = vld [vmem:[%s3] sm:$0x1]
        %v2160 = vperm.slane %v2158, 0
        %v2162 = vadd.f32 %v2126, %v2160
        %v2163 = vadd.f32 %v2127, %v2160
        %v2164 = vadd.f32 %v2128, %v2160
        %v2165 = vadd.f32 %v2129, %v2160
        %v2166 = vadd.f32 %v2130, %v2160
        %v2167 = vadd.f32 %v2131, %v2160
        %v2168 = vadd.f32 %v2132, %v2160
        %v2169 = vadd.f32 %v2133, %v2160
        %v2170 = vadd.f32 %v2134, %v2160
        %v2171 = vadd.f32 %v2135, %v2160
        %v2172 = vadd.f32 %v2136, %v2160
        %v2173 = vadd.f32 %v2137, %v2160
        %v2174 = vadd.f32 %v2138, %v2160
        %v2175 = vadd.f32 %v2139, %v2160
        %v2176 = vadd.f32 %v2140, %v2160
        %v2177 = vadd.f32 %v2141, %v2160
        %v2178 = vadd.f32 %v2142, %v2160
        %v2179 = vadd.f32 %v2143, %v2160
        %v2180 = vadd.f32 %v2144, %v2160
        %v2181 = vadd.f32 %v2145, %v2160
        %v2182 = vadd.f32 %v2146, %v2160
        %v2183 = vadd.f32 %v2147, %v2160
        %v2184 = vadd.f32 %v2148, %v2160
        %v2185 = vadd.f32 %v2149, %v2160
        %v2186 = vadd.f32 %v2150, %v2160
        %v2187 = vadd.f32 %v2151, %v2160
        %v2188 = vadd.f32 %v2152, %v2160
        %v2189 = vadd.f32 %v2153, %v2160
        %v2190 = vadd.f32 %v2154, %v2160
        %v2191 = vadd.f32 %v2155, %v2160
        %v2192 = vadd.f32 %v2156, %v2160
        %v2193 = vadd.f32 %v2157, %v2160
        %v2194 = vmax.f32 %v2162, 0.0
        %v2195 = vmax.f32 %v2163, 0.0
        %v2196 = vmax.f32 %v2164, 0.0
        %v2197 = vmax.f32 %v2165, 0.0
        %v2198 = vmax.f32 %v2166, 0.0
        %v2199 = vmax.f32 %v2167, 0.0
        %v2200 = vmax.f32 %v2168, 0.0
        %v2201 = vmax.f32 %v2169, 0.0
        %v2202 = vmax.f32 %v2170, 0.0
        %v2203 = vmax.f32 %v2171, 0.0
        %v2204 = vmax.f32 %v2172, 0.0
        %v2205 = vmax.f32 %v2173, 0.0
        %v2206 = vmax.f32 %v2174, 0.0
        %v2207 = vmax.f32 %v2175, 0.0
        %v2208 = vmax.f32 %v2176, 0.0
        %v2209 = vmax.f32 %v2177, 0.0
        %v2210 = vmax.f32 %v2178, 0.0
        %v2211 = vmax.f32 %v2179, 0.0
        %v2212 = vmax.f32 %v2180, 0.0
        %v2213 = vmax.f32 %v2181, 0.0
        %v2214 = vmax.f32 %v2182, 0.0
        %v2215 = vmax.f32 %v2183, 0.0
        %v2216 = vmax.f32 %v2184, 0.0
        %v2217 = vmax.f32 %v2185, 0.0
        %v2218 = vmax.f32 %v2186, 0.0
        %v2219 = vmax.f32 %v2187, 0.0
        %v2220 = vmax.f32 %v2188, 0.0
        %v2221 = vmax.f32 %v2189, 0.0
        %v2222 = vmax.f32 %v2190, 0.0
        %v2223 = vmax.f32 %v2191, 0.0
        %v2224 = vmax.f32 %v2192, 0.0
        %v2225 = vmax.f32 %v2193, 0.0
        %v2226 = vld [vmem:[%s4] sm:$0x1]
        %v2228 = vperm.slane %v2226, 0
        %v2230 = vmul.f32 %v2194, %v2228
        %v2231 = vmul.f32 %v2195, %v2228
        %v2232 = vmul.f32 %v2196, %v2228
        %v2233 = vmul.f32 %v2197, %v2228
        %v2234 = vmul.f32 %v2198, %v2228
        %v2235 = vmul.f32 %v2199, %v2228
        %v2236 = vmul.f32 %v2200, %v2228
        %v2237 = vmul.f32 %v2201, %v2228
        %v2238 = vmul.f32 %v2202, %v2228
        %v2239 = vmul.f32 %v2203, %v2228
        %v2240 = vmul.f32 %v2204, %v2228
        %v2241 = vmul.f32 %v2205, %v2228
        %v2242 = vmul.f32 %v2206, %v2228
        %v2243 = vmul.f32 %v2207, %v2228
        %v2244 = vmul.f32 %v2208, %v2228
        %v2245 = vmul.f32 %v2209, %v2228
        %v2246 = vmul.f32 %v2210, %v2228
        %v2247 = vmul.f32 %v2211, %v2228
        %v2248 = vmul.f32 %v2212, %v2228
        %v2249 = vmul.f32 %v2213, %v2228
        %v2250 = vmul.f32 %v2214, %v2228
        %v2251 = vmul.f32 %v2215, %v2228
        %v2252 = vmul.f32 %v2216, %v2228
        %v2253 = vmul.f32 %v2217, %v2228
        %v2254 = vmul.f32 %v2218, %v2228
        %v2255 = vmul.f32 %v2219, %v2228
        %v2256 = vmul.f32 %v2220, %v2228
        %v2257 = vmul.f32 %v2221, %v2228
        %v2258 = vmul.f32 %v2222, %v2228
        %v2259 = vmul.f32 %v2223, %v2228
        %v2260 = vmul.f32 %v2224, %v2228
        %v2261 = vmul.f32 %v2225, %v2228
        %v2262 = vsel %vm634, %v2230, 0.0
        %2263 = vadd.xlane.f32.xlu0 %v2262
        %v2264 = vpop.xlane.xlu0 %2263
        %v2265 = vsel %vm634, %v2231, 0.0
        %2266 = vadd.xlane.f32.xlu0 %v2265
        %v2267 = vpop.xlane.xlu0 %2266
        %v2268 = vsel %vm634, %v2232, 0.0
        %2269 = vadd.xlane.f32.xlu0 %v2268
        %v2270 = vpop.xlane.xlu0 %2269
        %v2271 = vsel %vm634, %v2233, 0.0
        %2272 = vadd.xlane.f32.xlu0 %v2271
        %v2273 = vpop.xlane.xlu0 %2272
        %v2274 = vsel %vm634, %v2234, 0.0
        %2275 = vadd.xlane.f32.xlu0 %v2274
        %v2276 = vpop.xlane.xlu0 %2275
        %v2277 = vsel %vm634, %v2235, 0.0
        %2278 = vadd.xlane.f32.xlu0 %v2277
        %v2279 = vpop.xlane.xlu0 %2278
        %v2280 = vsel %vm634, %v2236, 0.0
        %2281 = vadd.xlane.f32.xlu0 %v2280
        %v2282 = vpop.xlane.xlu0 %2281
        %v2283 = vsel %vm634, %v2237, 0.0
        %2284 = vadd.xlane.f32.xlu0 %v2283
        %v2285 = vpop.xlane.xlu0 %2284
        %v2286 = vsel %vm634, %v2238, 0.0
        %2287 = vadd.xlane.f32.xlu0 %v2286
        %v2288 = vpop.xlane.xlu0 %2287
        %v2289 = vsel %vm634, %v2239, 0.0
        %2290 = vadd.xlane.f32.xlu0 %v2289
        %v2291 = vpop.xlane.xlu0 %2290
        %v2292 = vsel %vm634, %v2240, 0.0
        %2293 = vadd.xlane.f32.xlu0 %v2292
        %v2294 = vpop.xlane.xlu0 %2293
        %v2295 = vsel %vm634, %v2241, 0.0
        %2296 = vadd.xlane.f32.xlu0 %v2295
        %v2297 = vpop.xlane.xlu0 %2296
        %v2298 = vsel %vm634, %v2242, 0.0
        %2299 = vadd.xlane.f32.xlu0 %v2298
        %v2300 = vpop.xlane.xlu0 %2299
        %v2301 = vsel %vm634, %v2243, 0.0
        %2302 = vadd.xlane.f32.xlu0 %v2301
        %v2303 = vpop.xlane.xlu0 %2302
        %v2304 = vsel %vm634, %v2244, 0.0
        %2305 = vadd.xlane.f32.xlu0 %v2304
        %v2306 = vpop.xlane.xlu0 %2305
        %v2307 = vsel %vm634, %v2245, 0.0
        %2308 = vadd.xlane.f32.xlu0 %v2307
        %v2309 = vpop.xlane.xlu0 %2308
        %v2310 = vsel %vm634, %v2246, 0.0
        %2311 = vadd.xlane.f32.xlu0 %v2310
        %v2312 = vpop.xlane.xlu0 %2311
        %v2313 = vsel %vm634, %v2247, 0.0
        %2314 = vadd.xlane.f32.xlu0 %v2313
        %v2315 = vpop.xlane.xlu0 %2314
        %v2316 = vsel %vm634, %v2248, 0.0
        %2317 = vadd.xlane.f32.xlu0 %v2316
        %v2318 = vpop.xlane.xlu0 %2317
        %v2319 = vsel %vm634, %v2249, 0.0
        %2320 = vadd.xlane.f32.xlu0 %v2319
        %v2321 = vpop.xlane.xlu0 %2320
        %v2322 = vsel %vm634, %v2250, 0.0
        %2323 = vadd.xlane.f32.xlu0 %v2322
        %v2324 = vpop.xlane.xlu0 %2323
        %v2325 = vsel %vm634, %v2251, 0.0
        %2326 = vadd.xlane.f32.xlu0 %v2325
        %v2327 = vpop.xlane.xlu0 %2326
        %v2328 = vsel %vm634, %v2252, 0.0
        %2329 = vadd.xlane.f32.xlu0 %v2328
        %v2330 = vpop.xlane.xlu0 %2329
        %v2331 = vsel %vm634, %v2253, 0.0
        %2332 = vadd.xlane.f32.xlu0 %v2331
        %v2333 = vpop.xlane.xlu0 %2332
        %v2334 = vsel %vm634, %v2254, 0.0
        %2335 = vadd.xlane.f32.xlu0 %v2334
        %v2336 = vpop.xlane.xlu0 %2335
        %v2337 = vsel %vm634, %v2255, 0.0
        %2338 = vadd.xlane.f32.xlu0 %v2337
        %v2339 = vpop.xlane.xlu0 %2338
        %v2340 = vsel %vm634, %v2256, 0.0
        %2341 = vadd.xlane.f32.xlu0 %v2340
        %v2342 = vpop.xlane.xlu0 %2341
        %v2343 = vsel %vm634, %v2257, 0.0
        %2344 = vadd.xlane.f32.xlu0 %v2343
        %v2345 = vpop.xlane.xlu0 %2344
        %v2346 = vsel %vm634, %v2258, 0.0
        %2347 = vadd.xlane.f32.xlu0 %v2346
        %v2348 = vpop.xlane.xlu0 %2347
        %v2349 = vsel %vm634, %v2259, 0.0
        %2350 = vadd.xlane.f32.xlu0 %v2349
        %v2351 = vpop.xlane.xlu0 %2350
        %v2352 = vsel %vm634, %v2260, 0.0
        %2353 = vadd.xlane.f32.xlu0 %v2352
        %v2354 = vpop.xlane.xlu0 %2353
        %v2355 = vsel %vm634, %v2261, 0.0
        %2356 = vadd.xlane.f32.xlu0 %v2355
        %v2357 = vpop.xlane.xlu0 %2356
        %v2358 = vld [vmem:[%s310] sm:$0xff]
        %v2359 = vld [vmem:[%s310 + $0x8] sm:$0xff]
        %s2360 = sld [smem:[#allocation2 + $0x1]]
        %s2361 = sld [smem:[#allocation2]]
        %v2362 = vstv %s2361
        %v2363 = vadd.f32 %v2264, %v2362
        %v2364 = vadd.f32 %v2267, %v2362
        %v2365 = vadd.f32 %v2270, %v2362
        %v2366 = vadd.f32 %v2273, %v2362
        %v2367 = vadd.f32 %v2276, %v2362
        %v2368 = vadd.f32 %v2279, %v2362
        %v2369 = vadd.f32 %v2282, %v2362
        %v2370 = vadd.f32 %v2285, %v2362
        %v2371 = vadd.f32 %v2288, %v2362
        %v2372 = vadd.f32 %v2291, %v2362
        %v2373 = vadd.f32 %v2294, %v2362
        %v2374 = vadd.f32 %v2297, %v2362
        %v2375 = vadd.f32 %v2300, %v2362
        %v2376 = vadd.f32 %v2303, %v2362
        %v2377 = vadd.f32 %v2306, %v2362
        %v2378 = vadd.f32 %v2309, %v2362
        %v2379 = vadd.f32 %v2312, %v2362
        %v2380 = vadd.f32 %v2315, %v2362
        %v2381 = vadd.f32 %v2318, %v2362
        %v2382 = vadd.f32 %v2321, %v2362
        %v2383 = vadd.f32 %v2324, %v2362
        %v2384 = vadd.f32 %v2327, %v2362
        %v2385 = vadd.f32 %v2330, %v2362
        %v2386 = vadd.f32 %v2333, %v2362
        %v2387 = vadd.f32 %v2336, %v2362
        %v2388 = vadd.f32 %v2339, %v2362
        %v2389 = vadd.f32 %v2342, %v2362
        %v2390 = vadd.f32 %v2345, %v2362
        %v2391 = vadd.f32 %v2348, %v2362
        %v2392 = vadd.f32 %v2351, %v2362
        %v2393 = vadd.f32 %v2354, %v2362
        %v2394 = vadd.f32 %v2357, %v2362
        %v2395 = vstv %s2360
        %v2396 = vmul.f32 %v2395, %v2363
        %v2397 = vmul.f32 %v2395, %v2364
        %v2398 = vmul.f32 %v2395, %v2365
        %v2399 = vmul.f32 %v2395, %v2366
        %v2400 = vmul.f32 %v2395, %v2367
        %v2401 = vmul.f32 %v2395, %v2368
        %v2402 = vmul.f32 %v2395, %v2369
        %v2403 = vmul.f32 %v2395, %v2370
        %v2404 = vmul.f32 %v2395, %v2371
        %v2405 = vmul.f32 %v2395, %v2372
        %v2406 = vmul.f32 %v2395, %v2373
        %v2407 = vmul.f32 %v2395, %v2374
        %v2408 = vmul.f32 %v2395, %v2375
        %v2409 = vmul.f32 %v2395, %v2376
        %v2410 = vmul.f32 %v2395, %v2377
        %v2411 = vmul.f32 %v2395, %v2378
        %v2412 = vmul.f32 %v2395, %v2379
        %v2413 = vmul.f32 %v2395, %v2380
        %v2414 = vmul.f32 %v2395, %v2381
        %v2415 = vmul.f32 %v2395, %v2382
        %v2416 = vmul.f32 %v2395, %v2383
        %v2417 = vmul.f32 %v2395, %v2384
        %v2418 = vmul.f32 %v2395, %v2385
        %v2419 = vmul.f32 %v2395, %v2386
        %v2420 = vmul.f32 %v2395, %v2387
        %v2421 = vmul.f32 %v2395, %v2388
        %v2422 = vmul.f32 %v2395, %v2389
        %v2423 = vmul.f32 %v2395, %v2390
        %v2424 = vmul.f32 %v2395, %v2391
        %v2425 = vmul.f32 %v2395, %v2392
        %v2426 = vmul.f32 %v2395, %v2393
        %v2427 = vmul.f32 %v2395, %v2394
        %v2460 = vlaneseq
        %v2461 = vand.u32 %v2460, 127
        %v2462 = vperm.slane %v2396, %v2461
        %v2463 = vadd.s32 %v2461, 4294967288
        %v2464 = vperm.slane %v2397, %v2463
        %vm2465 = vcmask 130112
        %v2466 = vsel %vm2465, %v2464, %v2462
        %v2467 = vperm.slane %v2398, %v2461
        %v2468 = vperm.slane %v2399, %v2463
        %v2469 = vsel %vm2465, %v2468, %v2467
        %v2470 = vperm.slane %v2400, %v2461
        %v2471 = vperm.slane %v2401, %v2463
        %v2472 = vsel %vm2465, %v2471, %v2470
        %v2473 = vperm.slane %v2402, %v2461
        %v2474 = vperm.slane %v2403, %v2463
        %v2475 = vsel %vm2465, %v2474, %v2473
        %v2476 = vperm.slane %v2404, %v2461
        %v2477 = vperm.slane %v2405, %v2463
        %v2478 = vsel %vm2465, %v2477, %v2476
        %v2479 = vperm.slane %v2406, %v2461
        %v2480 = vperm.slane %v2407, %v2463
        %v2481 = vsel %vm2465, %v2480, %v2479
        %v2482 = vperm.slane %v2408, %v2461
        %v2483 = vperm.slane %v2409, %v2463
        %v2484 = vsel %vm2465, %v2483, %v2482
        %v2485 = vperm.slane %v2410, %v2461
        %v2486 = vperm.slane %v2411, %v2463
        %v2487 = vsel %vm2465, %v2486, %v2485
        %v2488 = vperm.slane %v2412, %v2461
        %v2489 = vperm.slane %v2413, %v2463
        %v2490 = vsel %vm2465, %v2489, %v2488
        %v2491 = vperm.slane %v2414, %v2461
        %v2492 = vperm.slane %v2415, %v2463
        %v2493 = vsel %vm2465, %v2492, %v2491
        %v2494 = vperm.slane %v2416, %v2461
        %v2495 = vperm.slane %v2417, %v2463
        %v2496 = vsel %vm2465, %v2495, %v2494
        %v2497 = vperm.slane %v2418, %v2461
        %v2498 = vperm.slane %v2419, %v2463
        %v2499 = vsel %vm2465, %v2498, %v2497
        %v2500 = vperm.slane %v2420, %v2461
        %v2501 = vperm.slane %v2421, %v2463
        %v2502 = vsel %vm2465, %v2501, %v2500
        %v2503 = vperm.slane %v2422, %v2461
        %v2504 = vperm.slane %v2423, %v2463
        %v2505 = vsel %vm2465, %v2504, %v2503
        %v2506 = vperm.slane %v2424, %v2461
        %v2507 = vperm.slane %v2425, %v2463
        %v2508 = vsel %vm2465, %v2507, %v2506
        %v2509 = vperm.slane %v2426, %v2461
        %v2510 = vperm.slane %v2427, %v2463
        %v2511 = vsel %vm2465, %v2510, %v2509
        %vm2512 = vcmask 1041409
        %v2513 = vsel %vm2512, %v2469, %v2466
        %vm2514 = vcmask 1042434
        %v2515 = vsel %vm2514, %v2472, %v2513
        %vm2516 = vcmask 1043459
        %v2517 = vsel %vm2516, %v2475, %v2515
        %vm2518 = vcmask 1044484
        %v2519 = vsel %vm2518, %v2478, %v2517
        %vm2520 = vcmask 1045509
        %v2521 = vsel %vm2520, %v2481, %v2519
        %vm2522 = vcmask 1046534
        %v2523 = vsel %vm2522, %v2484, %v2521
        %vm2524 = vcmask 1047559
        %v2525 = vsel %vm2524, %v2487, %v2523
        %v2526 = vsel %vm2512, %v2493, %v2490
        %v2527 = vsel %vm2514, %v2496, %v2526
        %v2528 = vsel %vm2516, %v2499, %v2527
        %v2529 = vsel %vm2518, %v2502, %v2528
        %v2530 = vsel %vm2520, %v2505, %v2529
        %v2531 = vsel %vm2522, %v2508, %v2530
        %v2532 = vsel %vm2524, %v2511, %v2531
        %v2535 = vadd.f32 %v2358, %v2525
        %v2536 = vadd.f32 %v2359, %v2532
        %vm2537 = vcmask 130048
        %2538 = vst.msk [vmem:[%s300] sm:$0xff] %vm2537, %v2535
        %2539 = vst.msk [vmem:[%s300 + $0x8] sm:$0xff] %vm2537, %v2536
        %s2540 = sand.u32 %s187, 1
        %s2541 = scalar_lea.sflag [#allocation3], %s2540
        %s2542 = sand.u32 %s187, 1
        %s2543 = smul.addr %s2542, 16
        %s2544 = scalar_lea.vmem [#allocation5], %s2543
        // Predicated region
        $region53: #{iteration_forward.3} parent=47 // pred_check
          %p2545 = pneg %p197
        $region54: #{iteration_forward.3} parent=47 // pred_check_branch
          %2547 = sbr.rel (%p2545) target = $region56
        $region55: #{iteration_forward.3} parent=47 // pred_region
          %2549 = vsyncadd %s2541, 0
          %s2550 = smul.addr %s22, 2
          %s2551 = smul.addr %s2550, 8
          %s2552 = scalar_lea.hbm %s7, %s2551
          %s2553 = sshll.u32 %s2544, 4
          %s2554 = int_to_ptr.vmem [resolvable:$true] %s2553
          %s2555 = sshll.u32 %s2552, 4
          %s2556 = int_to_ptr.hbm [resolvable:$true] %s2555
          %2561 = dma.vmem_to_hbm [thread:$0]  %s2554, 256, %s2556, %s2541, 128, 128, 8
        $region56: #{iteration_forward.3} parent=47 // pred_fallthru
          _
      $region48: #{iteration_forward.3} parent=5 // pred_fallthru
        _
      %p2562 = scmp.le.s32.totalorder 2, %s17
      // Predicated region
      $region57: #{iteration_forward.3} parent=5 // pred_check
        %p2563 = pneg %p2562
      $region58: #{iteration_forward.3} parent=5 // pred_check_branch
        %2565 = sbr.rel (%p2563) target = $region60
      $region59: #{iteration_forward.3} parent=5 // pred_region
        %s2566 = ssub.s32 %s17, 2
        // Predicated region
        $region61: #{iteration_forward.3} parent=59 // pred_check
          %p2567 = pneg %p203
        $region62: #{iteration_forward.3} parent=59 // pred_check_branch
          %2569 = sbr.rel (%p2567) target = $region64
        $region63: #{iteration_forward.3} parent=59 // pred_region
          %s2570 = sand.u32 %s188, 1
          %s2571 = scalar_lea.sflag [#allocation3], %s2570
          %s2572 = sand.u32 %s188, 1
          %s2573 = smul.addr %s2572, 16
          %s2574 = scalar_lea.vmem [#allocation5], %s2573
          %2576 = dma.done %s2571, 256
        $region64: #{iteration_forward.3} parent=59 // pred_fallthru
          _
      $region60: #{iteration_forward.3} parent=5 // pred_fallthru
        _
    $region6: #{iteration_forward.3} parent=1 // loop_footer
      %s21 = sadd.s32 1, %s17
    $region7: #{iteration_forward.3} parent=1 // loop_footer_branch
      %16 = sbr.rel target = $region3
    $region8: #{iteration_forward.3} parent=1 // loop_exit
      _
    %2577 = vsyncpa [#allocation3], 1
    %s2578 = scalar_lea.sflag [#allocation3], 1
    %2579 = vsyncpa %s2578, 1
    %2580 = vsyncpa [#allocation4], 1
    %s2581 = scalar_lea.sflag [#allocation4], 1
    %2582 = vsyncpa %s2581, 1

</llo_original>
